<compile_context>
chip_gen: v7x
topology: tpu7x:2x2x1
jax: 0.10.0
libtpu: 0.0.40
codegen_flags: <defaults>
</compile_context>

<pallas_src>
import functools

import numpy as np
import jax
import jax.numpy as jnp
from jax.experimental import pallas as pl
from jax.experimental.pallas import tpu as pltpu


# ----------------------------- sizing helpers -----------------------------------

def _round_up(n, m):
    return ((n + m - 1) // m) * m


@functools.lru_cache(maxsize=None)
def _vmem_limit_bytes():
    cap = 64 * 1024 * 1024
    try:
        info = pltpu.get_tpu_info()
        cap = int(getattr(info, "vmem_capacity_bytes", cap))
    except Exception:
        pass
    # ~48 MiB on v7x (64 MiB physical per TC), ~102 MiB on v5e / v6e (128 MiB physical).
    return max(32 * 1024 * 1024, min(cap - (16 << 20), int(cap * 0.8)))


def _pick_depth_tile(D, Hp, Wp, Cin, Cout, in_bytes, vmem_budget):
    """Depth tile TD: (1,3,3) conv => depth slices independent, no halo needed."""
    plane = Hp * Wp

    def est(td):
        L = _round_up(td * plane, 128)
        r_in = _round_up(L + 2 * Wp + 2, 128)
        a_off = _round_up(Wp + 1, 128)
        r_h = a_off + L + _round_up(Wp + 1, 128)
        return (2 * Cin * r_in * in_bytes              # double-buffered input block
                + 2 * Cout * L * 4                     # double-buffered f32 output block
                + Cout * r_h * in_bytes                # fused intermediate h (scratch)
                + 9 * max(Cin, Cout) * L * in_bytes    # stacked-tap matmul operand (scratch)
                + 8 * Cout * L * 4)                    # epilogue temporaries / headroom

    td = min(D, max(1, 2048 // plane))                 # target roughly 2k-lane tiles
    if D >= 2:
        td = min(td, -(-D // 2))                       # >= 2 depth tiles: pipelining + 2 TCs
    while td > 1 and est(td) > vmem_budget:
        td = -(-td // 2)
    # TODO(synk): also tile H*W (and Cout, recomputing h per Cout tile) when a single depth
    # slice still exceeds the per-step VMEM budget.
    return td


# ----------------------------- fused Pallas kernel -------------------------------

def _make_fused_kernel(*, L, Wp, Cin, Cout, use_mxu, has_res_conv):
    """L: output lane width (multiple of 128). Wp: padded image width (W + 2)."""
    offs = tuple(dh * Wp + dw for dh in range(3) for dw in range(3))   # tap lane offsets
    ctr = Wp + 1                                    # lane offset of the center (output) pixel
    a_off = _round_up(ctr, 128)                     # 128-aligned staging offset for h
    offs_h = tuple(o + (a_off - ctr) for o in offs)  # block2 tap offsets into the h scratch

    def conv3x3(load_tap, w_ref, cin, stk_ref):
        """3x3 conv over the lane-flattened plane; returns (Cout, L) f32."""
        if use_mxu:
            # Stack the 9 lane-shifted taps on the contraction axis -> one K = 9*cin matmul.
            for k in range(9):
                stk_ref[k * cin:(k + 1) * cin, :] = load_tap(k)
            return jnp.dot(w_ref[...], stk_ref[0:9 * cin, :],
                           preferred_element_type=jnp.float32)
        # Tiny channel counts: the MXU would run nearly empty, so do 9*cin broadcast
        # outer-product FMAs on the VPU instead.
        wv = w_ref[...].astype(jnp.float32)         # (Cout, 9*cin), tiny, register resident
        acc = None
        for k in range(9):
            tap = load_tap(k).astype(jnp.float32)   # (cin, L)
            for ci in range(cin):
                j = k * cin + ci
                term = wv[:, j:j + 1] * tap[ci:ci + 1, :]
                acc = term if acc is None else acc + term
        return acc

    def rms_norm(y, g):
        # F.normalize over the channel (sublane) axis; sqrt(C) already folded into g.
        ss = jnp.sum(y * y, axis=0, keepdims=True)
        return y * jax.lax.rsqrt(jnp.maximum(ss, 1e-24)) * g

    def kernel(x_ref, w1_ref, b1_ref, g1_ref, sc_ref, sh_ref,
               w2_ref, b2_ref, g2_ref, *rest):
        if has_res_conv:
            wr_ref, br_ref, mask_ref, out_ref, h_ref, *stk = rest
        else:
            wr_ref = br_ref = None
            mask_ref, out_ref, h_ref, *stk = rest
        stk_ref = stk[0] if use_mxu else None
        r_h = h_ref.shape[-1]
        mrow = mask_ref[...]                        # (1, L): 1.0 real pixel, 0.0 padding/tail

        # ---- Block 1: conv + bias + RMSNorm + FiLM + SiLU (f32 epilogue) ----
        y = conv3x3(lambda k: x_ref[0, 0, :, offs[k]:offs[k] + L], w1_ref, Cin, stk_ref)
        y = y + b1_ref[...]
        y = rms_norm(y, g1_ref[...])
        y = y * sc_ref[0] + sh_ref[0]               # FiLM ("+1" folded into scale)
        y = y * jax.nn.sigmoid(y)                   # SiLU
        y = y * mrow                                # zero padding / tail lanes

        # Stage h in padded-flat coordinates at a 128-aligned offset: the interior store and
        # the two small halo bands are dense aligned stores (no full-width zero fill, and no
        # reliance on scratch persistence across grid steps / cores).
        h_ref[:, 0:a_off] = jnp.zeros((Cout, a_off), h_ref.dtype)
        h_ref[:, a_off:a_off + L] = y.astype(h_ref.dtype)
        h_ref[:, a_off + L:r_h] = jnp.zeros((Cout, r_h - a_off - L), h_ref.dtype)

        # ---- Block 2: conv + bias + RMSNorm + SiLU (no FiLM) ----
        y2 = conv3x3(lambda k: h_ref[:, offs_h[k]:offs_h[k] + L], w2_ref, Cout, stk_ref)
        y2 = y2 + b2_ref[...]
        y2 = rms_norm(y2, g2_ref[...])
        y2 = y2 * jax.nn.sigmoid(y2)

        # ---- residual: 1x1x1 conv (dim != dim_out) or identity, on the centered input ----
        xc = x_ref[0, 0, :, ctr:ctr + L]
        if not has_res_conv:
            res = xc.astype(jnp.float32)
        elif use_mxu:
            res = jnp.dot(wr_ref[...], xc, preferred_element_type=jnp.float32) + br_ref[...]
        else:
            wrv = wr_ref[...].astype(jnp.float32)
            xcf = xc.astype(jnp.float32)
            res = br_ref[...]
            for ci in range(Cin):
                res = res + wrv[:, ci:ci + 1] * xcf[ci:ci + 1, :]

        out_ref[0, 0] = y2 + res

    return kernel


# ----------------------------- wrapper --------------------------------------------

@functools.partial(jax.jit, static_argnames=("compute_dtype",))
def resnet_block_forward(x, time_emb, params, compute_dtype=jnp.bfloat16):
    """x: (B, Cin, D, H, W) NCDHW; time_emb: (B, T) or None.  Returns (B, Cout, D, H, W) f32."""
    B, Cin, Dd, H, W = x.shape
    Cout = int(params["g1"].shape[-1])
    has_res = "wr" in params
    if not has_res:
        assert Cin == Cout, "identity residual requires dim == dim_out"
    use_mxu = min(Cin, Cout) >= 16                  # tiny channel counts -> VPU conv path

    Hp, Wp = H + 2, W + 2
    plane = Hp * Wp
    in_bytes = int(np.dtype(compute_dtype).itemsize)
    vmem_limit = _vmem_limit_bytes()
    TD = _pick_depth_tile(Dd, Hp, Wp, Cin, Cout, in_bytes, vmem_limit // 2)
    nd = -(-Dd // TD)
    Dp = nd * TD
    n_tile = TD * plane                             # real lanes per depth tile
    L = _round_up(n_tile, 128)                      # lane-dense per-step output width
    r_in = _round_up(L + 2 * Wp + 2, 128)           # input width incl. 3x3 tap over-read
    a_off = _round_up(Wp + 1, 128)
    r_h = a_off + L + _round_up(Wp + 1, 128)        # h scratch width (left/right halos)

    # Input: pad H/W by 1 (and D up to a multiple of TD), flatten each depth tile's
    # (TD, Hp, Wp) volume onto the lane axis, zero-fill the over-read tail.
    xp = jnp.pad(x, ((0, 0), (0, 0), (0, Dp - Dd), (1, 1), (1, 1)))
    xp = xp.reshape(B, Cin, nd, TD, Hp, Wp).transpose(0, 2, 1, 3, 4, 5)
    x_flat = jnp.pad(xp.reshape(B, nd, Cin, n_tile),
                     ((0, 0), (0, 0), (0, 0), (0, r_in - n_tile))).astype(compute_dtype)

    # Time MLP (tiny -> plain XLA).  Fold the FiLM "+1" into the scale.
    if time_emb is not None and "w_mlp" in params:
        te = jax.nn.silu(time_emb.astype(jnp.float32)) @ params["w_mlp"].astype(jnp.float32)
        te = te + params["b_mlp"].astype(jnp.float32)
        sc, sh = te[:, :Cout] + 1.0, te[:, Cout:]
    else:
        sc = jnp.ones((B, Cout), jnp.float32)
        sh = jnp.zeros((B, Cout), jnp.float32)
    sc = sc.reshape(B, Cout, 1).astype(jnp.float32)
    sh = sh.reshape(B, Cout, 1).astype(jnp.float32)

    # Conv weights stacked along the contraction axis: (Cout, 9*Cin), tap-major then channel.
    w1s = jnp.transpose(params["w1"], (3, 0, 1, 2)).reshape(Cout, 9 * Cin).astype(compute_dtype)
    w2s = jnp.transpose(params["w2"], (3, 0, 1, 2)).reshape(Cout, 9 * Cout).astype(compute_dtype)

    sq = float(np.sqrt(float(Cout)))                # RMSNorm sqrt(C) folded into the gain
    b1 = params["b1"].astype(jnp.float32).reshape(Cout, 1)
    g1 = (params["g1"] * sq).astype(jnp.float32).reshape(Cout, 1)
    b2 = params["b2"].astype(jnp.float32).reshape(Cout, 1)
    g2 = (params["g2"] * sq).astype(jnp.float32).reshape(Cout, 1)

    # Static lane-validity mask (real pixel vs H/W padding vs tail); identical for every tile.
    idx = np.arange(L)
    q = idx % plane
    mask = jnp.asarray(((idx < n_tile) & (q // Wp < H) & (q % Wp < W))
                       .astype(np.float32)[None, :])

    const2 = lambda b, d: (0, 0)
    args = [x_flat, w1s, b1, g1, sc, sh, w2s, b2, g2]
    in_specs = [
        pl.BlockSpec((1, 1, Cin, r_in), lambda b, d: (b, d, 0, 0)),   # x (padded, flattened)
        pl.BlockSpec((Cout, 9 * Cin), const2),                        # w1 (tap-stacked)
        pl.BlockSpec((Cout, 1), const2),                              # b1
        pl.BlockSpec((Cout, 1), const2),                              # g1 * sqrt(C)
        pl.BlockSpec((1, Cout, 1), lambda b, d: (b, 0, 0)),           # FiLM scale (+1 folded)
        pl.BlockSpec((1, Cout, 1), lambda b, d: (b, 0, 0)),           # FiLM shift
        pl.BlockSpec((Cout, 9 * Cout), const2),                       # w2 (tap-stacked)
        pl.BlockSpec((Cout, 1), const2),                              # b2
        pl.BlockSpec((Cout, 1), const2),                              # g2 * sqrt(C)
    ]
    if has_res:
        args += [params["wr"].T.astype(compute_dtype),                # (Cout, Cin)
                 params["br"].astype(jnp.float32).reshape(Cout, 1)]
        in_specs += [pl.BlockSpec((Cout, Cin), const2),
                     pl.BlockSpec((Cout, 1), const2)]
    args += [mask]
    in_specs += [pl.BlockSpec((1, L), const2)]

    scratch = [pltpu.VMEM((Cout, r_h), compute_dtype)]                # fused intermediate h
    if use_mxu:
        scratch += [pltpu.VMEM((9 * max(Cin, Cout), L), compute_dtype)]  # stacked-tap operand

    kernel = _make_fused_kernel(L=L, Wp=Wp, Cin=Cin, Cout=Cout,
                                use_mxu=use_mxu, has_res_conv=has_res)

    out_flat = pl.pallas_call(
        kernel,
        out_shape=jax.ShapeDtypeStruct((B, nd, Cout, L), jnp.float32),
        grid=(B, nd),
        in_specs=in_specs,
        out_specs=pl.BlockSpec((1, 1, Cout, L), lambda b, d: (b, d, 0, 0)),
        scratch_shapes=scratch,
        compiler_params=pltpu.CompilerParams(
            dimension_semantics=("parallel", "parallel"),
            vmem_limit_bytes=vmem_limit),
    )(*args)

    # Un-flatten: drop tail / padding lanes, restitch depth tiles, crop H/W padding.
    out = out_flat[..., :n_tile].reshape(B, nd, Cout, TD, Hp, Wp)
    out = out.transpose(0, 2, 1, 3, 4, 5).reshape(B, Cout, Dp, Hp, Wp)
    return out[:, :, :Dd, :H, :W]


# ----------------------------- pure-JAX reference ---------------------------------

def resnet_block_ref(x, time_emb, params):
    B, Cin, Dd, H, W = x.shape
    Cout = int(params["g1"].shape[-1])
    xl = jnp.transpose(x, (0, 2, 3, 4, 1)).reshape(B * Dd, H, W, Cin)

    def conv3x3(z, w, b):
        y = jax.lax.conv_general_dilated(
            z, w, window_strides=(1, 1), padding=((1, 1), (1, 1)),
            dimension_numbers=("NHWC", "HWIO", "NHWC"))
        return y + b.reshape(1, 1, 1, -1)

    def rmsnorm(z, g):
        n = jnp.sqrt(jnp.sum(z * z, axis=-1, keepdims=True))
        return z / jnp.maximum(n, 1e-12) * g.reshape(1, 1, 1, -1) * jnp.sqrt(float(Cout))

    def silu(z):
        return z * jax.nn.sigmoid(z)

    h = conv3x3(xl, params["w1"], params["b1"])
    h = rmsnorm(h, params["g1"])
    if time_emb is not None and "w_mlp" in params:
        te = silu(time_emb) @ params["w_mlp"] + params["b_mlp"]
        scale, shift = te[:, :Cout], te[:, Cout:]
        scale = jnp.repeat(scale, Dd, axis=0).reshape(B * Dd, 1, 1, Cout)
        shift = jnp.repeat(shift, Dd, axis=0).reshape(B * Dd, 1, 1, Cout)
        h = h * (scale + 1.0) + shift
    h = silu(h)
    h = conv3x3(h, params["w2"], params["b2"])
    h = silu(rmsnorm(h, params["g2"]))
    if "wr" in params:
        res = jnp.einsum("nhwc,co->nhwo", xl, params["wr"]) + params["br"].reshape(1, 1, 1, -1)
    else:
        res = xl
    return (h + res).reshape(B, Dd, H, W, Cout).transpose(0, 4, 1, 2, 3)


# ----------------------------- main ------------------------------------------------

if __name__ == "__main__":
    # Keep the reference conv / matmuls in true f32 so the comparison is tight.
    jax.config.update("jax_default_matmul_precision", "highest")

    key = jax.random.PRNGKey(0)

    def make_params(k, Cin, Cout, T=None, res_conv=True):
        ks = jax.random.split(k, 10)
        p = {
            "w1": 0.1 * jax.random.normal(ks[0], (3, 3, Cin, Cout), jnp.float32),
            "b1": 0.1 * jax.random.normal(ks[1], (Cout,), jnp.float32),
            "g1": 1.0 + 0.05 * jax.random.normal(ks[2], (Cout,), jnp.float32),
            "w2": 0.1 * jax.random.normal(ks[3], (3, 3, Cout, Cout), jnp.float32),
            "b2": 0.1 * jax.random.normal(ks[4], (Cout,), jnp.float32),
            "g2": 1.0 + 0.05 * jax.random.normal(ks[5], (Cout,), jnp.float32),
        }
        if T is not None:
            p["w_mlp"] = 0.1 * jax.random.normal(ks[6], (T, 2 * Cout), jnp.float32)
            p["b_mlp"] = 0.1 * jax.random.normal(ks[7], (2 * Cout,), jnp.float32)
        if res_conv:
            p["wr"] = 0.1 * jax.random.normal(ks[8], (Cin, Cout), jnp.float32)
            p["br"] = 0.1 * jax.random.normal(ks[9], (Cout,), jnp.float32)
        return p

    k1, k2, k3, k4, k5 = jax.random.split(key, 5)

    # --- config 1: tiny channels (VPU conv path), time-emb FiLM, 1x1x1 residual conv ---
    B, Cin, Cout, Dd, H, W, T = 2, 4, 8, 4, 8, 8, 16
    x = jax.random.normal(k1, (B, Cin, Dd, H, W), jnp.float32)
    temb = jax.random.normal(k2, (B, T), jnp.float32)
    params = make_params(k3, Cin, Cout, T=T, res_conv=True)

    out = jax.block_until_ready(resnet_block_forward(x, temb, params,
                                                     compute_dtype=jnp.float32))
    ref = jax.block_until_ready(resnet_block_ref(x, temb, params))
    assert out.shape == (B, Cout, Dd, H, W)
    np.testing.assert_allclose(np.asarray(out), np.asarray(ref), rtol=2e-3, atol=2e-3)

    # bf16 operand fast path (f32 accumulation + f32 epilogue).
    out_bf16 = jax.block_until_ready(resnet_block_forward(x, temb, params,
                                                          compute_dtype=jnp.bfloat16))
    np.testing.assert_allclose(np.asarray(out_bf16), np.asarray(ref), rtol=1e-1, atol=1e-1)

    # --- config 2: MXU stacked-tap conv path, identity residual, no time embedding ---
    B2, C2, D2, H2, W2 = 2, 32, 4, 16, 16
    x2 = jax.random.normal(k4, (B2, C2, D2, H2, W2), jnp.float32)
    params2 = make_params(k5, C2, C2, T=None, res_conv=False)
    out2 = jax.block_until_ready(resnet_block_forward(x2, None, params2,
                                                      compute_dtype=jnp.float32))
    ref2 = jax.block_until_ready(resnet_block_ref(x2, None, params2))
    assert out2.shape == (B2, C2, D2, H2, W2)
    np.testing.assert_allclose(np.asarray(out2), np.asarray(ref2), rtol=2e-3, atol=2e-3)

    print("KERNEL_OK")
</pallas_src>

<mosaic_0001>
module attributes {stable_mosaic.version = 11 : i64} {
  func.func @kernel(%arg0: i32, %arg1: i32, %arg2: memref<1x1x4x384xf32, #tpu.memory_space<vmem>>, %arg3: memref<8x36xf32, #tpu.memory_space<vmem>>, %arg4: memref<8x1xf32, #tpu.memory_space<vmem>>, %arg5: memref<8x1xf32, #tpu.memory_space<vmem>>, %arg6: memref<1x8x1xf32, #tpu.memory_space<vmem>>, %arg7: memref<1x8x1xf32, #tpu.memory_space<vmem>>, %arg8: memref<8x72xf32, #tpu.memory_space<vmem>>, %arg9: memref<8x1xf32, #tpu.memory_space<vmem>>, %arg10: memref<8x1xf32, #tpu.memory_space<vmem>>, %arg11: memref<8x4xf32, #tpu.memory_space<vmem>>, %arg12: memref<8x1xf32, #tpu.memory_space<vmem>>, %arg13: memref<1x256xf32, #tpu.memory_space<vmem>>, %arg14: memref<1x1x8x256xf32, #tpu.memory_space<vmem>>, %arg15: memref<8x512xf32, #tpu.memory_space<vmem>>) attributes {dimension_semantics = [#tpu.dimension_semantics<parallel>, #tpu.dimension_semantics<parallel>], iteration_bounds = array<i64: 2, 2>, scalar_prefetch = 0 : i64, scratch_operands = 1 : i64, tpu.core_type = #tpu.core_type<tc>, window_params = [{transform_indices = @transform_0, window_bounds = array<i64: 1, 1, 4, 384>}, {pipeline_mode = #tpu.pipeline_mode<synchronous>, transform_indices = @transform_1, window_bounds = array<i64: 8, 36>}, {pipeline_mode = #tpu.pipeline_mode<synchronous>, transform_indices = @transform_2, window_bounds = array<i64: 8, 1>}, {pipeline_mode = #tpu.pipeline_mode<synchronous>, transform_indices = @transform_3, window_bounds = array<i64: 8, 1>}, {transform_indices = @transform_4, window_bounds = array<i64: 1, 8, 1>}, {transform_indices = @transform_5, window_bounds = array<i64: 1, 8, 1>}, {pipeline_mode = #tpu.pipeline_mode<synchronous>, transform_indices = @transform_6, window_bounds = array<i64: 8, 72>}, {pipeline_mode = #tpu.pipeline_mode<synchronous>, transform_indices = @transform_7, window_bounds = array<i64: 8, 1>}, {pipeline_mode = #tpu.pipeline_mode<synchronous>, transform_indices = @transform_8, window_bounds = array<i64: 8, 1>}, {pipeline_mode = #tpu.pipeline_mode<synchronous>, transform_indices = @transform_9, window_bounds = array<i64: 8, 4>}, {pipeline_mode = #tpu.pipeline_mode<synchronous>, transform_indices = @transform_10, window_bounds = array<i64: 8, 1>}, {pipeline_mode = #tpu.pipeline_mode<synchronous>, transform_indices = @transform_11, window_bounds = array<i64: 1, 256>}, {transform_indices = @transform_12, window_bounds = array<i64: 1, 1, 8, 256>}]} {
    %c0 = arith.constant 0 : index
    %c0_0 = arith.constant 0 : index
    %0 = vector.load %arg13[%c0, %c0_0] : memref<1x256xf32, #tpu.memory_space<vmem>>, vector<1x256xf32>
    %c0_1 = arith.constant 0 : index
    %c0_2 = arith.constant 0 : index
    %1 = vector.load %arg3[%c0_1, %c0_2] : memref<8x36xf32, #tpu.memory_space<vmem>>, vector<8x36xf32>
    %c0_3 = arith.constant 0 : index
    %c0_4 = arith.constant 0 : index
    %c0_5 = arith.constant 0 : index
    %c0_6 = arith.constant 0 : index
    %2 = vector.load %arg2[%c0_3, %c0_4, %c0_5, %c0_6] : memref<1x1x4x384xf32, #tpu.memory_space<vmem>>, vector<1x1x4x256xf32>
    %3 = vector.shape_cast %2 : vector<1x1x4x256xf32> to vector<4x256xf32>
    %4 = vector.extract_strided_slice %1 {offsets = [0, 0], sizes = [8, 1], strides = [1, 1]} : vector<8x36xf32> to vector<8x1xf32>
    %5 = vector.extract_strided_slice %3 {offsets = [0, 0], sizes = [1, 256], strides = [1, 1]} : vector<4x256xf32> to vector<1x256xf32>
    %6 = vector.broadcast %4 : vector<8x1xf32> to vector<8x256xf32>
    %7 = vector.broadcast %5 : vector<1x256xf32> to vector<8x256xf32>
    %8 = arith.mulf %6, %7 : vector<8x256xf32>
    %9 = vector.extract_strided_slice %1 {offsets = [0, 1], sizes = [8, 1], strides = [1, 1]} : vector<8x36xf32> to vector<8x1xf32>
    %10 = vector.extract_strided_slice %3 {offsets = [1, 0], sizes = [1, 256], strides = [1, 1]} : vector<4x256xf32> to vector<1x256xf32>
    %11 = vector.broadcast %9 : vector<8x1xf32> to vector<8x256xf32>
    %12 = vector.broadcast %10 : vector<1x256xf32> to vector<8x256xf32>
    %13 = arith.mulf %11, %12 : vector<8x256xf32>
    %14 = arith.addf %8, %13 : vector<8x256xf32>
    %15 = vector.extract_strided_slice %1 {offsets = [0, 2], sizes = [8, 1], strides = [1, 1]} : vector<8x36xf32> to vector<8x1xf32>
    %16 = vector.extract_strided_slice %3 {offsets = [2, 0], sizes = [1, 256], strides = [1, 1]} : vector<4x256xf32> to vector<1x256xf32>
    %17 = vector.broadcast %15 : vector<8x1xf32> to vector<8x256xf32>
    %18 = vector.broadcast %16 : vector<1x256xf32> to vector<8x256xf32>
    %19 = arith.mulf %17, %18 : vector<8x256xf32>
    %20 = arith.addf %14, %19 : vector<8x256xf32>
    %21 = vector.extract_strided_slice %1 {offsets = [0, 3], sizes = [8, 1], strides = [1, 1]} : vector<8x36xf32> to vector<8x1xf32>
    %22 = vector.extract_strided_slice %3 {offsets = [3, 0], sizes = [1, 256], strides = [1, 1]} : vector<4x256xf32> to vector<1x256xf32>
    %23 = vector.broadcast %21 : vector<8x1xf32> to vector<8x256xf32>
    %24 = vector.broadcast %22 : vector<1x256xf32> to vector<8x256xf32>
    %25 = arith.mulf %23, %24 : vector<8x256xf32>
    %26 = arith.addf %20, %25 : vector<8x256xf32>
    %c0_7 = arith.constant 0 : index
    %c0_8 = arith.constant 0 : index
    %c0_9 = arith.constant 0 : index
    %c1 = arith.constant 1 : index
    %27 = vector.load %arg2[%c0_7, %c0_8, %c0_9, %c1] : memref<1x1x4x384xf32, #tpu.memory_space<vmem>>, vector<1x1x4x256xf32>
    %28 = vector.shape_cast %27 : vector<1x1x4x256xf32> to vector<4x256xf32>
    %29 = vector.extract_strided_slice %1 {offsets = [0, 4], sizes = [8, 1], strides = [1, 1]} : vector<8x36xf32> to vector<8x1xf32>
    %30 = vector.extract_strided_slice %28 {offsets = [0, 0], sizes = [1, 256], strides = [1, 1]} : vector<4x256xf32> to vector<1x256xf32>
    %31 = vector.broadcast %29 : vector<8x1xf32> to vector<8x256xf32>
    %32 = vector.broadcast %30 : vector<1x256xf32> to vector<8x256xf32>
    %33 = arith.mulf %31, %32 : vector<8x256xf32>
    %34 = arith.addf %26, %33 : vector<8x256xf32>
    %35 = vector.extract_strided_slice %1 {offsets = [0, 5], sizes = [8, 1], strides = [1, 1]} : vector<8x36xf32> to vector<8x1xf32>
    %36 = vector.extract_strided_slice %28 {offsets = [1, 0], sizes = [1, 256], strides = [1, 1]} : vector<4x256xf32> to vector<1x256xf32>
    %37 = vector.broadcast %35 : vector<8x1xf32> to vector<8x256xf32>
    %38 = vector.broadcast %36 : vector<1x256xf32> to vector<8x256xf32>
    %39 = arith.mulf %37, %38 : vector<8x256xf32>
    %40 = arith.addf %34, %39 : vector<8x256xf32>
    %41 = vector.extract_strided_slice %1 {offsets = [0, 6], sizes = [8, 1], strides = [1, 1]} : vector<8x36xf32> to vector<8x1xf32>
    %42 = vector.extract_strided_slice %28 {offsets = [2, 0], sizes = [1, 256], strides = [1, 1]} : vector<4x256xf32> to vector<1x256xf32>
    %43 = vector.broadcast %41 : vector<8x1xf32> to vector<8x256xf32>
    %44 = vector.broadcast %42 : vector<1x256xf32> to vector<8x256xf32>
    %45 = arith.mulf %43, %44 : vector<8x256xf32>
    %46 = arith.addf %40, %45 : vector<8x256xf32>
    %47 = vector.extract_strided_slice %1 {offsets = [0, 7], sizes = [8, 1], strides = [1, 1]} : vector<8x36xf32> to vector<8x1xf32>
    %48 = vector.extract_strided_slice %28 {offsets = [3, 0], sizes = [1, 256], strides = [1, 1]} : vector<4x256xf32> to vector<1x256xf32>
    %49 = vector.broadcast %47 : vector<8x1xf32> to vector<8x256xf32>
    %50 = vector.broadcast %48 : vector<1x256xf32> to vector<8x256xf32>
    %51 = arith.mulf %49, %50 : vector<8x256xf32>
    %52 = arith.addf %46, %51 : vector<8x256xf32>
    %c0_10 = arith.constant 0 : index
    %c0_11 = arith.constant 0 : index
    %c0_12 = arith.constant 0 : index
    %c2 = arith.constant 2 : index
    %53 = vector.load %arg2[%c0_10, %c0_11, %c0_12, %c2] : memref<1x1x4x384xf32, #tpu.memory_space<vmem>>, vector<1x1x4x256xf32>
    %54 = vector.shape_cast %53 : vector<1x1x4x256xf32> to vector<4x256xf32>
    %55 = vector.extract_strided_slice %1 {offsets = [0, 8], sizes = [8, 1], strides = [1, 1]} : vector<8x36xf32> to vector<8x1xf32>
    %56 = vector.extract_strided_slice %54 {offsets = [0, 0], sizes = [1, 256], strides = [1, 1]} : vector<4x256xf32> to vector<1x256xf32>
    %57 = vector.broadcast %55 : vector<8x1xf32> to vector<8x256xf32>
    %58 = vector.broadcast %56 : vector<1x256xf32> to vector<8x256xf32>
    %59 = arith.mulf %57, %58 : vector<8x256xf32>
    %60 = arith.addf %52, %59 : vector<8x256xf32>
    %61 = vector.extract_strided_slice %1 {offsets = [0, 9], sizes = [8, 1], strides = [1, 1]} : vector<8x36xf32> to vector<8x1xf32>
    %62 = vector.extract_strided_slice %54 {offsets = [1, 0], sizes = [1, 256], strides = [1, 1]} : vector<4x256xf32> to vector<1x256xf32>
    %63 = vector.broadcast %61 : vector<8x1xf32> to vector<8x256xf32>
    %64 = vector.broadcast %62 : vector<1x256xf32> to vector<8x256xf32>
    %65 = arith.mulf %63, %64 : vector<8x256xf32>
    %66 = arith.addf %60, %65 : vector<8x256xf32>
    %67 = vector.extract_strided_slice %1 {offsets = [0, 10], sizes = [8, 1], strides = [1, 1]} : vector<8x36xf32> to vector<8x1xf32>
    %68 = vector.extract_strided_slice %54 {offsets = [2, 0], sizes = [1, 256], strides = [1, 1]} : vector<4x256xf32> to vector<1x256xf32>
    %69 = vector.broadcast %67 : vector<8x1xf32> to vector<8x256xf32>
    %70 = vector.broadcast %68 : vector<1x256xf32> to vector<8x256xf32>
    %71 = arith.mulf %69, %70 : vector<8x256xf32>
    %72 = arith.addf %66, %71 : vector<8x256xf32>
    %73 = vector.extract_strided_slice %1 {offsets = [0, 11], sizes = [8, 1], strides = [1, 1]} : vector<8x36xf32> to vector<8x1xf32>
    %74 = vector.extract_strided_slice %54 {offsets = [3, 0], sizes = [1, 256], strides = [1, 1]} : vector<4x256xf32> to vector<1x256xf32>
    %75 = vector.broadcast %73 : vector<8x1xf32> to vector<8x256xf32>
    %76 = vector.broadcast %74 : vector<1x256xf32> to vector<8x256xf32>
    %77 = arith.mulf %75, %76 : vector<8x256xf32>
    %78 = arith.addf %72, %77 : vector<8x256xf32>
    %c0_13 = arith.constant 0 : index
    %c0_14 = arith.constant 0 : index
    %c0_15 = arith.constant 0 : index
    %c10 = arith.constant 10 : index
    %79 = vector.load %arg2[%c0_13, %c0_14, %c0_15, %c10] : memref<1x1x4x384xf32, #tpu.memory_space<vmem>>, vector<1x1x4x256xf32>
    %80 = vector.shape_cast %79 : vector<1x1x4x256xf32> to vector<4x256xf32>
    %81 = vector.extract_strided_slice %1 {offsets = [0, 12], sizes = [8, 1], strides = [1, 1]} : vector<8x36xf32> to vector<8x1xf32>
    %82 = vector.extract_strided_slice %80 {offsets = [0, 0], sizes = [1, 256], strides = [1, 1]} : vector<4x256xf32> to vector<1x256xf32>
    %83 = vector.broadcast %81 : vector<8x1xf32> to vector<8x256xf32>
    %84 = vector.broadcast %82 : vector<1x256xf32> to vector<8x256xf32>
    %85 = arith.mulf %83, %84 : vector<8x256xf32>
    %86 = arith.addf %78, %85 : vector<8x256xf32>
    %87 = vector.extract_strided_slice %1 {offsets = [0, 13], sizes = [8, 1], strides = [1, 1]} : vector<8x36xf32> to vector<8x1xf32>
    %88 = vector.extract_strided_slice %80 {offsets = [1, 0], sizes = [1, 256], strides = [1, 1]} : vector<4x256xf32> to vector<1x256xf32>
    %89 = vector.broadcast %87 : vector<8x1xf32> to vector<8x256xf32>
    %90 = vector.broadcast %88 : vector<1x256xf32> to vector<8x256xf32>
    %91 = arith.mulf %89, %90 : vector<8x256xf32>
    %92 = arith.addf %86, %91 : vector<8x256xf32>
    %93 = vector.extract_strided_slice %1 {offsets = [0, 14], sizes = [8, 1], strides = [1, 1]} : vector<8x36xf32> to vector<8x1xf32>
    %94 = vector.extract_strided_slice %80 {offsets = [2, 0], sizes = [1, 256], strides = [1, 1]} : vector<4x256xf32> to vector<1x256xf32>
    %95 = vector.broadcast %93 : vector<8x1xf32> to vector<8x256xf32>
    %96 = vector.broadcast %94 : vector<1x256xf32> to vector<8x256xf32>
    %97 = arith.mulf %95, %96 : vector<8x256xf32>
    %98 = arith.addf %92, %97 : vector<8x256xf32>
    %99 = vector.extract_strided_slice %1 {offsets = [0, 15], sizes = [8, 1], strides = [1, 1]} : vector<8x36xf32> to vector<8x1xf32>
    %100 = vector.extract_strided_slice %80 {offsets = [3, 0], sizes = [1, 256], strides = [1, 1]} : vector<4x256xf32> to vector<1x256xf32>
    %101 = vector.broadcast %99 : vector<8x1xf32> to vector<8x256xf32>
    %102 = vector.broadcast %100 : vector<1x256xf32> to vector<8x256xf32>
    %103 = arith.mulf %101, %102 : vector<8x256xf32>
    %104 = arith.addf %98, %103 : vector<8x256xf32>
    %c0_16 = arith.constant 0 : index
    %c0_17 = arith.constant 0 : index
    %c0_18 = arith.constant 0 : index
    %c11 = arith.constant 11 : index
    %105 = vector.load %arg2[%c0_16, %c0_17, %c0_18, %c11] : memref<1x1x4x384xf32, #tpu.memory_space<vmem>>, vector<1x1x4x256xf32>
    %106 = vector.shape_cast %105 : vector<1x1x4x256xf32> to vector<4x256xf32>
    %107 = vector.extract_strided_slice %1 {offsets = [0, 16], sizes = [8, 1], strides = [1, 1]} : vector<8x36xf32> to vector<8x1xf32>
    %108 = vector.extract_strided_slice %106 {offsets = [0, 0], sizes = [1, 256], strides = [1, 1]} : vector<4x256xf32> to vector<1x256xf32>
    %109 = vector.broadcast %107 : vector<8x1xf32> to vector<8x256xf32>
    %110 = vector.broadcast %108 : vector<1x256xf32> to vector<8x256xf32>
    %111 = arith.mulf %109, %110 : vector<8x256xf32>
    %112 = arith.addf %104, %111 : vector<8x256xf32>
    %113 = vector.extract_strided_slice %1 {offsets = [0, 17], sizes = [8, 1], strides = [1, 1]} : vector<8x36xf32> to vector<8x1xf32>
    %114 = vector.extract_strided_slice %106 {offsets = [1, 0], sizes = [1, 256], strides = [1, 1]} : vector<4x256xf32> to vector<1x256xf32>
    %115 = vector.broadcast %113 : vector<8x1xf32> to vector<8x256xf32>
    %116 = vector.broadcast %114 : vector<1x256xf32> to vector<8x256xf32>
    %117 = arith.mulf %115, %116 : vector<8x256xf32>
    %118 = arith.addf %112, %117 : vector<8x256xf32>
    %119 = vector.extract_strided_slice %1 {offsets = [0, 18], sizes = [8, 1], strides = [1, 1]} : vector<8x36xf32> to vector<8x1xf32>
    %120 = vector.extract_strided_slice %106 {offsets = [2, 0], sizes = [1, 256], strides = [1, 1]} : vector<4x256xf32> to vector<1x256xf32>
    %121 = vector.broadcast %119 : vector<8x1xf32> to vector<8x256xf32>
    %122 = vector.broadcast %120 : vector<1x256xf32> to vector<8x256xf32>
    %123 = arith.mulf %121, %122 : vector<8x256xf32>
    %124 = arith.addf %118, %123 : vector<8x256xf32>
    %125 = vector.extract_strided_slice %1 {offsets = [0, 19], sizes = [8, 1], strides = [1, 1]} : vector<8x36xf32> to vector<8x1xf32>
    %126 = vector.extract_strided_slice %106 {offsets = [3, 0], sizes = [1, 256], strides = [1, 1]} : vector<4x256xf32> to vector<1x256xf32>
    %127 = vector.broadcast %125 : vector<8x1xf32> to vector<8x256xf32>
    %128 = vector.broadcast %126 : vector<1x256xf32> to vector<8x256xf32>
    %129 = arith.mulf %127, %128 : vector<8x256xf32>
    %130 = arith.addf %124, %129 : vector<8x256xf32>
    %c0_19 = arith.constant 0 : index
    %c0_20 = arith.constant 0 : index
    %c0_21 = arith.constant 0 : index
    %c12 = arith.constant 12 : index
    %131 = vector.load %arg2[%c0_19, %c0_20, %c0_21, %c12] : memref<1x1x4x384xf32, #tpu.memory_space<vmem>>, vector<1x1x4x256xf32>
    %132 = vector.shape_cast %131 : vector<1x1x4x256xf32> to vector<4x256xf32>
    %133 = vector.extract_strided_slice %1 {offsets = [0, 20], sizes = [8, 1], strides = [1, 1]} : vector<8x36xf32> to vector<8x1xf32>
    %134 = vector.extract_strided_slice %132 {offsets = [0, 0], sizes = [1, 256], strides = [1, 1]} : vector<4x256xf32> to vector<1x256xf32>
    %135 = vector.broadcast %133 : vector<8x1xf32> to vector<8x256xf32>
    %136 = vector.broadcast %134 : vector<1x256xf32> to vector<8x256xf32>
    %137 = arith.mulf %135, %136 : vector<8x256xf32>
    %138 = arith.addf %130, %137 : vector<8x256xf32>
    %139 = vector.extract_strided_slice %1 {offsets = [0, 21], sizes = [8, 1], strides = [1, 1]} : vector<8x36xf32> to vector<8x1xf32>
    %140 = vector.extract_strided_slice %132 {offsets = [1, 0], sizes = [1, 256], strides = [1, 1]} : vector<4x256xf32> to vector<1x256xf32>
    %141 = vector.broadcast %139 : vector<8x1xf32> to vector<8x256xf32>
    %142 = vector.broadcast %140 : vector<1x256xf32> to vector<8x256xf32>
    %143 = arith.mulf %141, %142 : vector<8x256xf32>
    %144 = arith.addf %138, %143 : vector<8x256xf32>
    %145 = vector.extract_strided_slice %1 {offsets = [0, 22], sizes = [8, 1], strides = [1, 1]} : vector<8x36xf32> to vector<8x1xf32>
    %146 = vector.extract_strided_slice %132 {offsets = [2, 0], sizes = [1, 256], strides = [1, 1]} : vector<4x256xf32> to vector<1x256xf32>
    %147 = vector.broadcast %145 : vector<8x1xf32> to vector<8x256xf32>
    %148 = vector.broadcast %146 : vector<1x256xf32> to vector<8x256xf32>
    %149 = arith.mulf %147, %148 : vector<8x256xf32>
    %150 = arith.addf %144, %149 : vector<8x256xf32>
    %151 = vector.extract_strided_slice %1 {offsets = [0, 23], sizes = [8, 1], strides = [1, 1]} : vector<8x36xf32> to vector<8x1xf32>
    %152 = vector.extract_strided_slice %132 {offsets = [3, 0], sizes = [1, 256], strides = [1, 1]} : vector<4x256xf32> to vector<1x256xf32>
    %153 = vector.broadcast %151 : vector<8x1xf32> to vector<8x256xf32>
    %154 = vector.broadcast %152 : vector<1x256xf32> to vector<8x256xf32>
    %155 = arith.mulf %153, %154 : vector<8x256xf32>
    %156 = arith.addf %150, %155 : vector<8x256xf32>
    %c0_22 = arith.constant 0 : index
    %c0_23 = arith.constant 0 : index
    %c0_24 = arith.constant 0 : index
    %c20 = arith.constant 20 : index
    %157 = vector.load %arg2[%c0_22, %c0_23, %c0_24, %c20] : memref<1x1x4x384xf32, #tpu.memory_space<vmem>>, vector<1x1x4x256xf32>
    %158 = vector.shape_cast %157 : vector<1x1x4x256xf32> to vector<4x256xf32>
    %159 = vector.extract_strided_slice %1 {offsets = [0, 24], sizes = [8, 1], strides = [1, 1]} : vector<8x36xf32> to vector<8x1xf32>
    %160 = vector.extract_strided_slice %158 {offsets = [0, 0], sizes = [1, 256], strides = [1, 1]} : vector<4x256xf32> to vector<1x256xf32>
    %161 = vector.broadcast %159 : vector<8x1xf32> to vector<8x256xf32>
    %162 = vector.broadcast %160 : vector<1x256xf32> to vector<8x256xf32>
    %163 = arith.mulf %161, %162 : vector<8x256xf32>
    %164 = arith.addf %156, %163 : vector<8x256xf32>
    %165 = vector.extract_strided_slice %1 {offsets = [0, 25], sizes = [8, 1], strides = [1, 1]} : vector<8x36xf32> to vector<8x1xf32>
    %166 = vector.extract_strided_slice %158 {offsets = [1, 0], sizes = [1, 256], strides = [1, 1]} : vector<4x256xf32> to vector<1x256xf32>
    %167 = vector.broadcast %165 : vector<8x1xf32> to vector<8x256xf32>
    %168 = vector.broadcast %166 : vector<1x256xf32> to vector<8x256xf32>
    %169 = arith.mulf %167, %168 : vector<8x256xf32>
    %170 = arith.addf %164, %169 : vector<8x256xf32>
    %171 = vector.extract_strided_slice %1 {offsets = [0, 26], sizes = [8, 1], strides = [1, 1]} : vector<8x36xf32> to vector<8x1xf32>
    %172 = vector.extract_strided_slice %158 {offsets = [2, 0], sizes = [1, 256], strides = [1, 1]} : vector<4x256xf32> to vector<1x256xf32>
    %173 = vector.broadcast %171 : vector<8x1xf32> to vector<8x256xf32>
    %174 = vector.broadcast %172 : vector<1x256xf32> to vector<8x256xf32>
    %175 = arith.mulf %173, %174 : vector<8x256xf32>
    %176 = arith.addf %170, %175 : vector<8x256xf32>
    %177 = vector.extract_strided_slice %1 {offsets = [0, 27], sizes = [8, 1], strides = [1, 1]} : vector<8x36xf32> to vector<8x1xf32>
    %178 = vector.extract_strided_slice %158 {offsets = [3, 0], sizes = [1, 256], strides = [1, 1]} : vector<4x256xf32> to vector<1x256xf32>
    %179 = vector.broadcast %177 : vector<8x1xf32> to vector<8x256xf32>
    %180 = vector.broadcast %178 : vector<1x256xf32> to vector<8x256xf32>
    %181 = arith.mulf %179, %180 : vector<8x256xf32>
    %182 = arith.addf %176, %181 : vector<8x256xf32>
    %c0_25 = arith.constant 0 : index
    %c0_26 = arith.constant 0 : index
    %c0_27 = arith.constant 0 : index
    %c21 = arith.constant 21 : index
    %183 = vector.load %arg2[%c0_25, %c0_26, %c0_27, %c21] : memref<1x1x4x384xf32, #tpu.memory_space<vmem>>, vector<1x1x4x256xf32>
    %184 = vector.shape_cast %183 : vector<1x1x4x256xf32> to vector<4x256xf32>
    %185 = vector.extract_strided_slice %1 {offsets = [0, 28], sizes = [8, 1], strides = [1, 1]} : vector<8x36xf32> to vector<8x1xf32>
    %186 = vector.extract_strided_slice %184 {offsets = [0, 0], sizes = [1, 256], strides = [1, 1]} : vector<4x256xf32> to vector<1x256xf32>
    %187 = vector.broadcast %185 : vector<8x1xf32> to vector<8x256xf32>
    %188 = vector.broadcast %186 : vector<1x256xf32> to vector<8x256xf32>
    %189 = arith.mulf %187, %188 : vector<8x256xf32>
    %190 = arith.addf %182, %189 : vector<8x256xf32>
    %191 = vector.extract_strided_slice %1 {offsets = [0, 29], sizes = [8, 1], strides = [1, 1]} : vector<8x36xf32> to vector<8x1xf32>
    %192 = vector.extract_strided_slice %184 {offsets = [1, 0], sizes = [1, 256], strides = [1, 1]} : vector<4x256xf32> to vector<1x256xf32>
    %193 = vector.broadcast %191 : vector<8x1xf32> to vector<8x256xf32>
    %194 = vector.broadcast %192 : vector<1x256xf32> to vector<8x256xf32>
    %195 = arith.mulf %193, %194 : vector<8x256xf32>
    %196 = arith.addf %190, %195 : vector<8x256xf32>
    %197 = vector.extract_strided_slice %1 {offsets = [0, 30], sizes = [8, 1], strides = [1, 1]} : vector<8x36xf32> to vector<8x1xf32>
    %198 = vector.extract_strided_slice %184 {offsets = [2, 0], sizes = [1, 256], strides = [1, 1]} : vector<4x256xf32> to vector<1x256xf32>
    %199 = vector.broadcast %197 : vector<8x1xf32> to vector<8x256xf32>
    %200 = vector.broadcast %198 : vector<1x256xf32> to vector<8x256xf32>
    %201 = arith.mulf %199, %200 : vector<8x256xf32>
    %202 = arith.addf %196, %201 : vector<8x256xf32>
    %203 = vector.extract_strided_slice %1 {offsets = [0, 31], sizes = [8, 1], strides = [1, 1]} : vector<8x36xf32> to vector<8x1xf32>
    %204 = vector.extract_strided_slice %184 {offsets = [3, 0], sizes = [1, 256], strides = [1, 1]} : vector<4x256xf32> to vector<1x256xf32>
    %205 = vector.broadcast %203 : vector<8x1xf32> to vector<8x256xf32>
    %206 = vector.broadcast %204 : vector<1x256xf32> to vector<8x256xf32>
    %207 = arith.mulf %205, %206 : vector<8x256xf32>
    %208 = arith.addf %202, %207 : vector<8x256xf32>
    %c0_28 = arith.constant 0 : index
    %c0_29 = arith.constant 0 : index
    %c0_30 = arith.constant 0 : index
    %c22 = arith.constant 22 : index
    %209 = vector.load %arg2[%c0_28, %c0_29, %c0_30, %c22] : memref<1x1x4x384xf32, #tpu.memory_space<vmem>>, vector<1x1x4x256xf32>
    %210 = vector.shape_cast %209 : vector<1x1x4x256xf32> to vector<4x256xf32>
    %211 = vector.extract_strided_slice %1 {offsets = [0, 32], sizes = [8, 1], strides = [1, 1]} : vector<8x36xf32> to vector<8x1xf32>
    %212 = vector.extract_strided_slice %210 {offsets = [0, 0], sizes = [1, 256], strides = [1, 1]} : vector<4x256xf32> to vector<1x256xf32>
    %213 = vector.broadcast %211 : vector<8x1xf32> to vector<8x256xf32>
    %214 = vector.broadcast %212 : vector<1x256xf32> to vector<8x256xf32>
    %215 = arith.mulf %213, %214 : vector<8x256xf32>
    %216 = arith.addf %208, %215 : vector<8x256xf32>
    %217 = vector.extract_strided_slice %1 {offsets = [0, 33], sizes = [8, 1], strides = [1, 1]} : vector<8x36xf32> to vector<8x1xf32>
    %218 = vector.extract_strided_slice %210 {offsets = [1, 0], sizes = [1, 256], strides = [1, 1]} : vector<4x256xf32> to vector<1x256xf32>
    %219 = vector.broadcast %217 : vector<8x1xf32> to vector<8x256xf32>
    %220 = vector.broadcast %218 : vector<1x256xf32> to vector<8x256xf32>
    %221 = arith.mulf %219, %220 : vector<8x256xf32>
    %222 = arith.addf %216, %221 : vector<8x256xf32>
    %223 = vector.extract_strided_slice %1 {offsets = [0, 34], sizes = [8, 1], strides = [1, 1]} : vector<8x36xf32> to vector<8x1xf32>
    %224 = vector.extract_strided_slice %210 {offsets = [2, 0], sizes = [1, 256], strides = [1, 1]} : vector<4x256xf32> to vector<1x256xf32>
    %225 = vector.broadcast %223 : vector<8x1xf32> to vector<8x256xf32>
    %226 = vector.broadcast %224 : vector<1x256xf32> to vector<8x256xf32>
    %227 = arith.mulf %225, %226 : vector<8x256xf32>
    %228 = arith.addf %222, %227 : vector<8x256xf32>
    %229 = vector.extract_strided_slice %1 {offsets = [0, 35], sizes = [8, 1], strides = [1, 1]} : vector<8x36xf32> to vector<8x1xf32>
    %230 = vector.extract_strided_slice %210 {offsets = [3, 0], sizes = [1, 256], strides = [1, 1]} : vector<4x256xf32> to vector<1x256xf32>
    %231 = vector.broadcast %229 : vector<8x1xf32> to vector<8x256xf32>
    %232 = vector.broadcast %230 : vector<1x256xf32> to vector<8x256xf32>
    %233 = arith.mulf %231, %232 : vector<8x256xf32>
    %234 = arith.addf %228, %233 : vector<8x256xf32>
    %c0_31 = arith.constant 0 : index
    %c0_32 = arith.constant 0 : index
    %235 = vector.load %arg4[%c0_31, %c0_32] : memref<8x1xf32, #tpu.memory_space<vmem>>, vector<8x1xf32>
    %236 = vector.broadcast %235 : vector<8x1xf32> to vector<8x256xf32>
    %237 = arith.addf %234, %236 : vector<8x256xf32>
    %c0_33 = arith.constant 0 : index
    %c0_34 = arith.constant 0 : index
    %238 = vector.load %arg5[%c0_33, %c0_34] : memref<8x1xf32, #tpu.memory_space<vmem>>, vector<8x1xf32>
    %239 = arith.mulf %237, %237 : vector<8x256xf32>
    %cst = arith.constant dense<0.000000e+00> : vector<256xf32>
    %240 = vector.multi_reduction <add>, %239, %cst [0] : vector<8x256xf32> to vector<256xf32>
    %241 = vector.shape_cast %240 : vector<256xf32> to vector<1x256xf32>
    %cst_35 = arith.constant 1.000000e-24 : f32
    %242 = vector.broadcast %cst_35 : f32 to vector<1x256xf32>
    %243 = arith.maximumf %241, %242 : vector<1x256xf32>
    %244 = math.rsqrt %243 : vector<1x256xf32>
    %245 = vector.broadcast %244 : vector<1x256xf32> to vector<8x256xf32>
    %246 = arith.mulf %237, %245 : vector<8x256xf32>
    %247 = vector.broadcast %238 : vector<8x1xf32> to vector<8x256xf32>
    %248 = arith.mulf %246, %247 : vector<8x256xf32>
    %c0_36 = arith.constant 0 : index
    %c0_37 = arith.constant 0 : index
    %c0_38 = arith.constant 0 : index
    %249 = vector.load %arg6[%c0_36, %c0_37, %c0_38] : memref<1x8x1xf32, #tpu.memory_space<vmem>>, vector<1x8x1xf32>
    %250 = vector.shape_cast %249 : vector<1x8x1xf32> to vector<8x1xf32>
    %251 = vector.broadcast %250 : vector<8x1xf32> to vector<8x256xf32>
    %252 = arith.mulf %248, %251 : vector<8x256xf32>
    %c0_39 = arith.constant 0 : index
    %c0_40 = arith.constant 0 : index
    %c0_41 = arith.constant 0 : index
    %253 = vector.load %arg7[%c0_39, %c0_40, %c0_41] : memref<1x8x1xf32, #tpu.memory_space<vmem>>, vector<1x8x1xf32>
    %254 = vector.shape_cast %253 : vector<1x8x1xf32> to vector<8x1xf32>
    %255 = vector.broadcast %254 : vector<8x1xf32> to vector<8x256xf32>
    %256 = arith.addf %252, %255 : vector<8x256xf32>
    %257 = arith.negf %256 : vector<8x256xf32>
    %258 = math.exp %257 : vector<8x256xf32>
    %cst_42 = arith.constant 1.000000e+00 : f32
    %259 = vector.broadcast %cst_42 : f32 to vector<8x256xf32>
    %260 = arith.addf %259, %258 : vector<8x256xf32>
    %261 = arith.divf %259, %260 : vector<8x256xf32>
    %262 = arith.mulf %256, %261 : vector<8x256xf32>
    %263 = vector.broadcast %0 : vector<1x256xf32> to vector<8x256xf32>
    %264 = arith.mulf %262, %263 : vector<8x256xf32>
    %cst_43 = arith.constant 0.000000e+00 : f32
    %265 = vector.broadcast %cst_43 : f32 to vector<8x128xf32>
    %c0_44 = arith.constant 0 : index
    %c0_45 = arith.constant 0 : index
    %266 = vector.load %arg15[%c0_44, %c0_45] : memref<8x512xf32, #tpu.memory_space<vmem>>, vector<8x128xf32>
    tpu.vector_store %arg15[%c0_44, %c0_45], %265 {strides = array<i32>} : memref<8x512xf32, #tpu.memory_space<vmem>>, vector<8x128xf32>,
    %c0_46 = arith.constant 0 : index
    %c128 = arith.constant 128 : index
    %267 = vector.load %arg15[%c0_46, %c128] : memref<8x512xf32, #tpu.memory_space<vmem>>, vector<8x256xf32>
    tpu.vector_store %arg15[%c0_46, %c128], %264 {strides = array<i32>} : memref<8x512xf32, #tpu.memory_space<vmem>>, vector<8x256xf32>,
    %cst_47 = arith.constant 0.000000e+00 : f32
    %268 = vector.broadcast %cst_47 : f32 to vector<8x128xf32>
    %c0_48 = arith.constant 0 : index
    %c384 = arith.constant 384 : index
    %269 = vector.load %arg15[%c0_48, %c384] : memref<8x512xf32, #tpu.memory_space<vmem>>, vector<8x128xf32>
    tpu.vector_store %arg15[%c0_48, %c384], %268 {strides = array<i32>} : memref<8x512xf32, #tpu.memory_space<vmem>>, vector<8x128xf32>,
    %c0_49 = arith.constant 0 : index
    %c0_50 = arith.constant 0 : index
    %270 = vector.load %arg8[%c0_49, %c0_50] : memref<8x72xf32, #tpu.memory_space<vmem>>, vector<8x72xf32>
    %c0_51 = arith.constant 0 : index
    %c117 = arith.constant 117 : index
    %271 = vector.load %arg15[%c0_51, %c117] : memref<8x512xf32, #tpu.memory_space<vmem>>, vector<8x256xf32>
    %272 = vector.extract_strided_slice %270 {offsets = [0, 0], sizes = [8, 1], strides = [1, 1]} : vector<8x72xf32> to vector<8x1xf32>
    %273 = vector.extract_strided_slice %271 {offsets = [0, 0], sizes = [1, 256], strides = [1, 1]} : vector<8x256xf32> to vector<1x256xf32>
    %274 = vector.broadcast %272 : vector<8x1xf32> to vector<8x256xf32>
    %275 = vector.broadcast %273 : vector<1x256xf32> to vector<8x256xf32>
    %276 = arith.mulf %274, %275 : vector<8x256xf32>
    %277 = vector.extract_strided_slice %270 {offsets = [0, 1], sizes = [8, 1], strides = [1, 1]} : vector<8x72xf32> to vector<8x1xf32>
    %278 = vector.extract_strided_slice %271 {offsets = [1, 0], sizes = [1, 256], strides = [1, 1]} : vector<8x256xf32> to vector<1x256xf32>
    %279 = vector.broadcast %277 : vector<8x1xf32> to vector<8x256xf32>
    %280 = vector.broadcast %278 : vector<1x256xf32> to vector<8x256xf32>
    %281 = arith.mulf %279, %280 : vector<8x256xf32>
    %282 = arith.addf %276, %281 : vector<8x256xf32>
    %283 = vector.extract_strided_slice %270 {offsets = [0, 2], sizes = [8, 1], strides = [1, 1]} : vector<8x72xf32> to vector<8x1xf32>
    %284 = vector.extract_strided_slice %271 {offsets = [2, 0], sizes = [1, 256], strides = [1, 1]} : vector<8x256xf32> to vector<1x256xf32>
    %285 = vector.broadcast %283 : vector<8x1xf32> to vector<8x256xf32>
    %286 = vector.broadcast %284 : vector<1x256xf32> to vector<8x256xf32>
    %287 = arith.mulf %285, %286 : vector<8x256xf32>
    %288 = arith.addf %282, %287 : vector<8x256xf32>
    %289 = vector.extract_strided_slice %270 {offsets = [0, 3], sizes = [8, 1], strides = [1, 1]} : vector<8x72xf32> to vector<8x1xf32>
    %290 = vector.extract_strided_slice %271 {offsets = [3, 0], sizes = [1, 256], strides = [1, 1]} : vector<8x256xf32> to vector<1x256xf32>
    %291 = vector.broadcast %289 : vector<8x1xf32> to vector<8x256xf32>
    %292 = vector.broadcast %290 : vector<1x256xf32> to vector<8x256xf32>
    %293 = arith.mulf %291, %292 : vector<8x256xf32>
    %294 = arith.addf %288, %293 : vector<8x256xf32>
    %295 = vector.extract_strided_slice %270 {offsets = [0, 4], sizes = [8, 1], strides = [1, 1]} : vector<8x72xf32> to vector<8x1xf32>
    %296 = vector.extract_strided_slice %271 {offsets = [4, 0], sizes = [1, 256], strides = [1, 1]} : vector<8x256xf32> to vector<1x256xf32>
    %297 = vector.broadcast %295 : vector<8x1xf32> to vector<8x256xf32>
    %298 = vector.broadcast %296 : vector<1x256xf32> to vector<8x256xf32>
    %299 = arith.mulf %297, %298 : vector<8x256xf32>
    %300 = arith.addf %294, %299 : vector<8x256xf32>
    %301 = vector.extract_strided_slice %270 {offsets = [0, 5], sizes = [8, 1], strides = [1, 1]} : vector<8x72xf32> to vector<8x1xf32>
    %302 = vector.extract_strided_slice %271 {offsets = [5, 0], sizes = [1, 256], strides = [1, 1]} : vector<8x256xf32> to vector<1x256xf32>
    %303 = vector.broadcast %301 : vector<8x1xf32> to vector<8x256xf32>
    %304 = vector.broadcast %302 : vector<1x256xf32> to vector<8x256xf32>
    %305 = arith.mulf %303, %304 : vector<8x256xf32>
    %306 = arith.addf %300, %305 : vector<8x256xf32>
    %307 = vector.extract_strided_slice %270 {offsets = [0, 6], sizes = [8, 1], strides = [1, 1]} : vector<8x72xf32> to vector<8x1xf32>
    %308 = vector.extract_strided_slice %271 {offsets = [6, 0], sizes = [1, 256], strides = [1, 1]} : vector<8x256xf32> to vector<1x256xf32>
    %309 = vector.broadcast %307 : vector<8x1xf32> to vector<8x256xf32>
    %310 = vector.broadcast %308 : vector<1x256xf32> to vector<8x256xf32>
    %311 = arith.mulf %309, %310 : vector<8x256xf32>
    %312 = arith.addf %306, %311 : vector<8x256xf32>
    %313 = vector.extract_strided_slice %270 {offsets = [0, 7], sizes = [8, 1], strides = [1, 1]} : vector<8x72xf32> to vector<8x1xf32>
    %314 = vector.extract_strided_slice %271 {offsets = [7, 0], sizes = [1, 256], strides = [1, 1]} : vector<8x256xf32> to vector<1x256xf32>
    %315 = vector.broadcast %313 : vector<8x1xf32> to vector<8x256xf32>
    %316 = vector.broadcast %314 : vector<1x256xf32> to vector<8x256xf32>
    %317 = arith.mulf %315, %316 : vector<8x256xf32>
    %318 = arith.addf %312, %317 : vector<8x256xf32>
    %c0_52 = arith.constant 0 : index
    %c118 = arith.constant 118 : index
    %319 = vector.load %arg15[%c0_52, %c118] : memref<8x512xf32, #tpu.memory_space<vmem>>, vector<8x256xf32>
    %320 = vector.extract_strided_slice %270 {offsets = [0, 8], sizes = [8, 1], strides = [1, 1]} : vector<8x72xf32> to vector<8x1xf32>
    %321 = vector.extract_strided_slice %319 {offsets = [0, 0], sizes = [1, 256], strides = [1, 1]} : vector<8x256xf32> to vector<1x256xf32>
    %322 = vector.broadcast %320 : vector<8x1xf32> to vector<8x256xf32>
    %323 = vector.broadcast %321 : vector<1x256xf32> to vector<8x256xf32>
    %324 = arith.mulf %322, %323 : vector<8x256xf32>
    %325 = arith.addf %318, %324 : vector<8x256xf32>
    %326 = vector.extract_strided_slice %270 {offsets = [0, 9], sizes = [8, 1], strides = [1, 1]} : vector<8x72xf32> to vector<8x1xf32>
    %327 = vector.extract_strided_slice %319 {offsets = [1, 0], sizes = [1, 256], strides = [1, 1]} : vector<8x256xf32> to vector<1x256xf32>
    %328 = vector.broadcast %326 : vector<8x1xf32> to vector<8x256xf32>
    %329 = vector.broadcast %327 : vector<1x256xf32> to vector<8x256xf32>
    %330 = arith.mulf %328, %329 : vector<8x256xf32>
    %331 = arith.addf %325, %330 : vector<8x256xf32>
    %332 = vector.extract_strided_slice %270 {offsets = [0, 10], sizes = [8, 1], strides = [1, 1]} : vector<8x72xf32> to vector<8x1xf32>
    %333 = vector.extract_strided_slice %319 {offsets = [2, 0], sizes = [1, 256], strides = [1, 1]} : vector<8x256xf32> to vector<1x256xf32>
    %334 = vector.broadcast %332 : vector<8x1xf32> to vector<8x256xf32>
    %335 = vector.broadcast %333 : vector<1x256xf32> to vector<8x256xf32>
    %336 = arith.mulf %334, %335 : vector<8x256xf32>
    %337 = arith.addf %331, %336 : vector<8x256xf32>
    %338 = vector.extract_strided_slice %270 {offsets = [0, 11], sizes = [8, 1], strides = [1, 1]} : vector<8x72xf32> to vector<8x1xf32>
    %339 = vector.extract_strided_slice %319 {offsets = [3, 0], sizes = [1, 256], strides = [1, 1]} : vector<8x256xf32> to vector<1x256xf32>
    %340 = vector.broadcast %338 : vector<8x1xf32> to vector<8x256xf32>
    %341 = vector.broadcast %339 : vector<1x256xf32> to vector<8x256xf32>
    %342 = arith.mulf %340, %341 : vector<8x256xf32>
    %343 = arith.addf %337, %342 : vector<8x256xf32>
    %344 = vector.extract_strided_slice %270 {offsets = [0, 12], sizes = [8, 1], strides = [1, 1]} : vector<8x72xf32> to vector<8x1xf32>
    %345 = vector.extract_strided_slice %319 {offsets = [4, 0], sizes = [1, 256], strides = [1, 1]} : vector<8x256xf32> to vector<1x256xf32>
    %346 = vector.broadcast %344 : vector<8x1xf32> to vector<8x256xf32>
    %347 = vector.broadcast %345 : vector<1x256xf32> to vector<8x256xf32>
    %348 = arith.mulf %346, %347 : vector<8x256xf32>
    %349 = arith.addf %343, %348 : vector<8x256xf32>
    %350 = vector.extract_strided_slice %270 {offsets = [0, 13], sizes = [8, 1], strides = [1, 1]} : vector<8x72xf32> to vector<8x1xf32>
    %351 = vector.extract_strided_slice %319 {offsets = [5, 0], sizes = [1, 256], strides = [1, 1]} : vector<8x256xf32> to vector<1x256xf32>
    %352 = vector.broadcast %350 : vector<8x1xf32> to vector<8x256xf32>
    %353 = vector.broadcast %351 : vector<1x256xf32> to vector<8x256xf32>
    %354 = arith.mulf %352, %353 : vector<8x256xf32>
    %355 = arith.addf %349, %354 : vector<8x256xf32>
    %356 = vector.extract_strided_slice %270 {offsets = [0, 14], sizes = [8, 1], strides = [1, 1]} : vector<8x72xf32> to vector<8x1xf32>
    %357 = vector.extract_strided_slice %319 {offsets = [6, 0], sizes = [1, 256], strides = [1, 1]} : vector<8x256xf32> to vector<1x256xf32>
    %358 = vector.broadcast %356 : vector<8x1xf32> to vector<8x256xf32>
    %359 = vector.broadcast %357 : vector<1x256xf32> to vector<8x256xf32>
    %360 = arith.mulf %358, %359 : vector<8x256xf32>
    %361 = arith.addf %355, %360 : vector<8x256xf32>
    %362 = vector.extract_strided_slice %270 {offsets = [0, 15], sizes = [8, 1], strides = [1, 1]} : vector<8x72xf32> to vector<8x1xf32>
    %363 = vector.extract_strided_slice %319 {offsets = [7, 0], sizes = [1, 256], strides = [1, 1]} : vector<8x256xf32> to vector<1x256xf32>
    %364 = vector.broadcast %362 : vector<8x1xf32> to vector<8x256xf32>
    %365 = vector.broadcast %363 : vector<1x256xf32> to vector<8x256xf32>
    %366 = arith.mulf %364, %365 : vector<8x256xf32>
    %367 = arith.addf %361, %366 : vector<8x256xf32>
    %c0_53 = arith.constant 0 : index
    %c119 = arith.constant 119 : index
    %368 = vector.load %arg15[%c0_53, %c119] : memref<8x512xf32, #tpu.memory_space<vmem>>, vector<8x256xf32>
    %369 = vector.extract_strided_slice %270 {offsets = [0, 16], sizes = [8, 1], strides = [1, 1]} : vector<8x72xf32> to vector<8x1xf32>
    %370 = vector.extract_strided_slice %368 {offsets = [0, 0], sizes = [1, 256], strides = [1, 1]} : vector<8x256xf32> to vector<1x256xf32>
    %371 = vector.broadcast %369 : vector<8x1xf32> to vector<8x256xf32>
    %372 = vector.broadcast %370 : vector<1x256xf32> to vector<8x256xf32>
    %373 = arith.mulf %371, %372 : vector<8x256xf32>
    %374 = arith.addf %367, %373 : vector<8x256xf32>
    %375 = vector.extract_strided_slice %270 {offsets = [0, 17], sizes = [8, 1], strides = [1, 1]} : vector<8x72xf32> to vector<8x1xf32>
    %376 = vector.extract_strided_slice %368 {offsets = [1, 0], sizes = [1, 256], strides = [1, 1]} : vector<8x256xf32> to vector<1x256xf32>
    %377 = vector.broadcast %375 : vector<8x1xf32> to vector<8x256xf32>
    %378 = vector.broadcast %376 : vector<1x256xf32> to vector<8x256xf32>
    %379 = arith.mulf %377, %378 : vector<8x256xf32>
    %380 = arith.addf %374, %379 : vector<8x256xf32>
    %381 = vector.extract_strided_slice %270 {offsets = [0, 18], sizes = [8, 1], strides = [1, 1]} : vector<8x72xf32> to vector<8x1xf32>
    %382 = vector.extract_strided_slice %368 {offsets = [2, 0], sizes = [1, 256], strides = [1, 1]} : vector<8x256xf32> to vector<1x256xf32>
    %383 = vector.broadcast %381 : vector<8x1xf32> to vector<8x256xf32>
    %384 = vector.broadcast %382 : vector<1x256xf32> to vector<8x256xf32>
    %385 = arith.mulf %383, %384 : vector<8x256xf32>
    %386 = arith.addf %380, %385 : vector<8x256xf32>
    %387 = vector.extract_strided_slice %270 {offsets = [0, 19], sizes = [8, 1], strides = [1, 1]} : vector<8x72xf32> to vector<8x1xf32>
    %388 = vector.extract_strided_slice %368 {offsets = [3, 0], sizes = [1, 256], strides = [1, 1]} : vector<8x256xf32> to vector<1x256xf32>
    %389 = vector.broadcast %387 : vector<8x1xf32> to vector<8x256xf32>
    %390 = vector.broadcast %388 : vector<1x256xf32> to vector<8x256xf32>
    %391 = arith.mulf %389, %390 : vector<8x256xf32>
    %392 = arith.addf %386, %391 : vector<8x256xf32>
    %393 = vector.extract_strided_slice %270 {offsets = [0, 20], sizes = [8, 1], strides = [1, 1]} : vector<8x72xf32> to vector<8x1xf32>
    %394 = vector.extract_strided_slice %368 {offsets = [4, 0], sizes = [1, 256], strides = [1, 1]} : vector<8x256xf32> to vector<1x256xf32>
    %395 = vector.broadcast %393 : vector<8x1xf32> to vector<8x256xf32>
    %396 = vector.broadcast %394 : vector<1x256xf32> to vector<8x256xf32>
    %397 = arith.mulf %395, %396 : vector<8x256xf32>
    %398 = arith.addf %392, %397 : vector<8x256xf32>
    %399 = vector.extract_strided_slice %270 {offsets = [0, 21], sizes = [8, 1], strides = [1, 1]} : vector<8x72xf32> to vector<8x1xf32>
    %400 = vector.extract_strided_slice %368 {offsets = [5, 0], sizes = [1, 256], strides = [1, 1]} : vector<8x256xf32> to vector<1x256xf32>
    %401 = vector.broadcast %399 : vector<8x1xf32> to vector<8x256xf32>
    %402 = vector.broadcast %400 : vector<1x256xf32> to vector<8x256xf32>
    %403 = arith.mulf %401, %402 : vector<8x256xf32>
    %404 = arith.addf %398, %403 : vector<8x256xf32>
    %405 = vector.extract_strided_slice %270 {offsets = [0, 22], sizes = [8, 1], strides = [1, 1]} : vector<8x72xf32> to vector<8x1xf32>
    %406 = vector.extract_strided_slice %368 {offsets = [6, 0], sizes = [1, 256], strides = [1, 1]} : vector<8x256xf32> to vector<1x256xf32>
    %407 = vector.broadcast %405 : vector<8x1xf32> to vector<8x256xf32>
    %408 = vector.broadcast %406 : vector<1x256xf32> to vector<8x256xf32>
    %409 = arith.mulf %407, %408 : vector<8x256xf32>
    %410 = arith.addf %404, %409 : vector<8x256xf32>
    %411 = vector.extract_strided_slice %270 {offsets = [0, 23], sizes = [8, 1], strides = [1, 1]} : vector<8x72xf32> to vector<8x1xf32>
    %412 = vector.extract_strided_slice %368 {offsets = [7, 0], sizes = [1, 256], strides = [1, 1]} : vector<8x256xf32> to vector<1x256xf32>
    %413 = vector.broadcast %411 : vector<8x1xf32> to vector<8x256xf32>
    %414 = vector.broadcast %412 : vector<1x256xf32> to vector<8x256xf32>
    %415 = arith.mulf %413, %414 : vector<8x256xf32>
    %416 = arith.addf %410, %415 : vector<8x256xf32>
    %c0_54 = arith.constant 0 : index
    %c127 = arith.constant 127 : index
    %417 = vector.load %arg15[%c0_54, %c127] : memref<8x512xf32, #tpu.memory_space<vmem>>, vector<8x256xf32>
    %418 = vector.extract_strided_slice %270 {offsets = [0, 24], sizes = [8, 1], strides = [1, 1]} : vector<8x72xf32> to vector<8x1xf32>
    %419 = vector.extract_strided_slice %417 {offsets = [0, 0], sizes = [1, 256], strides = [1, 1]} : vector<8x256xf32> to vector<1x256xf32>
    %420 = vector.broadcast %418 : vector<8x1xf32> to vector<8x256xf32>
    %421 = vector.broadcast %419 : vector<1x256xf32> to vector<8x256xf32>
    %422 = arith.mulf %420, %421 : vector<8x256xf32>
    %423 = arith.addf %416, %422 : vector<8x256xf32>
    %424 = vector.extract_strided_slice %270 {offsets = [0, 25], sizes = [8, 1], strides = [1, 1]} : vector<8x72xf32> to vector<8x1xf32>
    %425 = vector.extract_strided_slice %417 {offsets = [1, 0], sizes = [1, 256], strides = [1, 1]} : vector<8x256xf32> to vector<1x256xf32>
    %426 = vector.broadcast %424 : vector<8x1xf32> to vector<8x256xf32>
    %427 = vector.broadcast %425 : vector<1x256xf32> to vector<8x256xf32>
    %428 = arith.mulf %426, %427 : vector<8x256xf32>
    %429 = arith.addf %423, %428 : vector<8x256xf32>
    %430 = vector.extract_strided_slice %270 {offsets = [0, 26], sizes = [8, 1], strides = [1, 1]} : vector<8x72xf32> to vector<8x1xf32>
    %431 = vector.extract_strided_slice %417 {offsets = [2, 0], sizes = [1, 256], strides = [1, 1]} : vector<8x256xf32> to vector<1x256xf32>
    %432 = vector.broadcast %430 : vector<8x1xf32> to vector<8x256xf32>
    %433 = vector.broadcast %431 : vector<1x256xf32> to vector<8x256xf32>
    %434 = arith.mulf %432, %433 : vector<8x256xf32>
    %435 = arith.addf %429, %434 : vector<8x256xf32>
    %436 = vector.extract_strided_slice %270 {offsets = [0, 27], sizes = [8, 1], strides = [1, 1]} : vector<8x72xf32> to vector<8x1xf32>
    %437 = vector.extract_strided_slice %417 {offsets = [3, 0], sizes = [1, 256], strides = [1, 1]} : vector<8x256xf32> to vector<1x256xf32>
    %438 = vector.broadcast %436 : vector<8x1xf32> to vector<8x256xf32>
    %439 = vector.broadcast %437 : vector<1x256xf32> to vector<8x256xf32>
    %440 = arith.mulf %438, %439 : vector<8x256xf32>
    %441 = arith.addf %435, %440 : vector<8x256xf32>
    %442 = vector.extract_strided_slice %270 {offsets = [0, 28], sizes = [8, 1], strides = [1, 1]} : vector<8x72xf32> to vector<8x1xf32>
    %443 = vector.extract_strided_slice %417 {offsets = [4, 0], sizes = [1, 256], strides = [1, 1]} : vector<8x256xf32> to vector<1x256xf32>
    %444 = vector.broadcast %442 : vector<8x1xf32> to vector<8x256xf32>
    %445 = vector.broadcast %443 : vector<1x256xf32> to vector<8x256xf32>
    %446 = arith.mulf %444, %445 : vector<8x256xf32>
    %447 = arith.addf %441, %446 : vector<8x256xf32>
    %448 = vector.extract_strided_slice %270 {offsets = [0, 29], sizes = [8, 1], strides = [1, 1]} : vector<8x72xf32> to vector<8x1xf32>
    %449 = vector.extract_strided_slice %417 {offsets = [5, 0], sizes = [1, 256], strides = [1, 1]} : vector<8x256xf32> to vector<1x256xf32>
    %450 = vector.broadcast %448 : vector<8x1xf32> to vector<8x256xf32>
    %451 = vector.broadcast %449 : vector<1x256xf32> to vector<8x256xf32>
    %452 = arith.mulf %450, %451 : vector<8x256xf32>
    %453 = arith.addf %447, %452 : vector<8x256xf32>
    %454 = vector.extract_strided_slice %270 {offsets = [0, 30], sizes = [8, 1], strides = [1, 1]} : vector<8x72xf32> to vector<8x1xf32>
    %455 = vector.extract_strided_slice %417 {offsets = [6, 0], sizes = [1, 256], strides = [1, 1]} : vector<8x256xf32> to vector<1x256xf32>
    %456 = vector.broadcast %454 : vector<8x1xf32> to vector<8x256xf32>
    %457 = vector.broadcast %455 : vector<1x256xf32> to vector<8x256xf32>
    %458 = arith.mulf %456, %457 : vector<8x256xf32>
    %459 = arith.addf %453, %458 : vector<8x256xf32>
    %460 = vector.extract_strided_slice %270 {offsets = [0, 31], sizes = [8, 1], strides = [1, 1]} : vector<8x72xf32> to vector<8x1xf32>
    %461 = vector.extract_strided_slice %417 {offsets = [7, 0], sizes = [1, 256], strides = [1, 1]} : vector<8x256xf32> to vector<1x256xf32>
    %462 = vector.broadcast %460 : vector<8x1xf32> to vector<8x256xf32>
    %463 = vector.broadcast %461 : vector<1x256xf32> to vector<8x256xf32>
    %464 = arith.mulf %462, %463 : vector<8x256xf32>
    %465 = arith.addf %459, %464 : vector<8x256xf32>
    %c0_55 = arith.constant 0 : index
    %c128_56 = arith.constant 128 : index
    %466 = vector.load %arg15[%c0_55, %c128_56] : memref<8x512xf32, #tpu.memory_space<vmem>>, vector<8x256xf32>
    %467 = vector.extract_strided_slice %270 {offsets = [0, 32], sizes = [8, 1], strides = [1, 1]} : vector<8x72xf32> to vector<8x1xf32>
    %468 = vector.extract_strided_slice %466 {offsets = [0, 0], sizes = [1, 256], strides = [1, 1]} : vector<8x256xf32> to vector<1x256xf32>
    %469 = vector.broadcast %467 : vector<8x1xf32> to vector<8x256xf32>
    %470 = vector.broadcast %468 : vector<1x256xf32> to vector<8x256xf32>
    %471 = arith.mulf %469, %470 : vector<8x256xf32>
    %472 = arith.addf %465, %471 : vector<8x256xf32>
    %473 = vector.extract_strided_slice %270 {offsets = [0, 33], sizes = [8, 1], strides = [1, 1]} : vector<8x72xf32> to vector<8x1xf32>
    %474 = vector.extract_strided_slice %466 {offsets = [1, 0], sizes = [1, 256], strides = [1, 1]} : vector<8x256xf32> to vector<1x256xf32>
    %475 = vector.broadcast %473 : vector<8x1xf32> to vector<8x256xf32>
    %476 = vector.broadcast %474 : vector<1x256xf32> to vector<8x256xf32>
    %477 = arith.mulf %475, %476 : vector<8x256xf32>
    %478 = arith.addf %472, %477 : vector<8x256xf32>
    %479 = vector.extract_strided_slice %270 {offsets = [0, 34], sizes = [8, 1], strides = [1, 1]} : vector<8x72xf32> to vector<8x1xf32>
    %480 = vector.extract_strided_slice %466 {offsets = [2, 0], sizes = [1, 256], strides = [1, 1]} : vector<8x256xf32> to vector<1x256xf32>
    %481 = vector.broadcast %479 : vector<8x1xf32> to vector<8x256xf32>
    %482 = vector.broadcast %480 : vector<1x256xf32> to vector<8x256xf32>
    %483 = arith.mulf %481, %482 : vector<8x256xf32>
    %484 = arith.addf %478, %483 : vector<8x256xf32>
    %485 = vector.extract_strided_slice %270 {offsets = [0, 35], sizes = [8, 1], strides = [1, 1]} : vector<8x72xf32> to vector<8x1xf32>
    %486 = vector.extract_strided_slice %466 {offsets = [3, 0], sizes = [1, 256], strides = [1, 1]} : vector<8x256xf32> to vector<1x256xf32>
    %487 = vector.broadcast %485 : vector<8x1xf32> to vector<8x256xf32>
    %488 = vector.broadcast %486 : vector<1x256xf32> to vector<8x256xf32>
    %489 = arith.mulf %487, %488 : vector<8x256xf32>
    %490 = arith.addf %484, %489 : vector<8x256xf32>
    %491 = vector.extract_strided_slice %270 {offsets = [0, 36], sizes = [8, 1], strides = [1, 1]} : vector<8x72xf32> to vector<8x1xf32>
    %492 = vector.extract_strided_slice %466 {offsets = [4, 0], sizes = [1, 256], strides = [1, 1]} : vector<8x256xf32> to vector<1x256xf32>
    %493 = vector.broadcast %491 : vector<8x1xf32> to vector<8x256xf32>
    %494 = vector.broadcast %492 : vector<1x256xf32> to vector<8x256xf32>
    %495 = arith.mulf %493, %494 : vector<8x256xf32>
    %496 = arith.addf %490, %495 : vector<8x256xf32>
    %497 = vector.extract_strided_slice %270 {offsets = [0, 37], sizes = [8, 1], strides = [1, 1]} : vector<8x72xf32> to vector<8x1xf32>
    %498 = vector.extract_strided_slice %466 {offsets = [5, 0], sizes = [1, 256], strides = [1, 1]} : vector<8x256xf32> to vector<1x256xf32>
    %499 = vector.broadcast %497 : vector<8x1xf32> to vector<8x256xf32>
    %500 = vector.broadcast %498 : vector<1x256xf32> to vector<8x256xf32>
    %501 = arith.mulf %499, %500 : vector<8x256xf32>
    %502 = arith.addf %496, %501 : vector<8x256xf32>
    %503 = vector.extract_strided_slice %270 {offsets = [0, 38], sizes = [8, 1], strides = [1, 1]} : vector<8x72xf32> to vector<8x1xf32>
    %504 = vector.extract_strided_slice %466 {offsets = [6, 0], sizes = [1, 256], strides = [1, 1]} : vector<8x256xf32> to vector<1x256xf32>
    %505 = vector.broadcast %503 : vector<8x1xf32> to vector<8x256xf32>
    %506 = vector.broadcast %504 : vector<1x256xf32> to vector<8x256xf32>
    %507 = arith.mulf %505, %506 : vector<8x256xf32>
    %508 = arith.addf %502, %507 : vector<8x256xf32>
    %509 = vector.extract_strided_slice %270 {offsets = [0, 39], sizes = [8, 1], strides = [1, 1]} : vector<8x72xf32> to vector<8x1xf32>
    %510 = vector.extract_strided_slice %466 {offsets = [7, 0], sizes = [1, 256], strides = [1, 1]} : vector<8x256xf32> to vector<1x256xf32>
    %511 = vector.broadcast %509 : vector<8x1xf32> to vector<8x256xf32>
    %512 = vector.broadcast %510 : vector<1x256xf32> to vector<8x256xf32>
    %513 = arith.mulf %511, %512 : vector<8x256xf32>
    %514 = arith.addf %508, %513 : vector<8x256xf32>
    %c0_57 = arith.constant 0 : index
    %c129 = arith.constant 129 : index
    %515 = vector.load %arg15[%c0_57, %c129] : memref<8x512xf32, #tpu.memory_space<vmem>>, vector<8x256xf32>
    %516 = vector.extract_strided_slice %270 {offsets = [0, 40], sizes = [8, 1], strides = [1, 1]} : vector<8x72xf32> to vector<8x1xf32>
    %517 = vector.extract_strided_slice %515 {offsets = [0, 0], sizes = [1, 256], strides = [1, 1]} : vector<8x256xf32> to vector<1x256xf32>
    %518 = vector.broadcast %516 : vector<8x1xf32> to vector<8x256xf32>
    %519 = vector.broadcast %517 : vector<1x256xf32> to vector<8x256xf32>
    %520 = arith.mulf %518, %519 : vector<8x256xf32>
    %521 = arith.addf %514, %520 : vector<8x256xf32>
    %522 = vector.extract_strided_slice %270 {offsets = [0, 41], sizes = [8, 1], strides = [1, 1]} : vector<8x72xf32> to vector<8x1xf32>
    %523 = vector.extract_strided_slice %515 {offsets = [1, 0], sizes = [1, 256], strides = [1, 1]} : vector<8x256xf32> to vector<1x256xf32>
    %524 = vector.broadcast %522 : vector<8x1xf32> to vector<8x256xf32>
    %525 = vector.broadcast %523 : vector<1x256xf32> to vector<8x256xf32>
    %526 = arith.mulf %524, %525 : vector<8x256xf32>
    %527 = arith.addf %521, %526 : vector<8x256xf32>
    %528 = vector.extract_strided_slice %270 {offsets = [0, 42], sizes = [8, 1], strides = [1, 1]} : vector<8x72xf32> to vector<8x1xf32>
    %529 = vector.extract_strided_slice %515 {offsets = [2, 0], sizes = [1, 256], strides = [1, 1]} : vector<8x256xf32> to vector<1x256xf32>
    %530 = vector.broadcast %528 : vector<8x1xf32> to vector<8x256xf32>
    %531 = vector.broadcast %529 : vector<1x256xf32> to vector<8x256xf32>
    %532 = arith.mulf %530, %531 : vector<8x256xf32>
    %533 = arith.addf %527, %532 : vector<8x256xf32>
    %534 = vector.extract_strided_slice %270 {offsets = [0, 43], sizes = [8, 1], strides = [1, 1]} : vector<8x72xf32> to vector<8x1xf32>
    %535 = vector.extract_strided_slice %515 {offsets = [3, 0], sizes = [1, 256], strides = [1, 1]} : vector<8x256xf32> to vector<1x256xf32>
    %536 = vector.broadcast %534 : vector<8x1xf32> to vector<8x256xf32>
    %537 = vector.broadcast %535 : vector<1x256xf32> to vector<8x256xf32>
    %538 = arith.mulf %536, %537 : vector<8x256xf32>
    %539 = arith.addf %533, %538 : vector<8x256xf32>
    %540 = vector.extract_strided_slice %270 {offsets = [0, 44], sizes = [8, 1], strides = [1, 1]} : vector<8x72xf32> to vector<8x1xf32>
    %541 = vector.extract_strided_slice %515 {offsets = [4, 0], sizes = [1, 256], strides = [1, 1]} : vector<8x256xf32> to vector<1x256xf32>
    %542 = vector.broadcast %540 : vector<8x1xf32> to vector<8x256xf32>
    %543 = vector.broadcast %541 : vector<1x256xf32> to vector<8x256xf32>
    %544 = arith.mulf %542, %543 : vector<8x256xf32>
    %545 = arith.addf %539, %544 : vector<8x256xf32>
    %546 = vector.extract_strided_slice %270 {offsets = [0, 45], sizes = [8, 1], strides = [1, 1]} : vector<8x72xf32> to vector<8x1xf32>
    %547 = vector.extract_strided_slice %515 {offsets = [5, 0], sizes = [1, 256], strides = [1, 1]} : vector<8x256xf32> to vector<1x256xf32>
    %548 = vector.broadcast %546 : vector<8x1xf32> to vector<8x256xf32>
    %549 = vector.broadcast %547 : vector<1x256xf32> to vector<8x256xf32>
    %550 = arith.mulf %548, %549 : vector<8x256xf32>
    %551 = arith.addf %545, %550 : vector<8x256xf32>
    %552 = vector.extract_strided_slice %270 {offsets = [0, 46], sizes = [8, 1], strides = [1, 1]} : vector<8x72xf32> to vector<8x1xf32>
    %553 = vector.extract_strided_slice %515 {offsets = [6, 0], sizes = [1, 256], strides = [1, 1]} : vector<8x256xf32> to vector<1x256xf32>
    %554 = vector.broadcast %552 : vector<8x1xf32> to vector<8x256xf32>
    %555 = vector.broadcast %553 : vector<1x256xf32> to vector<8x256xf32>
    %556 = arith.mulf %554, %555 : vector<8x256xf32>
    %557 = arith.addf %551, %556 : vector<8x256xf32>
    %558 = vector.extract_strided_slice %270 {offsets = [0, 47], sizes = [8, 1], strides = [1, 1]} : vector<8x72xf32> to vector<8x1xf32>
    %559 = vector.extract_strided_slice %515 {offsets = [7, 0], sizes = [1, 256], strides = [1, 1]} : vector<8x256xf32> to vector<1x256xf32>
    %560 = vector.broadcast %558 : vector<8x1xf32> to vector<8x256xf32>
    %561 = vector.broadcast %559 : vector<1x256xf32> to vector<8x256xf32>
    %562 = arith.mulf %560, %561 : vector<8x256xf32>
    %563 = arith.addf %557, %562 : vector<8x256xf32>
    %c0_58 = arith.constant 0 : index
    %c137 = arith.constant 137 : index
    %564 = vector.load %arg15[%c0_58, %c137] : memref<8x512xf32, #tpu.memory_space<vmem>>, vector<8x256xf32>
    %565 = vector.extract_strided_slice %270 {offsets = [0, 48], sizes = [8, 1], strides = [1, 1]} : vector<8x72xf32> to vector<8x1xf32>
    %566 = vector.extract_strided_slice %564 {offsets = [0, 0], sizes = [1, 256], strides = [1, 1]} : vector<8x256xf32> to vector<1x256xf32>
    %567 = vector.broadcast %565 : vector<8x1xf32> to vector<8x256xf32>
    %568 = vector.broadcast %566 : vector<1x256xf32> to vector<8x256xf32>
    %569 = arith.mulf %567, %568 : vector<8x256xf32>
    %570 = arith.addf %563, %569 : vector<8x256xf32>
    %571 = vector.extract_strided_slice %270 {offsets = [0, 49], sizes = [8, 1], strides = [1, 1]} : vector<8x72xf32> to vector<8x1xf32>
    %572 = vector.extract_strided_slice %564 {offsets = [1, 0], sizes = [1, 256], strides = [1, 1]} : vector<8x256xf32> to vector<1x256xf32>
    %573 = vector.broadcast %571 : vector<8x1xf32> to vector<8x256xf32>
    %574 = vector.broadcast %572 : vector<1x256xf32> to vector<8x256xf32>
    %575 = arith.mulf %573, %574 : vector<8x256xf32>
    %576 = arith.addf %570, %575 : vector<8x256xf32>
    %577 = vector.extract_strided_slice %270 {offsets = [0, 50], sizes = [8, 1], strides = [1, 1]} : vector<8x72xf32> to vector<8x1xf32>
    %578 = vector.extract_strided_slice %564 {offsets = [2, 0], sizes = [1, 256], strides = [1, 1]} : vector<8x256xf32> to vector<1x256xf32>
    %579 = vector.broadcast %577 : vector<8x1xf32> to vector<8x256xf32>
    %580 = vector.broadcast %578 : vector<1x256xf32> to vector<8x256xf32>
    %581 = arith.mulf %579, %580 : vector<8x256xf32>
    %582 = arith.addf %576, %581 : vector<8x256xf32>
    %583 = vector.extract_strided_slice %270 {offsets = [0, 51], sizes = [8, 1], strides = [1, 1]} : vector<8x72xf32> to vector<8x1xf32>
    %584 = vector.extract_strided_slice %564 {offsets = [3, 0], sizes = [1, 256], strides = [1, 1]} : vector<8x256xf32> to vector<1x256xf32>
    %585 = vector.broadcast %583 : vector<8x1xf32> to vector<8x256xf32>
    %586 = vector.broadcast %584 : vector<1x256xf32> to vector<8x256xf32>
    %587 = arith.mulf %585, %586 : vector<8x256xf32>
    %588 = arith.addf %582, %587 : vector<8x256xf32>
    %589 = vector.extract_strided_slice %270 {offsets = [0, 52], sizes = [8, 1], strides = [1, 1]} : vector<8x72xf32> to vector<8x1xf32>
    %590 = vector.extract_strided_slice %564 {offsets = [4, 0], sizes = [1, 256], strides = [1, 1]} : vector<8x256xf32> to vector<1x256xf32>
    %591 = vector.broadcast %589 : vector<8x1xf32> to vector<8x256xf32>
    %592 = vector.broadcast %590 : vector<1x256xf32> to vector<8x256xf32>
    %593 = arith.mulf %591, %592 : vector<8x256xf32>
    %594 = arith.addf %588, %593 : vector<8x256xf32>
    %595 = vector.extract_strided_slice %270 {offsets = [0, 53], sizes = [8, 1], strides = [1, 1]} : vector<8x72xf32> to vector<8x1xf32>
    %596 = vector.extract_strided_slice %564 {offsets = [5, 0], sizes = [1, 256], strides = [1, 1]} : vector<8x256xf32> to vector<1x256xf32>
    %597 = vector.broadcast %595 : vector<8x1xf32> to vector<8x256xf32>
    %598 = vector.broadcast %596 : vector<1x256xf32> to vector<8x256xf32>
    %599 = arith.mulf %597, %598 : vector<8x256xf32>
    %600 = arith.addf %594, %599 : vector<8x256xf32>
    %601 = vector.extract_strided_slice %270 {offsets = [0, 54], sizes = [8, 1], strides = [1, 1]} : vector<8x72xf32> to vector<8x1xf32>
    %602 = vector.extract_strided_slice %564 {offsets = [6, 0], sizes = [1, 256], strides = [1, 1]} : vector<8x256xf32> to vector<1x256xf32>
    %603 = vector.broadcast %601 : vector<8x1xf32> to vector<8x256xf32>
    %604 = vector.broadcast %602 : vector<1x256xf32> to vector<8x256xf32>
    %605 = arith.mulf %603, %604 : vector<8x256xf32>
    %606 = arith.addf %600, %605 : vector<8x256xf32>
    %607 = vector.extract_strided_slice %270 {offsets = [0, 55], sizes = [8, 1], strides = [1, 1]} : vector<8x72xf32> to vector<8x1xf32>
    %608 = vector.extract_strided_slice %564 {offsets = [7, 0], sizes = [1, 256], strides = [1, 1]} : vector<8x256xf32> to vector<1x256xf32>
    %609 = vector.broadcast %607 : vector<8x1xf32> to vector<8x256xf32>
    %610 = vector.broadcast %608 : vector<1x256xf32> to vector<8x256xf32>
    %611 = arith.mulf %609, %610 : vector<8x256xf32>
    %612 = arith.addf %606, %611 : vector<8x256xf32>
    %c0_59 = arith.constant 0 : index
    %c138 = arith.constant 138 : index
    %613 = vector.load %arg15[%c0_59, %c138] : memref<8x512xf32, #tpu.memory_space<vmem>>, vector<8x256xf32>
    %614 = vector.extract_strided_slice %270 {offsets = [0, 56], sizes = [8, 1], strides = [1, 1]} : vector<8x72xf32> to vector<8x1xf32>
    %615 = vector.extract_strided_slice %613 {offsets = [0, 0], sizes = [1, 256], strides = [1, 1]} : vector<8x256xf32> to vector<1x256xf32>
    %616 = vector.broadcast %614 : vector<8x1xf32> to vector<8x256xf32>
    %617 = vector.broadcast %615 : vector<1x256xf32> to vector<8x256xf32>
    %618 = arith.mulf %616, %617 : vector<8x256xf32>
    %619 = arith.addf %612, %618 : vector<8x256xf32>
    %620 = vector.extract_strided_slice %270 {offsets = [0, 57], sizes = [8, 1], strides = [1, 1]} : vector<8x72xf32> to vector<8x1xf32>
    %621 = vector.extract_strided_slice %613 {offsets = [1, 0], sizes = [1, 256], strides = [1, 1]} : vector<8x256xf32> to vector<1x256xf32>
    %622 = vector.broadcast %620 : vector<8x1xf32> to vector<8x256xf32>
    %623 = vector.broadcast %621 : vector<1x256xf32> to vector<8x256xf32>
    %624 = arith.mulf %622, %623 : vector<8x256xf32>
    %625 = arith.addf %619, %624 : vector<8x256xf32>
    %626 = vector.extract_strided_slice %270 {offsets = [0, 58], sizes = [8, 1], strides = [1, 1]} : vector<8x72xf32> to vector<8x1xf32>
    %627 = vector.extract_strided_slice %613 {offsets = [2, 0], sizes = [1, 256], strides = [1, 1]} : vector<8x256xf32> to vector<1x256xf32>
    %628 = vector.broadcast %626 : vector<8x1xf32> to vector<8x256xf32>
    %629 = vector.broadcast %627 : vector<1x256xf32> to vector<8x256xf32>
    %630 = arith.mulf %628, %629 : vector<8x256xf32>
    %631 = arith.addf %625, %630 : vector<8x256xf32>
    %632 = vector.extract_strided_slice %270 {offsets = [0, 59], sizes = [8, 1], strides = [1, 1]} : vector<8x72xf32> to vector<8x1xf32>
    %633 = vector.extract_strided_slice %613 {offsets = [3, 0], sizes = [1, 256], strides = [1, 1]} : vector<8x256xf32> to vector<1x256xf32>
    %634 = vector.broadcast %632 : vector<8x1xf32> to vector<8x256xf32>
    %635 = vector.broadcast %633 : vector<1x256xf32> to vector<8x256xf32>
    %636 = arith.mulf %634, %635 : vector<8x256xf32>
    %637 = arith.addf %631, %636 : vector<8x256xf32>
    %638 = vector.extract_strided_slice %270 {offsets = [0, 60], sizes = [8, 1], strides = [1, 1]} : vector<8x72xf32> to vector<8x1xf32>
    %639 = vector.extract_strided_slice %613 {offsets = [4, 0], sizes = [1, 256], strides = [1, 1]} : vector<8x256xf32> to vector<1x256xf32>
    %640 = vector.broadcast %638 : vector<8x1xf32> to vector<8x256xf32>
    %641 = vector.broadcast %639 : vector<1x256xf32> to vector<8x256xf32>
    %642 = arith.mulf %640, %641 : vector<8x256xf32>
    %643 = arith.addf %637, %642 : vector<8x256xf32>
    %644 = vector.extract_strided_slice %270 {offsets = [0, 61], sizes = [8, 1], strides = [1, 1]} : vector<8x72xf32> to vector<8x1xf32>
    %645 = vector.extract_strided_slice %613 {offsets = [5, 0], sizes = [1, 256], strides = [1, 1]} : vector<8x256xf32> to vector<1x256xf32>
    %646 = vector.broadcast %644 : vector<8x1xf32> to vector<8x256xf32>
    %647 = vector.broadcast %645 : vector<1x256xf32> to vector<8x256xf32>
    %648 = arith.mulf %646, %647 : vector<8x256xf32>
    %649 = arith.addf %643, %648 : vector<8x256xf32>
    %650 = vector.extract_strided_slice %270 {offsets = [0, 62], sizes = [8, 1], strides = [1, 1]} : vector<8x72xf32> to vector<8x1xf32>
    %651 = vector.extract_strided_slice %613 {offsets = [6, 0], sizes = [1, 256], strides = [1, 1]} : vector<8x256xf32> to vector<1x256xf32>
    %652 = vector.broadcast %650 : vector<8x1xf32> to vector<8x256xf32>
    %653 = vector.broadcast %651 : vector<1x256xf32> to vector<8x256xf32>
    %654 = arith.mulf %652, %653 : vector<8x256xf32>
    %655 = arith.addf %649, %654 : vector<8x256xf32>
    %656 = vector.extract_strided_slice %270 {offsets = [0, 63], sizes = [8, 1], strides = [1, 1]} : vector<8x72xf32> to vector<8x1xf32>
    %657 = vector.extract_strided_slice %613 {offsets = [7, 0], sizes = [1, 256], strides = [1, 1]} : vector<8x256xf32> to vector<1x256xf32>
    %658 = vector.broadcast %656 : vector<8x1xf32> to vector<8x256xf32>
    %659 = vector.broadcast %657 : vector<1x256xf32> to vector<8x256xf32>
    %660 = arith.mulf %658, %659 : vector<8x256xf32>
    %661 = arith.addf %655, %660 : vector<8x256xf32>
    %c0_60 = arith.constant 0 : index
    %c139 = arith.constant 139 : index
    %662 = vector.load %arg15[%c0_60, %c139] : memref<8x512xf32, #tpu.memory_space<vmem>>, vector<8x256xf32>
    %663 = vector.extract_strided_slice %270 {offsets = [0, 64], sizes = [8, 1], strides = [1, 1]} : vector<8x72xf32> to vector<8x1xf32>
    %664 = vector.extract_strided_slice %662 {offsets = [0, 0], sizes = [1, 256], strides = [1, 1]} : vector<8x256xf32> to vector<1x256xf32>
    %665 = vector.broadcast %663 : vector<8x1xf32> to vector<8x256xf32>
    %666 = vector.broadcast %664 : vector<1x256xf32> to vector<8x256xf32>
    %667 = arith.mulf %665, %666 : vector<8x256xf32>
    %668 = arith.addf %661, %667 : vector<8x256xf32>
    %669 = vector.extract_strided_slice %270 {offsets = [0, 65], sizes = [8, 1], strides = [1, 1]} : vector<8x72xf32> to vector<8x1xf32>
    %670 = vector.extract_strided_slice %662 {offsets = [1, 0], sizes = [1, 256], strides = [1, 1]} : vector<8x256xf32> to vector<1x256xf32>
    %671 = vector.broadcast %669 : vector<8x1xf32> to vector<8x256xf32>
    %672 = vector.broadcast %670 : vector<1x256xf32> to vector<8x256xf32>
    %673 = arith.mulf %671, %672 : vector<8x256xf32>
    %674 = arith.addf %668, %673 : vector<8x256xf32>
    %675 = vector.extract_strided_slice %270 {offsets = [0, 66], sizes = [8, 1], strides = [1, 1]} : vector<8x72xf32> to vector<8x1xf32>
    %676 = vector.extract_strided_slice %662 {offsets = [2, 0], sizes = [1, 256], strides = [1, 1]} : vector<8x256xf32> to vector<1x256xf32>
    %677 = vector.broadcast %675 : vector<8x1xf32> to vector<8x256xf32>
    %678 = vector.broadcast %676 : vector<1x256xf32> to vector<8x256xf32>
    %679 = arith.mulf %677, %678 : vector<8x256xf32>
    %680 = arith.addf %674, %679 : vector<8x256xf32>
    %681 = vector.extract_strided_slice %270 {offsets = [0, 67], sizes = [8, 1], strides = [1, 1]} : vector<8x72xf32> to vector<8x1xf32>
    %682 = vector.extract_strided_slice %662 {offsets = [3, 0], sizes = [1, 256], strides = [1, 1]} : vector<8x256xf32> to vector<1x256xf32>
    %683 = vector.broadcast %681 : vector<8x1xf32> to vector<8x256xf32>
    %684 = vector.broadcast %682 : vector<1x256xf32> to vector<8x256xf32>
    %685 = arith.mulf %683, %684 : vector<8x256xf32>
    %686 = arith.addf %680, %685 : vector<8x256xf32>
    %687 = vector.extract_strided_slice %270 {offsets = [0, 68], sizes = [8, 1], strides = [1, 1]} : vector<8x72xf32> to vector<8x1xf32>
    %688 = vector.extract_strided_slice %662 {offsets = [4, 0], sizes = [1, 256], strides = [1, 1]} : vector<8x256xf32> to vector<1x256xf32>
    %689 = vector.broadcast %687 : vector<8x1xf32> to vector<8x256xf32>
    %690 = vector.broadcast %688 : vector<1x256xf32> to vector<8x256xf32>
    %691 = arith.mulf %689, %690 : vector<8x256xf32>
    %692 = arith.addf %686, %691 : vector<8x256xf32>
    %693 = vector.extract_strided_slice %270 {offsets = [0, 69], sizes = [8, 1], strides = [1, 1]} : vector<8x72xf32> to vector<8x1xf32>
    %694 = vector.extract_strided_slice %662 {offsets = [5, 0], sizes = [1, 256], strides = [1, 1]} : vector<8x256xf32> to vector<1x256xf32>
    %695 = vector.broadcast %693 : vector<8x1xf32> to vector<8x256xf32>
    %696 = vector.broadcast %694 : vector<1x256xf32> to vector<8x256xf32>
    %697 = arith.mulf %695, %696 : vector<8x256xf32>
    %698 = arith.addf %692, %697 : vector<8x256xf32>
    %699 = vector.extract_strided_slice %270 {offsets = [0, 70], sizes = [8, 1], strides = [1, 1]} : vector<8x72xf32> to vector<8x1xf32>
    %700 = vector.extract_strided_slice %662 {offsets = [6, 0], sizes = [1, 256], strides = [1, 1]} : vector<8x256xf32> to vector<1x256xf32>
    %701 = vector.broadcast %699 : vector<8x1xf32> to vector<8x256xf32>
    %702 = vector.broadcast %700 : vector<1x256xf32> to vector<8x256xf32>
    %703 = arith.mulf %701, %702 : vector<8x256xf32>
    %704 = arith.addf %698, %703 : vector<8x256xf32>
    %705 = vector.extract_strided_slice %270 {offsets = [0, 71], sizes = [8, 1], strides = [1, 1]} : vector<8x72xf32> to vector<8x1xf32>
    %706 = vector.extract_strided_slice %662 {offsets = [7, 0], sizes = [1, 256], strides = [1, 1]} : vector<8x256xf32> to vector<1x256xf32>
    %707 = vector.broadcast %705 : vector<8x1xf32> to vector<8x256xf32>
    %708 = vector.broadcast %706 : vector<1x256xf32> to vector<8x256xf32>
    %709 = arith.mulf %707, %708 : vector<8x256xf32>
    %710 = arith.addf %704, %709 : vector<8x256xf32>
    %c0_61 = arith.constant 0 : index
    %c0_62 = arith.constant 0 : index
    %711 = vector.load %arg9[%c0_61, %c0_62] : memref<8x1xf32, #tpu.memory_space<vmem>>, vector<8x1xf32>
    %712 = vector.broadcast %711 : vector<8x1xf32> to vector<8x256xf32>
    %713 = arith.addf %710, %712 : vector<8x256xf32>
    %c0_63 = arith.constant 0 : index
    %c0_64 = arith.constant 0 : index
    %714 = vector.load %arg10[%c0_63, %c0_64] : memref<8x1xf32, #tpu.memory_space<vmem>>, vector<8x1xf32>
    %715 = arith.mulf %713, %713 : vector<8x256xf32>
    %cst_65 = arith.constant dense<0.000000e+00> : vector<256xf32>
    %716 = vector.multi_reduction <add>, %715, %cst_65 [0] : vector<8x256xf32> to vector<256xf32>
    %717 = vector.shape_cast %716 : vector<256xf32> to vector<1x256xf32>
    %cst_66 = arith.constant 1.000000e-24 : f32
    %718 = vector.broadcast %cst_66 : f32 to vector<1x256xf32>
    %719 = arith.maximumf %717, %718 : vector<1x256xf32>
    %720 = math.rsqrt %719 : vector<1x256xf32>
    %721 = vector.broadcast %720 : vector<1x256xf32> to vector<8x256xf32>
    %722 = arith.mulf %713, %721 : vector<8x256xf32>
    %723 = vector.broadcast %714 : vector<8x1xf32> to vector<8x256xf32>
    %724 = arith.mulf %722, %723 : vector<8x256xf32>
    %725 = arith.negf %724 : vector<8x256xf32>
    %726 = math.exp %725 : vector<8x256xf32>
    %cst_67 = arith.constant 1.000000e+00 : f32
    %727 = vector.broadcast %cst_67 : f32 to vector<8x256xf32>
    %728 = arith.addf %727, %726 : vector<8x256xf32>
    %729 = arith.divf %727, %728 : vector<8x256xf32>
    %730 = arith.mulf %724, %729 : vector<8x256xf32>
    %c0_68 = arith.constant 0 : index
    %c0_69 = arith.constant 0 : index
    %c0_70 = arith.constant 0 : index
    %c11_71 = arith.constant 11 : index
    %731 = vector.load %arg2[%c0_68, %c0_69, %c0_70, %c11_71] : memref<1x1x4x384xf32, #tpu.memory_space<vmem>>, vector<1x1x4x256xf32>
    %732 = vector.shape_cast %731 : vector<1x1x4x256xf32> to vector<4x256xf32>
    %c0_72 = arith.constant 0 : index
    %c0_73 = arith.constant 0 : index
    %733 = vector.load %arg11[%c0_72, %c0_73] : memref<8x4xf32, #tpu.memory_space<vmem>>, vector<8x4xf32>
    %c0_74 = arith.constant 0 : index
    %c0_75 = arith.constant 0 : index
    %734 = vector.load %arg12[%c0_74, %c0_75] : memref<8x1xf32, #tpu.memory_space<vmem>>, vector<8x1xf32>
    %735 = vector.extract_strided_slice %733 {offsets = [0, 0], sizes = [8, 1], strides = [1, 1]} : vector<8x4xf32> to vector<8x1xf32>
    %736 = vector.extract_strided_slice %732 {offsets = [0, 0], sizes = [1, 256], strides = [1, 1]} : vector<4x256xf32> to vector<1x256xf32>
    %737 = vector.broadcast %735 : vector<8x1xf32> to vector<8x256xf32>
    %738 = vector.broadcast %736 : vector<1x256xf32> to vector<8x256xf32>
    %739 = arith.mulf %737, %738 : vector<8x256xf32>
    %740 = vector.broadcast %734 : vector<8x1xf32> to vector<8x256xf32>
    %741 = arith.addf %740, %739 : vector<8x256xf32>
    %742 = vector.extract_strided_slice %733 {offsets = [0, 1], sizes = [8, 1], strides = [1, 1]} : vector<8x4xf32> to vector<8x1xf32>
    %743 = vector.extract_strided_slice %732 {offsets = [1, 0], sizes = [1, 256], strides = [1, 1]} : vector<4x256xf32> to vector<1x256xf32>
    %744 = vector.broadcast %742 : vector<8x1xf32> to vector<8x256xf32>
    %745 = vector.broadcast %743 : vector<1x256xf32> to vector<8x256xf32>
    %746 = arith.mulf %744, %745 : vector<8x256xf32>
    %747 = arith.addf %741, %746 : vector<8x256xf32>
    %748 = vector.extract_strided_slice %733 {offsets = [0, 2], sizes = [8, 1], strides = [1, 1]} : vector<8x4xf32> to vector<8x1xf32>
    %749 = vector.extract_strided_slice %732 {offsets = [2, 0], sizes = [1, 256], strides = [1, 1]} : vector<4x256xf32> to vector<1x256xf32>
    %750 = vector.broadcast %748 : vector<8x1xf32> to vector<8x256xf32>
    %751 = vector.broadcast %749 : vector<1x256xf32> to vector<8x256xf32>
    %752 = arith.mulf %750, %751 : vector<8x256xf32>
    %753 = arith.addf %747, %752 : vector<8x256xf32>
    %754 = vector.extract_strided_slice %733 {offsets = [0, 3], sizes = [8, 1], strides = [1, 1]} : vector<8x4xf32> to vector<8x1xf32>
    %755 = vector.extract_strided_slice %732 {offsets = [3, 0], sizes = [1, 256], strides = [1, 1]} : vector<4x256xf32> to vector<1x256xf32>
    %756 = vector.broadcast %754 : vector<8x1xf32> to vector<8x256xf32>
    %757 = vector.broadcast %755 : vector<1x256xf32> to vector<8x256xf32>
    %758 = arith.mulf %756, %757 : vector<8x256xf32>
    %759 = arith.addf %753, %758 : vector<8x256xf32>
    %760 = arith.addf %730, %759 : vector<8x256xf32>
    %c0_76 = arith.constant 0 : index
    %c0_77 = arith.constant 0 : index
    %c0_78 = arith.constant 0 : index
    %c0_79 = arith.constant 0 : index
    %761 = vector.load %arg14[%c0_76, %c0_77, %c0_78, %c0_79] : memref<1x1x8x256xf32, #tpu.memory_space<vmem>>, vector<1x1x8x256xf32>
    %762 = vector.shape_cast %761 : vector<1x1x8x256xf32> to vector<8x256xf32>
    %763 = vector.shape_cast %760 : vector<8x256xf32> to vector<1x1x8x256xf32>
    tpu.vector_store %arg14[%c0_76, %c0_77, %c0_78, %c0_79], %763 {strides = array<i32>} : memref<1x1x8x256xf32, #tpu.memory_space<vmem>>, vector<1x1x8x256xf32>,
    return
  }
  func.func @transform_0(%arg0: i32, %arg1: i32) -> (i32, i32, i32, i32) {
    %c0_i32 = arith.constant 0 : i32
    %c0_i32_0 = arith.constant 0 : i32
    %c0_i32_1 = arith.constant 0 : i32
    return %arg0, %arg1, %c0_i32, %c0_i32_0 : i32, i32, i32, i32
  }
  func.func @transform_1(%arg0: i32, %arg1: i32) -> (i32, i32) {
    %c0_i32 = arith.constant 0 : i32
    %c0_i32_0 = arith.constant 0 : i32
    %c0_i32_1 = arith.constant 0 : i32
    return %c0_i32, %c0_i32_0 : i32, i32
  }
  func.func @transform_2(%arg0: i32, %arg1: i32) -> (i32, i32) {
    %c0_i32 = arith.constant 0 : i32
    %c0_i32_0 = arith.constant 0 : i32
    %c0_i32_1 = arith.constant 0 : i32
    return %c0_i32, %c0_i32_0 : i32, i32
  }
  func.func @transform_3(%arg0: i32, %arg1: i32) -> (i32, i32) {
    %c0_i32 = arith.constant 0 : i32
    %c0_i32_0 = arith.constant 0 : i32
    %c0_i32_1 = arith.constant 0 : i32
    return %c0_i32, %c0_i32_0 : i32, i32
  }
  func.func @transform_4(%arg0: i32, %arg1: i32) -> (i32, i32, i32) {
    %c0_i32 = arith.constant 0 : i32
    %c0_i32_0 = arith.constant 0 : i32
    %c0_i32_1 = arith.constant 0 : i32
    return %arg0, %c0_i32, %c0_i32_0 : i32, i32, i32
  }
  func.func @transform_5(%arg0: i32, %arg1: i32) -> (i32, i32, i32) {
    %c0_i32 = arith.constant 0 : i32
    %c0_i32_0 = arith.constant 0 : i32
    %c0_i32_1 = arith.constant 0 : i32
    return %arg0, %c0_i32, %c0_i32_0 : i32, i32, i32
  }
  func.func @transform_6(%arg0: i32, %arg1: i32) -> (i32, i32) {
    %c0_i32 = arith.constant 0 : i32
    %c0_i32_0 = arith.constant 0 : i32
    %c0_i32_1 = arith.constant 0 : i32
    return %c0_i32, %c0_i32_0 : i32, i32
  }
  func.func @transform_7(%arg0: i32, %arg1: i32) -> (i32, i32) {
    %c0_i32 = arith.constant 0 : i32
    %c0_i32_0 = arith.constant 0 : i32
    %c0_i32_1 = arith.constant 0 : i32
    return %c0_i32, %c0_i32_0 : i32, i32
  }
  func.func @transform_8(%arg0: i32, %arg1: i32) -> (i32, i32) {
    %c0_i32 = arith.constant 0 : i32
    %c0_i32_0 = arith.constant 0 : i32
    %c0_i32_1 = arith.constant 0 : i32
    return %c0_i32, %c0_i32_0 : i32, i32
  }
  func.func @transform_9(%arg0: i32, %arg1: i32) -> (i32, i32) {
    %c0_i32 = arith.constant 0 : i32
    %c0_i32_0 = arith.constant 0 : i32
    %c0_i32_1 = arith.constant 0 : i32
    return %c0_i32, %c0_i32_0 : i32, i32
  }
  func.func @transform_10(%arg0: i32, %arg1: i32) -> (i32, i32) {
    %c0_i32 = arith.constant 0 : i32
    %c0_i32_0 = arith.constant 0 : i32
    %c0_i32_1 = arith.constant 0 : i32
    return %c0_i32, %c0_i32_0 : i32, i32
  }
  func.func @transform_11(%arg0: i32, %arg1: i32) -> (i32, i32) {
    %c0_i32 = arith.constant 0 : i32
    %c0_i32_0 = arith.constant 0 : i32
    %c0_i32_1 = arith.constant 0 : i32
    return %c0_i32, %c0_i32_0 : i32, i32
  }
  func.func @transform_12(%arg0: i32, %arg1: i32) -> (i32, i32, i32, i32) {
    %c0_i32 = arith.constant 0 : i32
    %c0_i32_0 = arith.constant 0 : i32
    %c0_i32_1 = arith.constant 0 : i32
    return %arg0, %arg1, %c0_i32, %c0_i32_0 : i32, i32, i32, i32
  }
}

</mosaic_0001>

<llo_original>
// kernel: resnet_block_forward.1
$region0: #{resnet_block_forward.1}
  #allocation0 [shape = 'u32[]', space=smem, size = 0x4, offset = 0x4, fixed_abs, tag = 'smem constant byte address 0x4 - core index']
  #allocation1 [shape = 'u32[144,128]{1,0:T(1,128)}', space=vmem, size = 0x12000, scoped, tag = 'internal scratch']
  #allocation2 [shape = 'f32[8,512]{1,0:T(8,128)}', space=vmem, size = 0x4000, scoped, tag = 'scratch operand']
  %s0 = inlined_call_operand.vmem [shape: f32[2,2,4,384], index: 0, kind: input, shape index: {}]
  %s1 = inlined_call_operand.vmem [shape: f32[8,36], index: 1, kind: input, shape index: {}]
  %s2 = inlined_call_operand.vmem [shape: f32[8,1], index: 2, kind: input, shape index: {}]
  %s3 = inlined_call_operand.vmem [shape: f32[8,1], index: 3, kind: input, shape index: {}]
  %s4 = inlined_call_operand.vmem [shape: f32[2,8,1], index: 4, kind: input, shape index: {}]
  %s5 = inlined_call_operand.vmem [shape: f32[2,8,1], index: 5, kind: input, shape index: {}]
  %s6 = inlined_call_operand.vmem [shape: f32[8,72], index: 6, kind: input, shape index: {}]
  %s7 = inlined_call_operand.vmem [shape: f32[8,1], index: 7, kind: input, shape index: {}]
  %s8 = inlined_call_operand.vmem [shape: f32[8,1], index: 8, kind: input, shape index: {}]
  %s9 = inlined_call_operand.vmem [shape: f32[8,4], index: 9, kind: input, shape index: {}]
  %s10 = inlined_call_operand.vmem [shape: f32[8,1], index: 10, kind: input, shape index: {}]
  %s11 = inlined_call_operand.vmem [shape: f32[1,256], index: 11, kind: input, shape index: {}]
  %s12 = inlined_call_operand.vmem [shape: f32[2,2,8,256], index: 12, kind: output, shape index: {}]
  %s13 = sld [smem:[#allocation0]]
  $region81: #{resnet_block_forward.1} parent=0
    _
  %s15 = ssub.s32 1, %s13
  %s16 = scalar_select 0, %s15, %s13
  loop: start=0, step=1, limit=6
  $region2: #{resnet_block_forward.1} parent=0 // loop_pre_header
    _
  $region3: #{resnet_block_forward.1} parent=0 // loop_header
    %s18 = sphi 0, %s22
    %p19 = scmp.ge.s32.totalorder %s18, 6
    %s25 = sphi 0, %s37
    %s26 = sphi 0, %s33
    %s27 = sphi 0, %s25
    %s28 = sphi 0, %s26
    %s29 = sphi 0, %s27
    %s30 = sphi 0, %s28
    %s42 = sphi 0, %s44
    %s45 = sphi 0, %s42
    %s46 = sphi 0, %s45
    %s62 = sphi 0, %s46
    %s66 = sphi 0, %s66
    %s68 = sphi 0, %s66
    %s69 = sphi 0, %s68
    %s83 = sphi 0, %s69
    %s87 = sphi 0, %s87
    %s89 = sphi 0, %s87
    %s90 = sphi 0, %s89
    %s104 = sphi 0, %s90
    %s108 = sphi 0, %s108
    %s110 = sphi 0, %s108
    %s111 = sphi 0, %s110
    %s125 = sphi 0, %s111
    %s131 = sphi 0, %s133
    %s134 = sphi 0, %s131
    %s135 = sphi 0, %s134
    %s151 = sphi 0, %s135
    %s157 = sphi 0, %s159
    %s160 = sphi 0, %s157
    %s161 = sphi 0, %s160
    %s177 = sphi 0, %s161
    %s181 = sphi 0, %s181
    %s183 = sphi 0, %s181
    %s184 = sphi 0, %s183
    %s198 = sphi 0, %s184
    %s202 = sphi 0, %s202
    %s204 = sphi 0, %s202
    %s205 = sphi 0, %s204
    %s219 = sphi 0, %s205
    %s223 = sphi 0, %s223
    %s225 = sphi 0, %s223
    %s226 = sphi 0, %s225
    %s240 = sphi 0, %s226
    %s244 = sphi 0, %s244
    %s246 = sphi 0, %s244
    %s247 = sphi 0, %s246
    %s261 = sphi 0, %s247
    %s265 = sphi 0, %s265
    %s267 = sphi 0, %s265
    %s268 = sphi 0, %s267
    %s282 = sphi 0, %s268
    %s286 = sphi 0, %s286
    %s288 = sphi 0, %s286
    %s289 = sphi 0, %s288
    %s303 = sphi 0, %s289
    %s311 = sphi 0, %s313
    %s314 = sphi 0, %s311
    %s315 = sphi 0, %s314
    %s331 = sphi 0, %s315
  $region4: #{resnet_block_forward.1} parent=0 // loop_header_branch
    %21 = sbr.rel (%p19) target = $region8
  $region5: #{resnet_block_forward.1} parent=0 // loop_body
    %s23 = ssub.s32 %s18, 1
    %s24 = ssub.s32 %s18, 2
    %s31 = sadd.s32 1, %s26
    %p32 = scmp.ge.s32.totalorder %s31, 2
    %s33 = scalar_select %p32, 0, %s31
    %s34 = sadd.s32 1, %s25
    %s35 = scalar_select %p32, %s34, %s25
    %p36 = scmp.ge.s32.totalorder %s35, 2
    %s37 = scalar_select %p36, 0, %s35
    %s38 = ssub.s32 %s25, %s37
    %s39 = ssub.s32 %s26, %s33
    %s40 = sor.u32 %s38, %s39
    %p41 = scmp.eq.s32.totalorder %s40, 0
    %s43 = sadd.s32 %s42, 1
    %s44 = scalar_select %p41, %s42, %s43
    %p47 = pneg %p41
    %p48 = scmp.eq.s32.totalorder %s18, 3
    %p49 = por %p47, %p48
    %p50 = scmp.ne.s32.totalorder %s42, %s45
    %p51 = scmp.eq.s32.totalorder %s18, 0
    %p52 = por %p50, %p51
    %p53 = scmp.ne.s32.totalorder %s42, %s45
    %p54 = scmp.eq.s32.totalorder %s23, 3
    %p55 = por %p53, %p54
    %p56 = scmp.ne.s32.totalorder %s45, %s46
    %p57 = scmp.eq.s32.totalorder %s23, 0
    %p58 = por %p56, %p57
    %p59 = scmp.ne.s32.totalorder %s45, %s46
    %p60 = scmp.eq.s32.totalorder %s24, 3
    %p61 = por %p59, %p60
    %p63 = scmp.ne.s32.totalorder %s46, %s62
    %p64 = scmp.eq.s32.totalorder %s24, 0
    %p65 = por %p63, %p64
    %s67 = sadd.s32 %s66, 1
    %p70 = scmp.eq.s32.totalorder %s18, 3
    %p71 = scmp.ne.s32.totalorder %s66, %s68
    %p72 = scmp.eq.s32.totalorder %s18, 0
    %p73 = por %p71, %p72
    %p74 = scmp.ne.s32.totalorder %s66, %s68
    %p75 = scmp.eq.s32.totalorder %s23, 3
    %p76 = por %p74, %p75
    %p77 = scmp.ne.s32.totalorder %s68, %s69
    %p78 = scmp.eq.s32.totalorder %s23, 0
    %p79 = por %p77, %p78
    %p80 = scmp.ne.s32.totalorder %s68, %s69
    %p81 = scmp.eq.s32.totalorder %s24, 3
    %p82 = por %p80, %p81
    %p84 = scmp.ne.s32.totalorder %s69, %s83
    %p85 = scmp.eq.s32.totalorder %s24, 0
    %p86 = por %p84, %p85
    %s88 = sadd.s32 %s87, 1
    %p91 = scmp.eq.s32.totalorder %s18, 3
    %p92 = scmp.ne.s32.totalorder %s87, %s89
    %p93 = scmp.eq.s32.totalorder %s18, 0
    %p94 = por %p92, %p93
    %p95 = scmp.ne.s32.totalorder %s87, %s89
    %p96 = scmp.eq.s32.totalorder %s23, 3
    %p97 = por %p95, %p96
    %p98 = scmp.ne.s32.totalorder %s89, %s90
    %p99 = scmp.eq.s32.totalorder %s23, 0
    %p100 = por %p98, %p99
    %p101 = scmp.ne.s32.totalorder %s89, %s90
    %p102 = scmp.eq.s32.totalorder %s24, 3
    %p103 = por %p101, %p102
    %p105 = scmp.ne.s32.totalorder %s90, %s104
    %p106 = scmp.eq.s32.totalorder %s24, 0
    %p107 = por %p105, %p106
    %s109 = sadd.s32 %s108, 1
    %p112 = scmp.eq.s32.totalorder %s18, 3
    %p113 = scmp.ne.s32.totalorder %s108, %s110
    %p114 = scmp.eq.s32.totalorder %s18, 0
    %p115 = por %p113, %p114
    %p116 = scmp.ne.s32.totalorder %s108, %s110
    %p117 = scmp.eq.s32.totalorder %s23, 3
    %p118 = por %p116, %p117
    %p119 = scmp.ne.s32.totalorder %s110, %s111
    %p120 = scmp.eq.s32.totalorder %s23, 0
    %p121 = por %p119, %p120
    %p122 = scmp.ne.s32.totalorder %s110, %s111
    %p123 = scmp.eq.s32.totalorder %s24, 3
    %p124 = por %p122, %p123
    %p126 = scmp.ne.s32.totalorder %s111, %s125
    %p127 = scmp.eq.s32.totalorder %s24, 0
    %p128 = por %p126, %p127
    %s129 = ssub.s32 %s25, %s37
    %p130 = scmp.eq.s32.totalorder %s129, 0
    %s132 = sadd.s32 %s131, 1
    %s133 = scalar_select %p130, %s131, %s132
    %p136 = pneg %p130
    %p137 = scmp.eq.s32.totalorder %s18, 3
    %p138 = por %p136, %p137
    %p139 = scmp.ne.s32.totalorder %s131, %s134
    %p140 = scmp.eq.s32.totalorder %s18, 0
    %p141 = por %p139, %p140
    %p142 = scmp.ne.s32.totalorder %s131, %s134
    %p143 = scmp.eq.s32.totalorder %s23, 3
    %p144 = por %p142, %p143
    %p145 = scmp.ne.s32.totalorder %s134, %s135
    %p146 = scmp.eq.s32.totalorder %s23, 0
    %p147 = por %p145, %p146
    %p148 = scmp.ne.s32.totalorder %s134, %s135
    %p149 = scmp.eq.s32.totalorder %s24, 3
    %p150 = por %p148, %p149
    %p152 = scmp.ne.s32.totalorder %s135, %s151
    %p153 = scmp.eq.s32.totalorder %s24, 0
    %p154 = por %p152, %p153
    %s155 = ssub.s32 %s25, %s37
    %p156 = scmp.eq.s32.totalorder %s155, 0
    %s158 = sadd.s32 %s157, 1
    %s159 = scalar_select %p156, %s157, %s158
    %p162 = pneg %p156
    %p163 = scmp.eq.s32.totalorder %s18, 3
    %p164 = por %p162, %p163
    %p165 = scmp.ne.s32.totalorder %s157, %s160
    %p166 = scmp.eq.s32.totalorder %s18, 0
    %p167 = por %p165, %p166
    %p168 = scmp.ne.s32.totalorder %s157, %s160
    %p169 = scmp.eq.s32.totalorder %s23, 3
    %p170 = por %p168, %p169
    %p171 = scmp.ne.s32.totalorder %s160, %s161
    %p172 = scmp.eq.s32.totalorder %s23, 0
    %p173 = por %p171, %p172
    %p174 = scmp.ne.s32.totalorder %s160, %s161
    %p175 = scmp.eq.s32.totalorder %s24, 3
    %p176 = por %p174, %p175
    %p178 = scmp.ne.s32.totalorder %s161, %s177
    %p179 = scmp.eq.s32.totalorder %s24, 0
    %p180 = por %p178, %p179
    %s182 = sadd.s32 %s181, 1
    %p185 = scmp.eq.s32.totalorder %s18, 3
    %p186 = scmp.ne.s32.totalorder %s181, %s183
    %p187 = scmp.eq.s32.totalorder %s18, 0
    %p188 = por %p186, %p187
    %p189 = scmp.ne.s32.totalorder %s181, %s183
    %p190 = scmp.eq.s32.totalorder %s23, 3
    %p191 = por %p189, %p190
    %p192 = scmp.ne.s32.totalorder %s183, %s184
    %p193 = scmp.eq.s32.totalorder %s23, 0
    %p194 = por %p192, %p193
    %p195 = scmp.ne.s32.totalorder %s183, %s184
    %p196 = scmp.eq.s32.totalorder %s24, 3
    %p197 = por %p195, %p196
    %p199 = scmp.ne.s32.totalorder %s184, %s198
    %p200 = scmp.eq.s32.totalorder %s24, 0
    %p201 = por %p199, %p200
    %s203 = sadd.s32 %s202, 1
    %p206 = scmp.eq.s32.totalorder %s18, 3
    %p207 = scmp.ne.s32.totalorder %s202, %s204
    %p208 = scmp.eq.s32.totalorder %s18, 0
    %p209 = por %p207, %p208
    %p210 = scmp.ne.s32.totalorder %s202, %s204
    %p211 = scmp.eq.s32.totalorder %s23, 3
    %p212 = por %p210, %p211
    %p213 = scmp.ne.s32.totalorder %s204, %s205
    %p214 = scmp.eq.s32.totalorder %s23, 0
    %p215 = por %p213, %p214
    %p216 = scmp.ne.s32.totalorder %s204, %s205
    %p217 = scmp.eq.s32.totalorder %s24, 3
    %p218 = por %p216, %p217
    %p220 = scmp.ne.s32.totalorder %s205, %s219
    %p221 = scmp.eq.s32.totalorder %s24, 0
    %p222 = por %p220, %p221
    %s224 = sadd.s32 %s223, 1
    %p227 = scmp.eq.s32.totalorder %s18, 3
    %p228 = scmp.ne.s32.totalorder %s223, %s225
    %p229 = scmp.eq.s32.totalorder %s18, 0
    %p230 = por %p228, %p229
    %p231 = scmp.ne.s32.totalorder %s223, %s225
    %p232 = scmp.eq.s32.totalorder %s23, 3
    %p233 = por %p231, %p232
    %p234 = scmp.ne.s32.totalorder %s225, %s226
    %p235 = scmp.eq.s32.totalorder %s23, 0
    %p236 = por %p234, %p235
    %p237 = scmp.ne.s32.totalorder %s225, %s226
    %p238 = scmp.eq.s32.totalorder %s24, 3
    %p239 = por %p237, %p238
    %p241 = scmp.ne.s32.totalorder %s226, %s240
    %p242 = scmp.eq.s32.totalorder %s24, 0
    %p243 = por %p241, %p242
    %s245 = sadd.s32 %s244, 1
    %p248 = scmp.eq.s32.totalorder %s18, 3
    %p249 = scmp.ne.s32.totalorder %s244, %s246
    %p250 = scmp.eq.s32.totalorder %s18, 0
    %p251 = por %p249, %p250
    %p252 = scmp.ne.s32.totalorder %s244, %s246
    %p253 = scmp.eq.s32.totalorder %s23, 3
    %p254 = por %p252, %p253
    %p255 = scmp.ne.s32.totalorder %s246, %s247
    %p256 = scmp.eq.s32.totalorder %s23, 0
    %p257 = por %p255, %p256
    %p258 = scmp.ne.s32.totalorder %s246, %s247
    %p259 = scmp.eq.s32.totalorder %s24, 3
    %p260 = por %p258, %p259
    %p262 = scmp.ne.s32.totalorder %s247, %s261
    %p263 = scmp.eq.s32.totalorder %s24, 0
    %p264 = por %p262, %p263
    %s266 = sadd.s32 %s265, 1
    %p269 = scmp.eq.s32.totalorder %s18, 3
    %p270 = scmp.ne.s32.totalorder %s265, %s267
    %p271 = scmp.eq.s32.totalorder %s18, 0
    %p272 = por %p270, %p271
    %p273 = scmp.ne.s32.totalorder %s265, %s267
    %p274 = scmp.eq.s32.totalorder %s23, 3
    %p275 = por %p273, %p274
    %p276 = scmp.ne.s32.totalorder %s267, %s268
    %p277 = scmp.eq.s32.totalorder %s23, 0
    %p278 = por %p276, %p277
    %p279 = scmp.ne.s32.totalorder %s267, %s268
    %p280 = scmp.eq.s32.totalorder %s24, 3
    %p281 = por %p279, %p280
    %p283 = scmp.ne.s32.totalorder %s268, %s282
    %p284 = scmp.eq.s32.totalorder %s24, 0
    %p285 = por %p283, %p284
    %s287 = sadd.s32 %s286, 1
    %p290 = scmp.eq.s32.totalorder %s18, 3
    %p291 = scmp.ne.s32.totalorder %s286, %s288
    %p292 = scmp.eq.s32.totalorder %s18, 0
    %p293 = por %p291, %p292
    %p294 = scmp.ne.s32.totalorder %s286, %s288
    %p295 = scmp.eq.s32.totalorder %s23, 3
    %p296 = por %p294, %p295
    %p297 = scmp.ne.s32.totalorder %s288, %s289
    %p298 = scmp.eq.s32.totalorder %s23, 0
    %p299 = por %p297, %p298
    %p300 = scmp.ne.s32.totalorder %s288, %s289
    %p301 = scmp.eq.s32.totalorder %s24, 3
    %p302 = por %p300, %p301
    %p304 = scmp.ne.s32.totalorder %s289, %s303
    %p305 = scmp.eq.s32.totalorder %s24, 0
    %p306 = por %p304, %p305
    %s307 = ssub.s32 %s25, %s37
    %s308 = ssub.s32 %s26, %s33
    %s309 = sor.u32 %s307, %s308
    %p310 = scmp.eq.s32.totalorder %s309, 0
    %s312 = sadd.s32 %s311, 1
    %s313 = scalar_select %p310, %s311, %s312
    %p316 = pneg %p310
    %p317 = scmp.eq.s32.totalorder %s18, 3
    %p318 = por %p316, %p317
    %p319 = scmp.ne.s32.totalorder %s311, %s314
    %p320 = scmp.eq.s32.totalorder %s18, 0
    %p321 = por %p319, %p320
    %p322 = scmp.ne.s32.totalorder %s311, %s314
    %p323 = scmp.eq.s32.totalorder %s23, 3
    %p324 = por %p322, %p323
    %p325 = scmp.ne.s32.totalorder %s314, %s315
    %p326 = scmp.eq.s32.totalorder %s23, 0
    %p327 = por %p325, %p326
    %p328 = scmp.ne.s32.totalorder %s314, %s315
    %p329 = scmp.eq.s32.totalorder %s24, 3
    %p330 = por %p328, %p329
    %p332 = scmp.ne.s32.totalorder %s315, %s331
    %p333 = scmp.eq.s32.totalorder %s24, 0
    %p334 = por %p332, %p333
    %p335 = scmp.le.s32.totalorder 1, %s18
    %p336 = scmp.lt.s32.totalorder %s18, 5
    %p337 = pnand %p335, %p336
    %p338 = pneg %p337
    // Predicated region
    $region9: #{resnet_block_forward.1} parent=5 // pred_check
      _
    $region10: #{resnet_block_forward.1} parent=5 // pred_check_branch
      %340 = sbr.rel (%p337) target = $region12
    $region11: #{resnet_block_forward.1} parent=5 // pred_region
      %s341 = ssub.s32 %s18, 1
      // Predicated region
      $region13: #{resnet_block_forward.1} parent=11 // pred_check
        %p342 = pneg %p79
      $region14: #{resnet_block_forward.1} parent=11 // pred_check_branch
        %344 = sbr.rel (%p342) target = $region16
      $region15: #{resnet_block_forward.1} parent=11 // pred_region
        _
      $region16: #{resnet_block_forward.1} parent=11 // pred_fallthru
        _
      // Predicated region
      $region17: #{resnet_block_forward.1} parent=11 // pred_check
        %p345 = pneg %p100
      $region18: #{resnet_block_forward.1} parent=11 // pred_check_branch
        %347 = sbr.rel (%p345) target = $region20
      $region19: #{resnet_block_forward.1} parent=11 // pred_region
        _
      $region20: #{resnet_block_forward.1} parent=11 // pred_fallthru
        _
      // Predicated region
      $region21: #{resnet_block_forward.1} parent=11 // pred_check
        %p348 = pneg %p121
      $region22: #{resnet_block_forward.1} parent=11 // pred_check_branch
        %350 = sbr.rel (%p348) target = $region24
      $region23: #{resnet_block_forward.1} parent=11 // pred_region
        _
      $region24: #{resnet_block_forward.1} parent=11 // pred_fallthru
        _
      // Predicated region
      $region25: #{resnet_block_forward.1} parent=11 // pred_check
        %p351 = pneg %p194
      $region26: #{resnet_block_forward.1} parent=11 // pred_check_branch
        %353 = sbr.rel (%p351) target = $region28
      $region27: #{resnet_block_forward.1} parent=11 // pred_region
        _
      $region28: #{resnet_block_forward.1} parent=11 // pred_fallthru
        _
      // Predicated region
      $region29: #{resnet_block_forward.1} parent=11 // pred_check
        %p354 = pneg %p215
      $region30: #{resnet_block_forward.1} parent=11 // pred_check_branch
        %356 = sbr.rel (%p354) target = $region32
      $region31: #{resnet_block_forward.1} parent=11 // pred_region
        _
      $region32: #{resnet_block_forward.1} parent=11 // pred_fallthru
        _
      // Predicated region
      $region33: #{resnet_block_forward.1} parent=11 // pred_check
        %p357 = pneg %p236
      $region34: #{resnet_block_forward.1} parent=11 // pred_check_branch
        %359 = sbr.rel (%p357) target = $region36
      $region35: #{resnet_block_forward.1} parent=11 // pred_region
        _
      $region36: #{resnet_block_forward.1} parent=11 // pred_fallthru
        _
      // Predicated region
      $region37: #{resnet_block_forward.1} parent=11 // pred_check
        %p360 = pneg %p257
      $region38: #{resnet_block_forward.1} parent=11 // pred_check_branch
        %362 = sbr.rel (%p360) target = $region40
      $region39: #{resnet_block_forward.1} parent=11 // pred_region
        _
      $region40: #{resnet_block_forward.1} parent=11 // pred_fallthru
        _
      // Predicated region
      $region41: #{resnet_block_forward.1} parent=11 // pred_check
        %p363 = pneg %p278
      $region42: #{resnet_block_forward.1} parent=11 // pred_check_branch
        %365 = sbr.rel (%p363) target = $region44
      $region43: #{resnet_block_forward.1} parent=11 // pred_region
        _
      $region44: #{resnet_block_forward.1} parent=11 // pred_fallthru
        _
      // Predicated region
      $region45: #{resnet_block_forward.1} parent=11 // pred_check
        %p366 = pneg %p299
      $region46: #{resnet_block_forward.1} parent=11 // pred_check_branch
        %368 = sbr.rel (%p366) target = $region48
      $region47: #{resnet_block_forward.1} parent=11 // pred_region
        _
      $region48: #{resnet_block_forward.1} parent=11 // pred_fallthru
        _
    $region12: #{resnet_block_forward.1} parent=5 // pred_fallthru
      _
    %p369 = scmp.lt.s32.totalorder %s18, 4
    // Predicated region
    $region49: #{resnet_block_forward.1} parent=5 // pred_check
      %p370 = pneg %p369
    $region50: #{resnet_block_forward.1} parent=5 // pred_check_branch
      %372 = sbr.rel (%p370) target = $region52
    $region51: #{resnet_block_forward.1} parent=5 // pred_region
      // Predicated region
      $region53: #{resnet_block_forward.1} parent=51 // pred_check
        %p373 = pneg %p52
      $region54: #{resnet_block_forward.1} parent=51 // pred_check_branch
        %375 = sbr.rel (%p373) target = $region56
      $region55: #{resnet_block_forward.1} parent=51 // pred_region
        %p376 = scmp.lt.s32.totalorder %s25, 1
        %s377 = scalar_select %p376, %s25, 1
        %p378 = scmp.lt.s32.totalorder %s26, 1
        %s379 = scalar_select %p378, %s26, 1
        %s380 = smul.addr %s379, 3
        %s381 = smul.addr %s377, 6
        %s382 = sadd.s32 %s380, %s381
        %s383 = smul.addr %s382, 4
        %s384 = scalar_lea.vmem %s0, %s383
      $region56: #{resnet_block_forward.1} parent=51 // pred_fallthru
        _
      // Predicated region
      $region57: #{resnet_block_forward.1} parent=51 // pred_check
        %p385 = pneg %p141
      $region58: #{resnet_block_forward.1} parent=51 // pred_check_branch
        %387 = sbr.rel (%p385) target = $region60
      $region59: #{resnet_block_forward.1} parent=51 // pred_region
        %p388 = scmp.lt.s32.totalorder %s25, 1
        %s389 = scalar_select %p388, %s25, 1
        %s390 = smul.addr %s389, 8
        %s391 = scalar_lea.vmem %s4, %s390
      $region60: #{resnet_block_forward.1} parent=51 // pred_fallthru
        _
      // Predicated region
      $region61: #{resnet_block_forward.1} parent=51 // pred_check
        %p392 = pneg %p167
      $region62: #{resnet_block_forward.1} parent=51 // pred_check_branch
        %394 = sbr.rel (%p392) target = $region64
      $region63: #{resnet_block_forward.1} parent=51 // pred_region
        %p395 = scmp.lt.s32.totalorder %s25, 1
        %s396 = scalar_select %p395, %s25, 1
        %s397 = smul.addr %s396, 8
        %s398 = scalar_lea.vmem %s5, %s397
      $region64: #{resnet_block_forward.1} parent=51 // pred_fallthru
        _
    $region52: #{resnet_block_forward.1} parent=5 // pred_fallthru
      _
    %p399 = scmp.le.s32.totalorder 1, %s18
    %p400 = scmp.lt.s32.totalorder %s18, 5
    %p401 = pnand %p399, %p400
    %p402 = pneg %p401
    // Predicated region
    $region65: #{resnet_block_forward.1} parent=5 // pred_check
      _
    $region66: #{resnet_block_forward.1} parent=5 // pred_check_branch
      %404 = sbr.rel (%p401) target = $region68
    $region67: #{resnet_block_forward.1} parent=5 // pred_region
      %s405 = ssub.s32 %s18, 1
      %p406 = scmp.lt.s32.totalorder %s27, 1
      %s407 = scalar_select %p406, %s27, 1
      %p408 = scmp.lt.s32.totalorder %s28, 1
      %s409 = scalar_select %p408, %s28, 1
      %s410 = smul.addr %s409, 3
      %s411 = smul.addr %s407, 6
      %s412 = sadd.s32 %s410, %s411
      %s413 = smul.addr %s412, 4
      %s414 = scalar_lea.vmem %s0, %s413
      %p415 = pneg %p58
      %p416 = pneg %p55
      %p417 = pneg %p79
      %p418 = pneg %p76
      %p419 = pneg %p100
      %p420 = pneg %p97
      %p421 = pneg %p121
      %p422 = pneg %p118
      %p423 = scmp.lt.s32.totalorder %s27, 1
      %s424 = scalar_select %p423, %s27, 1
      %s425 = smul.addr %s424, 8
      %s426 = scalar_lea.vmem %s4, %s425
      %p427 = pneg %p147
      %p428 = pneg %p144
      %p429 = scmp.lt.s32.totalorder %s27, 1
      %s430 = scalar_select %p429, %s27, 1
      %s431 = smul.addr %s430, 8
      %s432 = scalar_lea.vmem %s5, %s431
      %p433 = pneg %p173
      %p434 = pneg %p170
      %p435 = pneg %p194
      %p436 = pneg %p191
      %p437 = pneg %p215
      %p438 = pneg %p212
      %p439 = pneg %p236
      %p440 = pneg %p233
      %p441 = pneg %p257
      %p442 = pneg %p254
      %p443 = pneg %p278
      %p444 = pneg %p275
      %p445 = pneg %p299
      %p446 = pneg %p296
      %p447 = pneg %p327
      %p448 = pneg %p324
      %p449 = scmp.lt.s32.totalorder %s27, 1
      %s450 = scalar_select %p449, %s27, 1
      %p451 = scmp.lt.s32.totalorder %s28, 1
      %s452 = scalar_select %p451, %s28, 1
      %s453 = smul.addr %s452, 2
      %s454 = smul.addr %s450, 4
      %s455 = sadd.s32 %s453, %s454
      %s456 = smul.addr %s455, 8
      %s457 = scalar_lea.vmem %s12, %s456
      %p458 = scmp.lt.s32.totalorder %s27, 1
      %s459 = scalar_select %p458, %s27, 1
      %p460 = scmp.lt.s32.totalorder %s28, 1
      %s461 = scalar_select %p460, %s28, 1
      %s462 = smul.addr %s461, 3
      %s463 = smul.addr %s459, 6
      %s464 = sadd.s32 %s462, %s463
      %s465 = smul.addr %s464, 4
      %s466 = scalar_lea.vmem %s0, %s465
      %p467 = scmp.lt.s32.totalorder %s27, 1
      %s468 = scalar_select %p467, %s27, 1
      %s469 = smul.addr %s468, 8
      %s470 = scalar_lea.vmem %s4, %s469
      %p471 = scmp.lt.s32.totalorder %s27, 1
      %s472 = scalar_select %p471, %s27, 1
      %s473 = smul.addr %s472, 8
      %s474 = scalar_lea.vmem %s5, %s473
      %p475 = scmp.lt.s32.totalorder %s27, 1
      %s476 = scalar_select %p475, %s27, 1
      %p477 = scmp.lt.s32.totalorder %s28, 1
      %s478 = scalar_select %p477, %s28, 1
      %s479 = smul.addr %s478, 2
      %s480 = smul.addr %s476, 4
      %s481 = sadd.s32 %s479, %s480
      %s482 = smul.addr %s481, 8
      %s483 = scalar_lea.vmem %s12, %s482
      %v484 = vld [vmem:[%s11] sm:$0x3]
      %v485 = vld [vmem:[%s1] sm:$0xff]
      %v486 = vld [vmem:[%s466] sm:$0xff]
      %488 = vset.pattern.permute.xlu0 0
      %489 = vperm.xlu0 %488, %v485
      %v490 = vpop.permute.xlu0 %489
      %v493 = vlaneseq
      %v494 = vshrl.u32 %v493, 7
      %v495 = vsub.s32 0, %v494
      %v496 = vrot.slane %v486, %v495
      %v497 = vlaneseq
      %v498 = vshrl.u32 %v497, 7
      %v499 = vsub.s32 4, %v498
      %v500 = vrot.slane %v486, %v499
      %v503 = vlaneseq
      %v504 = vshrl.u32 %v503, 7
      %v505 = vsub.s32 0, %v504
      %v506 = vrot.slane %v496, %v505
      %v507 = vlaneseq
      %v508 = vshrl.u32 %v507, 7
      %v509 = vsub.s32 0, %v508
      %v510 = vrot.slane %v500, %v509
      %v511 = vmul.f32 %v490, %v506
      %v512 = vmul.f32 %v490, %v510
      %513 = vset.pattern.permute.xlu0 1
      %514 = vperm.xlu0 %513, %v485
      %v515 = vpop.permute.xlu0 %514
      %v517 = vlaneseq
      %v518 = vshrl.u32 %v517, 7
      %v519 = vsub.s32 1, %v518
      %v520 = vrot.slane %v486, %v519
      %v521 = vlaneseq
      %v522 = vshrl.u32 %v521, 7
      %v523 = vsub.s32 5, %v522
      %v524 = vrot.slane %v486, %v523
      %v527 = vlaneseq
      %v528 = vshrl.u32 %v527, 7
      %v529 = vsub.s32 1, %v528
      %v530 = vrot.slane %v520, %v529
      %v531 = vlaneseq
      %v532 = vshrl.u32 %v531, 7
      %v533 = vsub.s32 1, %v532
      %v534 = vrot.slane %v524, %v533
      %v535 = vmul.f32 %v515, %v530
      %v536 = vmul.f32 %v515, %v534
      %v537 = vadd.f32 %v511, %v535
      %v538 = vadd.f32 %v512, %v536
      %539 = vset.pattern.permute.xlu0 2
      %540 = vperm.xlu0 %539, %v485
      %v541 = vpop.permute.xlu0 %540
      %v543 = vlaneseq
      %v544 = vshrl.u32 %v543, 7
      %v545 = vsub.s32 2, %v544
      %v546 = vrot.slane %v486, %v545
      %v547 = vlaneseq
      %v548 = vshrl.u32 %v547, 7
      %v549 = vsub.s32 6, %v548
      %v550 = vrot.slane %v486, %v549
      %v553 = vlaneseq
      %v554 = vshrl.u32 %v553, 7
      %v555 = vsub.s32 2, %v554
      %v556 = vrot.slane %v546, %v555
      %v557 = vlaneseq
      %v558 = vshrl.u32 %v557, 7
      %v559 = vsub.s32 2, %v558
      %v560 = vrot.slane %v550, %v559
      %v561 = vmul.f32 %v541, %v556
      %v562 = vmul.f32 %v541, %v560
      %v563 = vadd.f32 %v537, %v561
      %v564 = vadd.f32 %v538, %v562
      %565 = vset.pattern.permute.xlu0 3
      %566 = vperm.xlu0 %565, %v485
      %v567 = vpop.permute.xlu0 %566
      %v569 = vlaneseq
      %v570 = vshrl.u32 %v569, 7
      %v571 = vsub.s32 3, %v570
      %v572 = vrot.slane %v486, %v571
      %v573 = vlaneseq
      %v574 = vshrl.u32 %v573, 7
      %v575 = vsub.s32 7, %v574
      %v576 = vrot.slane %v486, %v575
      %v579 = vlaneseq
      %v580 = vshrl.u32 %v579, 7
      %v581 = vsub.s32 3, %v580
      %v582 = vrot.slane %v572, %v581
      %v583 = vlaneseq
      %v584 = vshrl.u32 %v583, 7
      %v585 = vsub.s32 3, %v584
      %v586 = vrot.slane %v576, %v585
      %v587 = vmul.f32 %v567, %v582
      %v588 = vmul.f32 %v567, %v586
      %v589 = vadd.f32 %v563, %v587
      %v590 = vadd.f32 %v564, %v588
      %v591 = vld [vmem:[%s466] sm:$0xff]
      %v592 = vld [vmem:[%s466 + $0x8] sm:$0xf]
      %593 = vset.pattern.permute.xlu0 4
      %594 = vperm.xlu0 %593, %v485
      %v595 = vpop.permute.xlu0 %594
      %v599 = vlaneseq
      %v600 = vshrl.u32 %v599, 7
      %v601 = vsub.s32 0, %v600
      %v602 = vrot.slane %v591, %v601
      %v603 = vlaneseq
      %v604 = vshrl.u32 %v603, 7
      %v605 = vsub.s32 4, %v604
      %v606 = vrot.slane %v591, %v605
      %v607 = vlaneseq
      %v608 = vshrl.u32 %v607, 7
      %v609 = vsub.s32 0, %v608
      %v610 = vrot.slane %v592, %v609
      %v614 = vlaneseq
      %v615 = vshrl.u32 %v614, 7
      %v616 = vsub.s32 0, %v615
      %v617 = vrot.slane %v602, %v616
      %v618 = vlaneseq
      %v619 = vshrl.u32 %v618, 7
      %v620 = vsub.s32 0, %v619
      %v621 = vrot.slane %v606, %v620
      %v622 = vlaneseq
      %v623 = vshrl.u32 %v622, 7
      %v624 = vsub.s32 0, %v623
      %v625 = vrot.slane %v610, %v624
      %v626 = vmul.f32 %v595, %v617
      %v627 = vmul.f32 %v595, %v621
      %v628 = vmul.f32 %v595, %v625
      %632 = vrot.lane.b32.xlu0 %v626, 127
      %v633 = vpop.permute.xlu0 %632
      %634 = vrot.lane.b32.xlu0 %v627, 127
      %v635 = vpop.permute.xlu0 %634
      %636 = vrot.lane.b32.xlu0 %v628, 127
      %v637 = vpop.permute.xlu0 %636
      %vm638 = vcmask 1039360
      %v639 = vsel %vm638, %v633, %v635
      %v640 = vsel %vm638, %v635, %v637
      %v643 = vadd.f32 %v589, %v639
      %v644 = vadd.f32 %v590, %v640
      %645 = vset.pattern.permute.xlu0 5
      %646 = vperm.xlu0 %645, %v485
      %v647 = vpop.permute.xlu0 %646
      %v649 = vlaneseq
      %v650 = vshrl.u32 %v649, 7
      %v651 = vsub.s32 1, %v650
      %v652 = vrot.slane %v591, %v651
      %v653 = vlaneseq
      %v654 = vshrl.u32 %v653, 7
      %v655 = vsub.s32 5, %v654
      %v656 = vrot.slane %v591, %v655
      %v657 = vlaneseq
      %v658 = vshrl.u32 %v657, 7
      %v659 = vsub.s32 1, %v658
      %v660 = vrot.slane %v592, %v659
      %v664 = vlaneseq
      %v665 = vshrl.u32 %v664, 7
      %v666 = vsub.s32 1, %v665
      %v667 = vrot.slane %v652, %v666
      %v668 = vlaneseq
      %v669 = vshrl.u32 %v668, 7
      %v670 = vsub.s32 1, %v669
      %v671 = vrot.slane %v656, %v670
      %v672 = vlaneseq
      %v673 = vshrl.u32 %v672, 7
      %v674 = vsub.s32 1, %v673
      %v675 = vrot.slane %v660, %v674
      %v676 = vmul.f32 %v647, %v667
      %v677 = vmul.f32 %v647, %v671
      %v678 = vmul.f32 %v647, %v675
      %682 = vrot.lane.b32.xlu0 %v676, 127
      %v683 = vpop.permute.xlu0 %682
      %684 = vrot.lane.b32.xlu0 %v677, 127
      %v685 = vpop.permute.xlu0 %684
      %686 = vrot.lane.b32.xlu0 %v678, 127
      %v687 = vpop.permute.xlu0 %686
      %v688 = vsel %vm638, %v683, %v685
      %v689 = vsel %vm638, %v685, %v687
      %v692 = vadd.f32 %v643, %v688
      %v693 = vadd.f32 %v644, %v689
      %694 = vset.pattern.permute.xlu0 6
      %695 = vperm.xlu0 %694, %v485
      %v696 = vpop.permute.xlu0 %695
      %v698 = vlaneseq
      %v699 = vshrl.u32 %v698, 7
      %v700 = vsub.s32 2, %v699
      %v701 = vrot.slane %v591, %v700
      %v702 = vlaneseq
      %v703 = vshrl.u32 %v702, 7
      %v704 = vsub.s32 6, %v703
      %v705 = vrot.slane %v591, %v704
      %v706 = vlaneseq
      %v707 = vshrl.u32 %v706, 7
      %v708 = vsub.s32 2, %v707
      %v709 = vrot.slane %v592, %v708
      %v713 = vlaneseq
      %v714 = vshrl.u32 %v713, 7
      %v715 = vsub.s32 2, %v714
      %v716 = vrot.slane %v701, %v715
      %v717 = vlaneseq
      %v718 = vshrl.u32 %v717, 7
      %v719 = vsub.s32 2, %v718
      %v720 = vrot.slane %v705, %v719
      %v721 = vlaneseq
      %v722 = vshrl.u32 %v721, 7
      %v723 = vsub.s32 2, %v722
      %v724 = vrot.slane %v709, %v723
      %v725 = vmul.f32 %v696, %v716
      %v726 = vmul.f32 %v696, %v720
      %v727 = vmul.f32 %v696, %v724
      %731 = vrot.lane.b32.xlu0 %v725, 127
      %v732 = vpop.permute.xlu0 %731
      %733 = vrot.lane.b32.xlu0 %v726, 127
      %v734 = vpop.permute.xlu0 %733
      %735 = vrot.lane.b32.xlu0 %v727, 127
      %v736 = vpop.permute.xlu0 %735
      %v737 = vsel %vm638, %v732, %v734
      %v738 = vsel %vm638, %v734, %v736
      %v741 = vadd.f32 %v692, %v737
      %v742 = vadd.f32 %v693, %v738
      %743 = vset.pattern.permute.xlu0 7
      %744 = vperm.xlu0 %743, %v485
      %v745 = vpop.permute.xlu0 %744
      %v747 = vlaneseq
      %v748 = vshrl.u32 %v747, 7
      %v749 = vsub.s32 3, %v748
      %v750 = vrot.slane %v591, %v749
      %v751 = vlaneseq
      %v752 = vshrl.u32 %v751, 7
      %v753 = vsub.s32 7, %v752
      %v754 = vrot.slane %v591, %v753
      %v755 = vlaneseq
      %v756 = vshrl.u32 %v755, 7
      %v757 = vsub.s32 3, %v756
      %v758 = vrot.slane %v592, %v757
      %v762 = vlaneseq
      %v763 = vshrl.u32 %v762, 7
      %v764 = vsub.s32 3, %v763
      %v765 = vrot.slane %v750, %v764
      %v766 = vlaneseq
      %v767 = vshrl.u32 %v766, 7
      %v768 = vsub.s32 3, %v767
      %v769 = vrot.slane %v754, %v768
      %v770 = vlaneseq
      %v771 = vshrl.u32 %v770, 7
      %v772 = vsub.s32 3, %v771
      %v773 = vrot.slane %v758, %v772
      %v774 = vmul.f32 %v745, %v765
      %v775 = vmul.f32 %v745, %v769
      %v776 = vmul.f32 %v745, %v773
      %780 = vrot.lane.b32.xlu0 %v774, 127
      %v781 = vpop.permute.xlu0 %780
      %782 = vrot.lane.b32.xlu0 %v775, 127
      %v783 = vpop.permute.xlu0 %782
      %784 = vrot.lane.b32.xlu0 %v776, 127
      %v785 = vpop.permute.xlu0 %784
      %v786 = vsel %vm638, %v781, %v783
      %v787 = vsel %vm638, %v783, %v785
      %v790 = vadd.f32 %v741, %v786
      %v791 = vadd.f32 %v742, %v787
      %792 = vset.pattern.permute.xlu0 8
      %793 = vperm.xlu0 %792, %v485
      %v794 = vpop.permute.xlu0 %793
      %v796 = vmul.f32 %v794, %v617
      %v797 = vmul.f32 %v794, %v621
      %v798 = vmul.f32 %v794, %v625
      %802 = vrot.lane.b32.xlu0 %v796, 126
      %v803 = vpop.permute.xlu0 %802
      %804 = vrot.lane.b32.xlu0 %v797, 126
      %v805 = vpop.permute.xlu0 %804
      %806 = vrot.lane.b32.xlu0 %v798, 126
      %v807 = vpop.permute.xlu0 %806
      %vm808 = vcmask 1031168
      %v809 = vsel %vm808, %v803, %v805
      %v810 = vsel %vm808, %v805, %v807
      %v813 = vadd.f32 %v790, %v809
      %v814 = vadd.f32 %v791, %v810
      %815 = vset.pattern.permute.xlu0 9
      %816 = vperm.xlu0 %815, %v485
      %v817 = vpop.permute.xlu0 %816
      %v819 = vmul.f32 %v817, %v667
      %v820 = vmul.f32 %v817, %v671
      %v821 = vmul.f32 %v817, %v675
      %825 = vrot.lane.b32.xlu0 %v819, 126
      %v826 = vpop.permute.xlu0 %825
      %827 = vrot.lane.b32.xlu0 %v820, 126
      %v828 = vpop.permute.xlu0 %827
      %829 = vrot.lane.b32.xlu0 %v821, 126
      %v830 = vpop.permute.xlu0 %829
      %v831 = vsel %vm808, %v826, %v828
      %v832 = vsel %vm808, %v828, %v830
      %v835 = vadd.f32 %v813, %v831
      %v836 = vadd.f32 %v814, %v832
      %837 = vset.pattern.permute.xlu0 10
      %838 = vperm.xlu0 %837, %v485
      %v839 = vpop.permute.xlu0 %838
      %v841 = vmul.f32 %v839, %v716
      %v842 = vmul.f32 %v839, %v720
      %v843 = vmul.f32 %v839, %v724
      %847 = vrot.lane.b32.xlu0 %v841, 126
      %v848 = vpop.permute.xlu0 %847
      %849 = vrot.lane.b32.xlu0 %v842, 126
      %v850 = vpop.permute.xlu0 %849
      %851 = vrot.lane.b32.xlu0 %v843, 126
      %v852 = vpop.permute.xlu0 %851
      %v853 = vsel %vm808, %v848, %v850
      %v854 = vsel %vm808, %v850, %v852
      %v857 = vadd.f32 %v835, %v853
      %v858 = vadd.f32 %v836, %v854
      %859 = vset.pattern.permute.xlu0 11
      %860 = vperm.xlu0 %859, %v485
      %v861 = vpop.permute.xlu0 %860
      %v863 = vmul.f32 %v861, %v765
      %v864 = vmul.f32 %v861, %v769
      %v865 = vmul.f32 %v861, %v773
      %869 = vrot.lane.b32.xlu0 %v863, 126
      %v870 = vpop.permute.xlu0 %869
      %871 = vrot.lane.b32.xlu0 %v864, 126
      %v872 = vpop.permute.xlu0 %871
      %873 = vrot.lane.b32.xlu0 %v865, 126
      %v874 = vpop.permute.xlu0 %873
      %v875 = vsel %vm808, %v870, %v872
      %v876 = vsel %vm808, %v872, %v874
      %v879 = vadd.f32 %v857, %v875
      %v880 = vadd.f32 %v858, %v876
      %881 = vset.pattern.permute.xlu0 12
      %882 = vperm.xlu0 %881, %v485
      %v883 = vpop.permute.xlu0 %882
      %v885 = vmul.f32 %v883, %v617
      %v886 = vmul.f32 %v883, %v621
      %v887 = vmul.f32 %v883, %v625
      %891 = vrot.lane.b32.xlu0 %v885, 118
      %v892 = vpop.permute.xlu0 %891
      %893 = vrot.lane.b32.xlu0 %v886, 118
      %v894 = vpop.permute.xlu0 %893
      %895 = vrot.lane.b32.xlu0 %v887, 118
      %v896 = vpop.permute.xlu0 %895
      %vm897 = vcmask 965632
      %v898 = vsel %vm897, %v892, %v894
      %v899 = vsel %vm897, %v894, %v896
      %v902 = vadd.f32 %v879, %v898
      %v903 = vadd.f32 %v880, %v899
      %904 = vset.pattern.permute.xlu0 13
      %905 = vperm.xlu0 %904, %v485
      %v906 = vpop.permute.xlu0 %905
      %v908 = vmul.f32 %v906, %v667
      %v909 = vmul.f32 %v906, %v671
      %v910 = vmul.f32 %v906, %v675
      %914 = vrot.lane.b32.xlu0 %v908, 118
      %v915 = vpop.permute.xlu0 %914
      %916 = vrot.lane.b32.xlu0 %v909, 118
      %v917 = vpop.permute.xlu0 %916
      %918 = vrot.lane.b32.xlu0 %v910, 118
      %v919 = vpop.permute.xlu0 %918
      %v920 = vsel %vm897, %v915, %v917
      %v921 = vsel %vm897, %v917, %v919
      %v924 = vadd.f32 %v902, %v920
      %v925 = vadd.f32 %v903, %v921
      %926 = vset.pattern.permute.xlu0 14
      %927 = vperm.xlu0 %926, %v485
      %v928 = vpop.permute.xlu0 %927
      %v930 = vmul.f32 %v928, %v716
      %v931 = vmul.f32 %v928, %v720
      %v932 = vmul.f32 %v928, %v724
      %936 = vrot.lane.b32.xlu0 %v930, 118
      %v937 = vpop.permute.xlu0 %936
      %938 = vrot.lane.b32.xlu0 %v931, 118
      %v939 = vpop.permute.xlu0 %938
      %940 = vrot.lane.b32.xlu0 %v932, 118
      %v941 = vpop.permute.xlu0 %940
      %v942 = vsel %vm897, %v937, %v939
      %v943 = vsel %vm897, %v939, %v941
      %v946 = vadd.f32 %v924, %v942
      %v947 = vadd.f32 %v925, %v943
      %948 = vset.pattern.permute.xlu0 15
      %949 = vperm.xlu0 %948, %v485
      %v950 = vpop.permute.xlu0 %949
      %v952 = vmul.f32 %v950, %v765
      %v953 = vmul.f32 %v950, %v769
      %v954 = vmul.f32 %v950, %v773
      %958 = vrot.lane.b32.xlu0 %v952, 118
      %v959 = vpop.permute.xlu0 %958
      %960 = vrot.lane.b32.xlu0 %v953, 118
      %v961 = vpop.permute.xlu0 %960
      %962 = vrot.lane.b32.xlu0 %v954, 118
      %v963 = vpop.permute.xlu0 %962
      %v964 = vsel %vm897, %v959, %v961
      %v965 = vsel %vm897, %v961, %v963
      %v968 = vadd.f32 %v946, %v964
      %v969 = vadd.f32 %v947, %v965
      %970 = vset.pattern.permute.xlu0 16
      %971 = vperm.xlu0 %970, %v485
      %v972 = vpop.permute.xlu0 %971
      %v974 = vmul.f32 %v972, %v617
      %v975 = vmul.f32 %v972, %v621
      %v976 = vmul.f32 %v972, %v625
      %980 = vrot.lane.b32.xlu0 %v974, 117
      %v981 = vpop.permute.xlu0 %980
      %982 = vrot.lane.b32.xlu0 %v975, 117
      %v983 = vpop.permute.xlu0 %982
      %984 = vrot.lane.b32.xlu0 %v976, 117
      %v985 = vpop.permute.xlu0 %984
      %vm986 = vcmask 957440
      %v987 = vsel %vm986, %v981, %v983
      %v988 = vsel %vm986, %v983, %v985
      %v991 = vadd.f32 %v968, %v987
      %v992 = vadd.f32 %v969, %v988
      %993 = vset.pattern.permute.xlu0 17
      %994 = vperm.xlu0 %993, %v485
      %v995 = vpop.permute.xlu0 %994
      %v997 = vmul.f32 %v995, %v667
      %v998 = vmul.f32 %v995, %v671
      %v999 = vmul.f32 %v995, %v675
      %1003 = vrot.lane.b32.xlu0 %v997, 117
      %v1004 = vpop.permute.xlu0 %1003
      %1005 = vrot.lane.b32.xlu0 %v998, 117
      %v1006 = vpop.permute.xlu0 %1005
      %1007 = vrot.lane.b32.xlu0 %v999, 117
      %v1008 = vpop.permute.xlu0 %1007
      %v1009 = vsel %vm986, %v1004, %v1006
      %v1010 = vsel %vm986, %v1006, %v1008
      %v1013 = vadd.f32 %v991, %v1009
      %v1014 = vadd.f32 %v992, %v1010
      %1015 = vset.pattern.permute.xlu0 18
      %1016 = vperm.xlu0 %1015, %v485
      %v1017 = vpop.permute.xlu0 %1016
      %v1019 = vmul.f32 %v1017, %v716
      %v1020 = vmul.f32 %v1017, %v720
      %v1021 = vmul.f32 %v1017, %v724
      %1025 = vrot.lane.b32.xlu0 %v1019, 117
      %v1026 = vpop.permute.xlu0 %1025
      %1027 = vrot.lane.b32.xlu0 %v1020, 117
      %v1028 = vpop.permute.xlu0 %1027
      %1029 = vrot.lane.b32.xlu0 %v1021, 117
      %v1030 = vpop.permute.xlu0 %1029
      %v1031 = vsel %vm986, %v1026, %v1028
      %v1032 = vsel %vm986, %v1028, %v1030
      %v1035 = vadd.f32 %v1013, %v1031
      %v1036 = vadd.f32 %v1014, %v1032
      %1037 = vset.pattern.permute.xlu0 19
      %1038 = vperm.xlu0 %1037, %v485
      %v1039 = vpop.permute.xlu0 %1038
      %v1041 = vmul.f32 %v1039, %v765
      %v1042 = vmul.f32 %v1039, %v769
      %v1043 = vmul.f32 %v1039, %v773
      %1047 = vrot.lane.b32.xlu0 %v1041, 117
      %v1048 = vpop.permute.xlu0 %1047
      %1049 = vrot.lane.b32.xlu0 %v1042, 117
      %v1050 = vpop.permute.xlu0 %1049
      %1051 = vrot.lane.b32.xlu0 %v1043, 117
      %v1052 = vpop.permute.xlu0 %1051
      %v1053 = vsel %vm986, %v1048, %v1050
      %v1054 = vsel %vm986, %v1050, %v1052
      %v1057 = vadd.f32 %v1035, %v1053
      %v1058 = vadd.f32 %v1036, %v1054
      %1059 = vset.pattern.permute.xlu0 20
      %1060 = vperm.xlu0 %1059, %v485
      %v1061 = vpop.permute.xlu0 %1060
      %v1063 = vmul.f32 %v1061, %v617
      %v1064 = vmul.f32 %v1061, %v621
      %v1065 = vmul.f32 %v1061, %v625
      %1069 = vrot.lane.b32.xlu0 %v1063, 116
      %v1070 = vpop.permute.xlu0 %1069
      %1071 = vrot.lane.b32.xlu0 %v1064, 116
      %v1072 = vpop.permute.xlu0 %1071
      %1073 = vrot.lane.b32.xlu0 %v1065, 116
      %v1074 = vpop.permute.xlu0 %1073
      %vm1075 = vcmask 949248
      %v1076 = vsel %vm1075, %v1070, %v1072
      %v1077 = vsel %vm1075, %v1072, %v1074
      %v1080 = vadd.f32 %v1057, %v1076
      %v1081 = vadd.f32 %v1058, %v1077
      %1082 = vset.pattern.permute.xlu0 21
      %1083 = vperm.xlu0 %1082, %v485
      %v1084 = vpop.permute.xlu0 %1083
      %v1086 = vmul.f32 %v1084, %v667
      %v1087 = vmul.f32 %v1084, %v671
      %v1088 = vmul.f32 %v1084, %v675
      %1092 = vrot.lane.b32.xlu0 %v1086, 116
      %v1093 = vpop.permute.xlu0 %1092
      %1094 = vrot.lane.b32.xlu0 %v1087, 116
      %v1095 = vpop.permute.xlu0 %1094
      %1096 = vrot.lane.b32.xlu0 %v1088, 116
      %v1097 = vpop.permute.xlu0 %1096
      %v1098 = vsel %vm1075, %v1093, %v1095
      %v1099 = vsel %vm1075, %v1095, %v1097
      %v1102 = vadd.f32 %v1080, %v1098
      %v1103 = vadd.f32 %v1081, %v1099
      %1104 = vset.pattern.permute.xlu0 22
      %1105 = vperm.xlu0 %1104, %v485
      %v1106 = vpop.permute.xlu0 %1105
      %v1108 = vmul.f32 %v1106, %v716
      %v1109 = vmul.f32 %v1106, %v720
      %v1110 = vmul.f32 %v1106, %v724
      %1114 = vrot.lane.b32.xlu0 %v1108, 116
      %v1115 = vpop.permute.xlu0 %1114
      %1116 = vrot.lane.b32.xlu0 %v1109, 116
      %v1117 = vpop.permute.xlu0 %1116
      %1118 = vrot.lane.b32.xlu0 %v1110, 116
      %v1119 = vpop.permute.xlu0 %1118
      %v1120 = vsel %vm1075, %v1115, %v1117
      %v1121 = vsel %vm1075, %v1117, %v1119
      %v1124 = vadd.f32 %v1102, %v1120
      %v1125 = vadd.f32 %v1103, %v1121
      %1126 = vset.pattern.permute.xlu0 23
      %1127 = vperm.xlu0 %1126, %v485
      %v1128 = vpop.permute.xlu0 %1127
      %v1130 = vmul.f32 %v1128, %v765
      %v1131 = vmul.f32 %v1128, %v769
      %v1132 = vmul.f32 %v1128, %v773
      %1136 = vrot.lane.b32.xlu0 %v1130, 116
      %v1137 = vpop.permute.xlu0 %1136
      %1138 = vrot.lane.b32.xlu0 %v1131, 116
      %v1139 = vpop.permute.xlu0 %1138
      %1140 = vrot.lane.b32.xlu0 %v1132, 116
      %v1141 = vpop.permute.xlu0 %1140
      %v1142 = vsel %vm1075, %v1137, %v1139
      %v1143 = vsel %vm1075, %v1139, %v1141
      %v1146 = vadd.f32 %v1124, %v1142
      %v1147 = vadd.f32 %v1125, %v1143
      %1148 = vset.pattern.permute.xlu0 24
      %1149 = vperm.xlu0 %1148, %v485
      %v1150 = vpop.permute.xlu0 %1149
      %v1152 = vmul.f32 %v1150, %v617
      %v1153 = vmul.f32 %v1150, %v621
      %v1154 = vmul.f32 %v1150, %v625
      %1158 = vrot.lane.b32.xlu0 %v1152, 108
      %v1159 = vpop.permute.xlu0 %1158
      %1160 = vrot.lane.b32.xlu0 %v1153, 108
      %v1161 = vpop.permute.xlu0 %1160
      %1162 = vrot.lane.b32.xlu0 %v1154, 108
      %v1163 = vpop.permute.xlu0 %1162
      %vm1164 = vcmask 883712
      %v1165 = vsel %vm1164, %v1159, %v1161
      %v1166 = vsel %vm1164, %v1161, %v1163
      %v1169 = vadd.f32 %v1146, %v1165
      %v1170 = vadd.f32 %v1147, %v1166
      %1171 = vset.pattern.permute.xlu0 25
      %1172 = vperm.xlu0 %1171, %v485
      %v1173 = vpop.permute.xlu0 %1172
      %v1175 = vmul.f32 %v1173, %v667
      %v1176 = vmul.f32 %v1173, %v671
      %v1177 = vmul.f32 %v1173, %v675
      %1181 = vrot.lane.b32.xlu0 %v1175, 108
      %v1182 = vpop.permute.xlu0 %1181
      %1183 = vrot.lane.b32.xlu0 %v1176, 108
      %v1184 = vpop.permute.xlu0 %1183
      %1185 = vrot.lane.b32.xlu0 %v1177, 108
      %v1186 = vpop.permute.xlu0 %1185
      %v1187 = vsel %vm1164, %v1182, %v1184
      %v1188 = vsel %vm1164, %v1184, %v1186
      %v1191 = vadd.f32 %v1169, %v1187
      %v1192 = vadd.f32 %v1170, %v1188
      %1193 = vset.pattern.permute.xlu0 26
      %1194 = vperm.xlu0 %1193, %v485
      %v1195 = vpop.permute.xlu0 %1194
      %v1197 = vmul.f32 %v1195, %v716
      %v1198 = vmul.f32 %v1195, %v720
      %v1199 = vmul.f32 %v1195, %v724
      %1203 = vrot.lane.b32.xlu0 %v1197, 108
      %v1204 = vpop.permute.xlu0 %1203
      %1205 = vrot.lane.b32.xlu0 %v1198, 108
      %v1206 = vpop.permute.xlu0 %1205
      %1207 = vrot.lane.b32.xlu0 %v1199, 108
      %v1208 = vpop.permute.xlu0 %1207
      %v1209 = vsel %vm1164, %v1204, %v1206
      %v1210 = vsel %vm1164, %v1206, %v1208
      %v1213 = vadd.f32 %v1191, %v1209
      %v1214 = vadd.f32 %v1192, %v1210
      %1215 = vset.pattern.permute.xlu0 27
      %1216 = vperm.xlu0 %1215, %v485
      %v1217 = vpop.permute.xlu0 %1216
      %v1219 = vmul.f32 %v1217, %v765
      %v1220 = vmul.f32 %v1217, %v769
      %v1221 = vmul.f32 %v1217, %v773
      %1225 = vrot.lane.b32.xlu0 %v1219, 108
      %v1226 = vpop.permute.xlu0 %1225
      %1227 = vrot.lane.b32.xlu0 %v1220, 108
      %v1228 = vpop.permute.xlu0 %1227
      %1229 = vrot.lane.b32.xlu0 %v1221, 108
      %v1230 = vpop.permute.xlu0 %1229
      %v1231 = vsel %vm1164, %v1226, %v1228
      %v1232 = vsel %vm1164, %v1228, %v1230
      %v1235 = vadd.f32 %v1213, %v1231
      %v1236 = vadd.f32 %v1214, %v1232
      %1237 = vset.pattern.permute.xlu0 28
      %1238 = vperm.xlu0 %1237, %v485
      %v1239 = vpop.permute.xlu0 %1238
      %v1241 = vmul.f32 %v1239, %v617
      %v1242 = vmul.f32 %v1239, %v621
      %v1243 = vmul.f32 %v1239, %v625
      %1247 = vrot.lane.b32.xlu0 %v1241, 107
      %v1248 = vpop.permute.xlu0 %1247
      %1249 = vrot.lane.b32.xlu0 %v1242, 107
      %v1250 = vpop.permute.xlu0 %1249
      %1251 = vrot.lane.b32.xlu0 %v1243, 107
      %v1252 = vpop.permute.xlu0 %1251
      %vm1253 = vcmask 875520
      %v1254 = vsel %vm1253, %v1248, %v1250
      %v1255 = vsel %vm1253, %v1250, %v1252
      %v1258 = vadd.f32 %v1235, %v1254
      %v1259 = vadd.f32 %v1236, %v1255
      %1260 = vset.pattern.permute.xlu0 29
      %1261 = vperm.xlu0 %1260, %v485
      %v1262 = vpop.permute.xlu0 %1261
      %v1264 = vmul.f32 %v1262, %v667
      %v1265 = vmul.f32 %v1262, %v671
      %v1266 = vmul.f32 %v1262, %v675
      %1270 = vrot.lane.b32.xlu0 %v1264, 107
      %v1271 = vpop.permute.xlu0 %1270
      %1272 = vrot.lane.b32.xlu0 %v1265, 107
      %v1273 = vpop.permute.xlu0 %1272
      %1274 = vrot.lane.b32.xlu0 %v1266, 107
      %v1275 = vpop.permute.xlu0 %1274
      %v1276 = vsel %vm1253, %v1271, %v1273
      %v1277 = vsel %vm1253, %v1273, %v1275
      %v1280 = vadd.f32 %v1258, %v1276
      %v1281 = vadd.f32 %v1259, %v1277
      %1282 = vset.pattern.permute.xlu0 30
      %1283 = vperm.xlu0 %1282, %v485
      %v1284 = vpop.permute.xlu0 %1283
      %v1286 = vmul.f32 %v1284, %v716
      %v1287 = vmul.f32 %v1284, %v720
      %v1288 = vmul.f32 %v1284, %v724
      %1292 = vrot.lane.b32.xlu0 %v1286, 107
      %v1293 = vpop.permute.xlu0 %1292
      %1294 = vrot.lane.b32.xlu0 %v1287, 107
      %v1295 = vpop.permute.xlu0 %1294
      %1296 = vrot.lane.b32.xlu0 %v1288, 107
      %v1297 = vpop.permute.xlu0 %1296
      %v1298 = vsel %vm1253, %v1293, %v1295
      %v1299 = vsel %vm1253, %v1295, %v1297
      %v1302 = vadd.f32 %v1280, %v1298
      %v1303 = vadd.f32 %v1281, %v1299
      %1304 = vset.pattern.permute.xlu0 31
      %1305 = vperm.xlu0 %1304, %v485
      %v1306 = vpop.permute.xlu0 %1305
      %v1308 = vmul.f32 %v1306, %v765
      %v1309 = vmul.f32 %v1306, %v769
      %v1310 = vmul.f32 %v1306, %v773
      %1314 = vrot.lane.b32.xlu0 %v1308, 107
      %v1315 = vpop.permute.xlu0 %1314
      %1316 = vrot.lane.b32.xlu0 %v1309, 107
      %v1317 = vpop.permute.xlu0 %1316
      %1318 = vrot.lane.b32.xlu0 %v1310, 107
      %v1319 = vpop.permute.xlu0 %1318
      %v1320 = vsel %vm1253, %v1315, %v1317
      %v1321 = vsel %vm1253, %v1317, %v1319
      %v1324 = vadd.f32 %v1302, %v1320
      %v1325 = vadd.f32 %v1303, %v1321
      %1326 = vset.pattern.permute.xlu0 32
      %1327 = vperm.xlu0 %1326, %v485
      %v1328 = vpop.permute.xlu0 %1327
      %v1330 = vmul.f32 %v1328, %v617
      %v1331 = vmul.f32 %v1328, %v621
      %v1332 = vmul.f32 %v1328, %v625
      %1336 = vrot.lane.b32.xlu0 %v1330, 106
      %v1337 = vpop.permute.xlu0 %1336
      %1338 = vrot.lane.b32.xlu0 %v1331, 106
      %v1339 = vpop.permute.xlu0 %1338
      %1340 = vrot.lane.b32.xlu0 %v1332, 106
      %v1341 = vpop.permute.xlu0 %1340
      %vm1342 = vcmask 867328
      %v1343 = vsel %vm1342, %v1337, %v1339
      %v1344 = vsel %vm1342, %v1339, %v1341
      %v1347 = vadd.f32 %v1324, %v1343
      %v1348 = vadd.f32 %v1325, %v1344
      %1349 = vset.pattern.permute.xlu0 33
      %1350 = vperm.xlu0 %1349, %v485
      %v1351 = vpop.permute.xlu0 %1350
      %v1353 = vmul.f32 %v1351, %v667
      %v1354 = vmul.f32 %v1351, %v671
      %v1355 = vmul.f32 %v1351, %v675
      %1359 = vrot.lane.b32.xlu0 %v1353, 106
      %v1360 = vpop.permute.xlu0 %1359
      %1361 = vrot.lane.b32.xlu0 %v1354, 106
      %v1362 = vpop.permute.xlu0 %1361
      %1363 = vrot.lane.b32.xlu0 %v1355, 106
      %v1364 = vpop.permute.xlu0 %1363
      %v1365 = vsel %vm1342, %v1360, %v1362
      %v1366 = vsel %vm1342, %v1362, %v1364
      %v1369 = vadd.f32 %v1347, %v1365
      %v1370 = vadd.f32 %v1348, %v1366
      %1371 = vset.pattern.permute.xlu0 34
      %1372 = vperm.xlu0 %1371, %v485
      %v1373 = vpop.permute.xlu0 %1372
      %v1375 = vmul.f32 %v1373, %v716
      %v1376 = vmul.f32 %v1373, %v720
      %v1377 = vmul.f32 %v1373, %v724
      %1381 = vrot.lane.b32.xlu0 %v1375, 106
      %v1382 = vpop.permute.xlu0 %1381
      %1383 = vrot.lane.b32.xlu0 %v1376, 106
      %v1384 = vpop.permute.xlu0 %1383
      %1385 = vrot.lane.b32.xlu0 %v1377, 106
      %v1386 = vpop.permute.xlu0 %1385
      %v1387 = vsel %vm1342, %v1382, %v1384
      %v1388 = vsel %vm1342, %v1384, %v1386
      %v1391 = vadd.f32 %v1369, %v1387
      %v1392 = vadd.f32 %v1370, %v1388
      %1393 = vset.pattern.permute.xlu0 35
      %1394 = vperm.xlu0 %1393, %v485
      %v1395 = vpop.permute.xlu0 %1394
      %v1397 = vmul.f32 %v1395, %v765
      %v1398 = vmul.f32 %v1395, %v769
      %v1399 = vmul.f32 %v1395, %v773
      %1403 = vrot.lane.b32.xlu0 %v1397, 106
      %v1404 = vpop.permute.xlu0 %1403
      %1405 = vrot.lane.b32.xlu0 %v1398, 106
      %v1406 = vpop.permute.xlu0 %1405
      %1407 = vrot.lane.b32.xlu0 %v1399, 106
      %v1408 = vpop.permute.xlu0 %1407
      %v1409 = vsel %vm1342, %v1404, %v1406
      %v1410 = vsel %vm1342, %v1406, %v1408
      %v1413 = vadd.f32 %v1391, %v1409
      %v1414 = vadd.f32 %v1392, %v1410
      %v1415 = vld [vmem:[%s2] sm:$0xff]
      %1417 = vset.pattern.permute.xlu0 0
      %1418 = vperm.xlu0 %1417, %v1415
      %v1419 = vpop.permute.xlu0 %1418
      %v1421 = vadd.f32 %v1413, %v1419
      %v1422 = vadd.f32 %v1414, %v1419
      %v1423 = vld [vmem:[%s3] sm:$0xff]
      %v1424 = vmul.f32 %v1421, %v1421
      %v1425 = vmul.f32 %v1422, %v1422
      %v1426 = vrot.slane %v1424, 4
      %v1427 = vadd.f32 %v1424, %v1426
      %v1428 = vrot.slane %v1427, 2
      %v1429 = vadd.f32 %v1427, %v1428
      %v1430 = vrot.slane %v1429, 1
      %v1431 = vadd.f32 %v1429, %v1430
      %v1432 = vrot.slane %v1425, 4
      %v1433 = vadd.f32 %v1425, %v1432
      %v1434 = vrot.slane %v1433, 2
      %v1435 = vadd.f32 %v1433, %v1434
      %v1436 = vrot.slane %v1435, 1
      %v1437 = vadd.f32 %v1435, %v1436
      %v1438 = vmax.f32 %v1431, 1e-24
      %v1439 = vmax.f32 %v1437, 1e-24
      %v1440 = vrsqrt.pop %v1438
      %v1441 = vrsqrt.pop %v1439
      %v1442 = vmul.f32 %v1421, %v1440
      %v1443 = vmul.f32 %v1422, %v1441
      %1445 = vset.pattern.permute.xlu0 0
      %1446 = vperm.xlu0 %1445, %v1423
      %v1447 = vpop.permute.xlu0 %1446
      %v1449 = vmul.f32 %v1442, %v1447
      %v1450 = vmul.f32 %v1443, %v1447
      %v1451 = vld [vmem:[%s470] sm:$0xff]
      %1453 = vset.pattern.permute.xlu0 0
      %1454 = vperm.xlu0 %1453, %v1451
      %v1455 = vpop.permute.xlu0 %1454
      %v1457 = vmul.f32 %v1449, %v1455
      %v1458 = vmul.f32 %v1450, %v1455
      %v1459 = vld [vmem:[%s474] sm:$0xff]
      %1461 = vset.pattern.permute.xlu0 0
      %1462 = vperm.xlu0 %1461, %v1459
      %v1463 = vpop.permute.xlu0 %1462
      %v1465 = vadd.f32 %v1457, %v1463
      %v1466 = vadd.f32 %v1458, %v1463
      %v1467 = vxor.u32 %v1465, 2147483648
      %v1468 = vxor.u32 %v1466, 2147483648
      %v1469 = vmul.f32 %v1467, 1.442695
      %v1470 = vpow.pop %v1469
      %v1471 = vmul.f32 %v1468, 1.442695
      %v1472 = vpow.pop %v1471
      %v1473 = vadd.f32 %v1470, 1.0
      %v1474 = vadd.f32 %v1472, 1.0
      %v1475 = vrcp.pop %v1473
      %v1476 = vmul.f32 1.0, %v1475
      %v1477 = vrcp.pop %v1474
      %v1478 = vmul.f32 1.0, %v1477
      %v1479 = vmul.f32 %v1465, %v1476
      %v1480 = vmul.f32 %v1466, %v1478
      %v1482 = vlaneseq
      %v1483 = vshrl.u32 %v1482, 7
      %v1484 = vsub.s32 0, %v1483
      %v1485 = vrot.slane %v484, %v1484
      %v1486 = vlaneseq
      %v1487 = vshrl.u32 %v1486, 7
      %v1488 = vsub.s32 1, %v1487
      %v1489 = vrot.slane %v484, %v1488
      %v1492 = vmul.f32 %v1479, %v1485
      %v1493 = vmul.f32 %v1480, %v1489
      %1494 = vst [vmem:[#allocation2] sm:$0xff] 0.0
      %1495 = vst [vmem:[#allocation2 + $0x8] sm:$0xff] %v1492
      %1496 = vst [vmem:[#allocation2 + $0x10] sm:$0xff] %v1493
      %1497 = vst [vmem:[#allocation2 + $0x18] sm:$0xff] 0.0
      %v1498 = vld [vmem:[%s6] sm:$0xff]
      %v1499 = vld [vmem:[#allocation2] sm:$0xff]
      %v1500 = vld [vmem:[#allocation2 + $0x8] sm:$0xff]
      %v1501 = vld [vmem:[#allocation2 + $0x10] sm:$0xff]
      %1503 = vset.pattern.permute.xlu0 0
      %1504 = vperm.xlu0 %1503, %v1498
      %v1505 = vpop.permute.xlu0 %1504
      %v1507 = vlaneseq
      %v1508 = vshrl.u32 %v1507, 7
      %v1509 = vsub.s32 0, %v1508
      %v1510 = vrot.slane %v1499, %v1509
      %v1511 = vlaneseq
      %v1512 = vshrl.u32 %v1511, 7
      %v1513 = vsub.s32 0, %v1512
      %v1514 = vrot.slane %v1500, %v1513
      %v1515 = vlaneseq
      %v1516 = vshrl.u32 %v1515, 7
      %v1517 = vsub.s32 0, %v1516
      %v1518 = vrot.slane %v1501, %v1517
      %v1519 = vmul.f32 %v1505, %v1510
      %v1520 = vmul.f32 %v1505, %v1514
      %v1521 = vmul.f32 %v1505, %v1518
      %1522 = vset.pattern.permute.xlu0 1
      %1523 = vperm.xlu0 %1522, %v1498
      %v1524 = vpop.permute.xlu0 %1523
      %v1526 = vlaneseq
      %v1527 = vshrl.u32 %v1526, 7
      %v1528 = vsub.s32 1, %v1527
      %v1529 = vrot.slane %v1499, %v1528
      %v1530 = vlaneseq
      %v1531 = vshrl.u32 %v1530, 7
      %v1532 = vsub.s32 1, %v1531
      %v1533 = vrot.slane %v1500, %v1532
      %v1534 = vlaneseq
      %v1535 = vshrl.u32 %v1534, 7
      %v1536 = vsub.s32 1, %v1535
      %v1537 = vrot.slane %v1501, %v1536
      %v1538 = vmul.f32 %v1524, %v1529
      %v1539 = vmul.f32 %v1524, %v1533
      %v1540 = vmul.f32 %v1524, %v1537
      %v1541 = vadd.f32 %v1519, %v1538
      %v1542 = vadd.f32 %v1520, %v1539
      %v1543 = vadd.f32 %v1521, %v1540
      %1544 = vset.pattern.permute.xlu0 2
      %1545 = vperm.xlu0 %1544, %v1498
      %v1546 = vpop.permute.xlu0 %1545
      %v1548 = vlaneseq
      %v1549 = vshrl.u32 %v1548, 7
      %v1550 = vsub.s32 2, %v1549
      %v1551 = vrot.slane %v1499, %v1550
      %v1552 = vlaneseq
      %v1553 = vshrl.u32 %v1552, 7
      %v1554 = vsub.s32 2, %v1553
      %v1555 = vrot.slane %v1500, %v1554
      %v1556 = vlaneseq
      %v1557 = vshrl.u32 %v1556, 7
      %v1558 = vsub.s32 2, %v1557
      %v1559 = vrot.slane %v1501, %v1558
      %v1560 = vmul.f32 %v1546, %v1551
      %v1561 = vmul.f32 %v1546, %v1555
      %v1562 = vmul.f32 %v1546, %v1559
      %v1563 = vadd.f32 %v1541, %v1560
      %v1564 = vadd.f32 %v1542, %v1561
      %v1565 = vadd.f32 %v1543, %v1562
      %1566 = vset.pattern.permute.xlu0 3
      %1567 = vperm.xlu0 %1566, %v1498
      %v1568 = vpop.permute.xlu0 %1567
      %v1570 = vlaneseq
      %v1571 = vshrl.u32 %v1570, 7
      %v1572 = vsub.s32 3, %v1571
      %v1573 = vrot.slane %v1499, %v1572
      %v1574 = vlaneseq
      %v1575 = vshrl.u32 %v1574, 7
      %v1576 = vsub.s32 3, %v1575
      %v1577 = vrot.slane %v1500, %v1576
      %v1578 = vlaneseq
      %v1579 = vshrl.u32 %v1578, 7
      %v1580 = vsub.s32 3, %v1579
      %v1581 = vrot.slane %v1501, %v1580
      %v1582 = vmul.f32 %v1568, %v1573
      %v1583 = vmul.f32 %v1568, %v1577
      %v1584 = vmul.f32 %v1568, %v1581
      %v1585 = vadd.f32 %v1563, %v1582
      %v1586 = vadd.f32 %v1564, %v1583
      %v1587 = vadd.f32 %v1565, %v1584
      %1588 = vset.pattern.permute.xlu0 4
      %1589 = vperm.xlu0 %1588, %v1498
      %v1590 = vpop.permute.xlu0 %1589
      %v1592 = vlaneseq
      %v1593 = vshrl.u32 %v1592, 7
      %v1594 = vsub.s32 4, %v1593
      %v1595 = vrot.slane %v1499, %v1594
      %v1596 = vlaneseq
      %v1597 = vshrl.u32 %v1596, 7
      %v1598 = vsub.s32 4, %v1597
      %v1599 = vrot.slane %v1500, %v1598
      %v1600 = vlaneseq
      %v1601 = vshrl.u32 %v1600, 7
      %v1602 = vsub.s32 4, %v1601
      %v1603 = vrot.slane %v1501, %v1602
      %v1604 = vmul.f32 %v1590, %v1595
      %v1605 = vmul.f32 %v1590, %v1599
      %v1606 = vmul.f32 %v1590, %v1603
      %v1607 = vadd.f32 %v1585, %v1604
      %v1608 = vadd.f32 %v1586, %v1605
      %v1609 = vadd.f32 %v1587, %v1606
      %1610 = vset.pattern.permute.xlu0 5
      %1611 = vperm.xlu0 %1610, %v1498
      %v1612 = vpop.permute.xlu0 %1611
      %v1614 = vlaneseq
      %v1615 = vshrl.u32 %v1614, 7
      %v1616 = vsub.s32 5, %v1615
      %v1617 = vrot.slane %v1499, %v1616
      %v1618 = vlaneseq
      %v1619 = vshrl.u32 %v1618, 7
      %v1620 = vsub.s32 5, %v1619
      %v1621 = vrot.slane %v1500, %v1620
      %v1622 = vlaneseq
      %v1623 = vshrl.u32 %v1622, 7
      %v1624 = vsub.s32 5, %v1623
      %v1625 = vrot.slane %v1501, %v1624
      %v1626 = vmul.f32 %v1612, %v1617
      %v1627 = vmul.f32 %v1612, %v1621
      %v1628 = vmul.f32 %v1612, %v1625
      %v1629 = vadd.f32 %v1607, %v1626
      %v1630 = vadd.f32 %v1608, %v1627
      %v1631 = vadd.f32 %v1609, %v1628
      %1632 = vset.pattern.permute.xlu0 6
      %1633 = vperm.xlu0 %1632, %v1498
      %v1634 = vpop.permute.xlu0 %1633
      %v1636 = vlaneseq
      %v1637 = vshrl.u32 %v1636, 7
      %v1638 = vsub.s32 6, %v1637
      %v1639 = vrot.slane %v1499, %v1638
      %v1640 = vlaneseq
      %v1641 = vshrl.u32 %v1640, 7
      %v1642 = vsub.s32 6, %v1641
      %v1643 = vrot.slane %v1500, %v1642
      %v1644 = vlaneseq
      %v1645 = vshrl.u32 %v1644, 7
      %v1646 = vsub.s32 6, %v1645
      %v1647 = vrot.slane %v1501, %v1646
      %v1648 = vmul.f32 %v1634, %v1639
      %v1649 = vmul.f32 %v1634, %v1643
      %v1650 = vmul.f32 %v1634, %v1647
      %v1651 = vadd.f32 %v1629, %v1648
      %v1652 = vadd.f32 %v1630, %v1649
      %v1653 = vadd.f32 %v1631, %v1650
      %1654 = vset.pattern.permute.xlu0 7
      %1655 = vperm.xlu0 %1654, %v1498
      %v1656 = vpop.permute.xlu0 %1655
      %v1658 = vlaneseq
      %v1659 = vshrl.u32 %v1658, 7
      %v1660 = vsub.s32 7, %v1659
      %v1661 = vrot.slane %v1499, %v1660
      %v1662 = vlaneseq
      %v1663 = vshrl.u32 %v1662, 7
      %v1664 = vsub.s32 7, %v1663
      %v1665 = vrot.slane %v1500, %v1664
      %v1666 = vlaneseq
      %v1667 = vshrl.u32 %v1666, 7
      %v1668 = vsub.s32 7, %v1667
      %v1669 = vrot.slane %v1501, %v1668
      %v1670 = vmul.f32 %v1656, %v1661
      %v1671 = vmul.f32 %v1656, %v1665
      %v1672 = vmul.f32 %v1656, %v1669
      %v1673 = vadd.f32 %v1651, %v1670
      %v1674 = vadd.f32 %v1652, %v1671
      %v1675 = vadd.f32 %v1653, %v1672
      %1676 = vset.pattern.permute.xlu0 8
      %1677 = vperm.xlu0 %1676, %v1498
      %v1678 = vpop.permute.xlu0 %1677
      %v1680 = vmul.f32 %v1678, %v1510
      %v1681 = vmul.f32 %v1678, %v1514
      %v1682 = vmul.f32 %v1678, %v1518
      %1686 = vrot.lane.b32.xlu0 %v1680, 127
      %v1687 = vpop.permute.xlu0 %1686
      %1688 = vrot.lane.b32.xlu0 %v1681, 127
      %v1689 = vpop.permute.xlu0 %1688
      %1690 = vrot.lane.b32.xlu0 %v1682, 127
      %v1691 = vpop.permute.xlu0 %1690
      %v1692 = vsel %vm638, %v1687, %v1689
      %v1693 = vsel %vm638, %v1689, %v1691
      %v1697 = vadd.f32 %v1673, %v1692
      %v1698 = vadd.f32 %v1674, %v1693
      %v1699 = vadd.f32 %v1675, %v1691
      %1700 = vset.pattern.permute.xlu0 9
      %1701 = vperm.xlu0 %1700, %v1498
      %v1702 = vpop.permute.xlu0 %1701
      %v1704 = vmul.f32 %v1702, %v1529
      %v1705 = vmul.f32 %v1702, %v1533
      %v1706 = vmul.f32 %v1702, %v1537
      %1710 = vrot.lane.b32.xlu0 %v1704, 127
      %v1711 = vpop.permute.xlu0 %1710
      %1712 = vrot.lane.b32.xlu0 %v1705, 127
      %v1713 = vpop.permute.xlu0 %1712
      %1714 = vrot.lane.b32.xlu0 %v1706, 127
      %v1715 = vpop.permute.xlu0 %1714
      %v1716 = vsel %vm638, %v1711, %v1713
      %v1717 = vsel %vm638, %v1713, %v1715
      %v1721 = vadd.f32 %v1697, %v1716
      %v1722 = vadd.f32 %v1698, %v1717
      %v1723 = vadd.f32 %v1699, %v1715
      %1724 = vset.pattern.permute.xlu0 10
      %1725 = vperm.xlu0 %1724, %v1498
      %v1726 = vpop.permute.xlu0 %1725
      %v1728 = vmul.f32 %v1726, %v1551
      %v1729 = vmul.f32 %v1726, %v1555
      %v1730 = vmul.f32 %v1726, %v1559
      %1734 = vrot.lane.b32.xlu0 %v1728, 127
      %v1735 = vpop.permute.xlu0 %1734
      %1736 = vrot.lane.b32.xlu0 %v1729, 127
      %v1737 = vpop.permute.xlu0 %1736
      %1738 = vrot.lane.b32.xlu0 %v1730, 127
      %v1739 = vpop.permute.xlu0 %1738
      %v1740 = vsel %vm638, %v1735, %v1737
      %v1741 = vsel %vm638, %v1737, %v1739
      %v1745 = vadd.f32 %v1721, %v1740
      %v1746 = vadd.f32 %v1722, %v1741
      %v1747 = vadd.f32 %v1723, %v1739
      %1748 = vset.pattern.permute.xlu0 11
      %1749 = vperm.xlu0 %1748, %v1498
      %v1750 = vpop.permute.xlu0 %1749
      %v1752 = vmul.f32 %v1750, %v1573
      %v1753 = vmul.f32 %v1750, %v1577
      %v1754 = vmul.f32 %v1750, %v1581
      %1758 = vrot.lane.b32.xlu0 %v1752, 127
      %v1759 = vpop.permute.xlu0 %1758
      %1760 = vrot.lane.b32.xlu0 %v1753, 127
      %v1761 = vpop.permute.xlu0 %1760
      %1762 = vrot.lane.b32.xlu0 %v1754, 127
      %v1763 = vpop.permute.xlu0 %1762
      %v1764 = vsel %vm638, %v1759, %v1761
      %v1765 = vsel %vm638, %v1761, %v1763
      %v1769 = vadd.f32 %v1745, %v1764
      %v1770 = vadd.f32 %v1746, %v1765
      %v1771 = vadd.f32 %v1747, %v1763
      %1772 = vset.pattern.permute.xlu0 12
      %1773 = vperm.xlu0 %1772, %v1498
      %v1774 = vpop.permute.xlu0 %1773
      %v1776 = vmul.f32 %v1774, %v1595
      %v1777 = vmul.f32 %v1774, %v1599
      %v1778 = vmul.f32 %v1774, %v1603
      %1782 = vrot.lane.b32.xlu0 %v1776, 127
      %v1783 = vpop.permute.xlu0 %1782
      %1784 = vrot.lane.b32.xlu0 %v1777, 127
      %v1785 = vpop.permute.xlu0 %1784
      %1786 = vrot.lane.b32.xlu0 %v1778, 127
      %v1787 = vpop.permute.xlu0 %1786
      %v1788 = vsel %vm638, %v1783, %v1785
      %v1789 = vsel %vm638, %v1785, %v1787
      %v1793 = vadd.f32 %v1769, %v1788
      %v1794 = vadd.f32 %v1770, %v1789
      %v1795 = vadd.f32 %v1771, %v1787
      %1796 = vset.pattern.permute.xlu0 13
      %1797 = vperm.xlu0 %1796, %v1498
      %v1798 = vpop.permute.xlu0 %1797
      %v1800 = vmul.f32 %v1798, %v1617
      %v1801 = vmul.f32 %v1798, %v1621
      %v1802 = vmul.f32 %v1798, %v1625
      %1806 = vrot.lane.b32.xlu0 %v1800, 127
      %v1807 = vpop.permute.xlu0 %1806
      %1808 = vrot.lane.b32.xlu0 %v1801, 127
      %v1809 = vpop.permute.xlu0 %1808
      %1810 = vrot.lane.b32.xlu0 %v1802, 127
      %v1811 = vpop.permute.xlu0 %1810
      %v1812 = vsel %vm638, %v1807, %v1809
      %v1813 = vsel %vm638, %v1809, %v1811
      %v1817 = vadd.f32 %v1793, %v1812
      %v1818 = vadd.f32 %v1794, %v1813
      %v1819 = vadd.f32 %v1795, %v1811
      %1820 = vset.pattern.permute.xlu0 14
      %1821 = vperm.xlu0 %1820, %v1498
      %v1822 = vpop.permute.xlu0 %1821
      %v1824 = vmul.f32 %v1822, %v1639
      %v1825 = vmul.f32 %v1822, %v1643
      %v1826 = vmul.f32 %v1822, %v1647
      %1830 = vrot.lane.b32.xlu0 %v1824, 127
      %v1831 = vpop.permute.xlu0 %1830
      %1832 = vrot.lane.b32.xlu0 %v1825, 127
      %v1833 = vpop.permute.xlu0 %1832
      %1834 = vrot.lane.b32.xlu0 %v1826, 127
      %v1835 = vpop.permute.xlu0 %1834
      %v1836 = vsel %vm638, %v1831, %v1833
      %v1837 = vsel %vm638, %v1833, %v1835
      %v1841 = vadd.f32 %v1817, %v1836
      %v1842 = vadd.f32 %v1818, %v1837
      %v1843 = vadd.f32 %v1819, %v1835
      %1844 = vset.pattern.permute.xlu0 15
      %1845 = vperm.xlu0 %1844, %v1498
      %v1846 = vpop.permute.xlu0 %1845
      %v1848 = vmul.f32 %v1846, %v1661
      %v1849 = vmul.f32 %v1846, %v1665
      %v1850 = vmul.f32 %v1846, %v1669
      %1854 = vrot.lane.b32.xlu0 %v1848, 127
      %v1855 = vpop.permute.xlu0 %1854
      %1856 = vrot.lane.b32.xlu0 %v1849, 127
      %v1857 = vpop.permute.xlu0 %1856
      %1858 = vrot.lane.b32.xlu0 %v1850, 127
      %v1859 = vpop.permute.xlu0 %1858
      %v1860 = vsel %vm638, %v1855, %v1857
      %v1861 = vsel %vm638, %v1857, %v1859
      %v1865 = vadd.f32 %v1841, %v1860
      %v1866 = vadd.f32 %v1842, %v1861
      %v1867 = vadd.f32 %v1843, %v1859
      %1868 = vset.pattern.permute.xlu0 16
      %1869 = vperm.xlu0 %1868, %v1498
      %v1870 = vpop.permute.xlu0 %1869
      %v1872 = vmul.f32 %v1870, %v1510
      %v1873 = vmul.f32 %v1870, %v1514
      %v1874 = vmul.f32 %v1870, %v1518
      %1878 = vrot.lane.b32.xlu0 %v1872, 126
      %v1879 = vpop.permute.xlu0 %1878
      %1880 = vrot.lane.b32.xlu0 %v1873, 126
      %v1881 = vpop.permute.xlu0 %1880
      %1882 = vrot.lane.b32.xlu0 %v1874, 126
      %v1883 = vpop.permute.xlu0 %1882
      %v1884 = vsel %vm808, %v1879, %v1881
      %v1885 = vsel %vm808, %v1881, %v1883
      %v1889 = vadd.f32 %v1865, %v1884
      %v1890 = vadd.f32 %v1866, %v1885
      %v1891 = vadd.f32 %v1867, %v1883
      %1892 = vset.pattern.permute.xlu0 17
      %1893 = vperm.xlu0 %1892, %v1498
      %v1894 = vpop.permute.xlu0 %1893
      %v1896 = vmul.f32 %v1894, %v1529
      %v1897 = vmul.f32 %v1894, %v1533
      %v1898 = vmul.f32 %v1894, %v1537
      %1902 = vrot.lane.b32.xlu0 %v1896, 126
      %v1903 = vpop.permute.xlu0 %1902
      %1904 = vrot.lane.b32.xlu0 %v1897, 126
      %v1905 = vpop.permute.xlu0 %1904
      %1906 = vrot.lane.b32.xlu0 %v1898, 126
      %v1907 = vpop.permute.xlu0 %1906
      %v1908 = vsel %vm808, %v1903, %v1905
      %v1909 = vsel %vm808, %v1905, %v1907
      %v1913 = vadd.f32 %v1889, %v1908
      %v1914 = vadd.f32 %v1890, %v1909
      %v1915 = vadd.f32 %v1891, %v1907
      %1916 = vset.pattern.permute.xlu0 18
      %1917 = vperm.xlu0 %1916, %v1498
      %v1918 = vpop.permute.xlu0 %1917
      %v1920 = vmul.f32 %v1918, %v1551
      %v1921 = vmul.f32 %v1918, %v1555
      %v1922 = vmul.f32 %v1918, %v1559
      %1926 = vrot.lane.b32.xlu0 %v1920, 126
      %v1927 = vpop.permute.xlu0 %1926
      %1928 = vrot.lane.b32.xlu0 %v1921, 126
      %v1929 = vpop.permute.xlu0 %1928
      %1930 = vrot.lane.b32.xlu0 %v1922, 126
      %v1931 = vpop.permute.xlu0 %1930
      %v1932 = vsel %vm808, %v1927, %v1929
      %v1933 = vsel %vm808, %v1929, %v1931
      %v1937 = vadd.f32 %v1913, %v1932
      %v1938 = vadd.f32 %v1914, %v1933
      %v1939 = vadd.f32 %v1915, %v1931
      %1940 = vset.pattern.permute.xlu0 19
      %1941 = vperm.xlu0 %1940, %v1498
      %v1942 = vpop.permute.xlu0 %1941
      %v1944 = vmul.f32 %v1942, %v1573
      %v1945 = vmul.f32 %v1942, %v1577
      %v1946 = vmul.f32 %v1942, %v1581
      %1950 = vrot.lane.b32.xlu0 %v1944, 126
      %v1951 = vpop.permute.xlu0 %1950
      %1952 = vrot.lane.b32.xlu0 %v1945, 126
      %v1953 = vpop.permute.xlu0 %1952
      %1954 = vrot.lane.b32.xlu0 %v1946, 126
      %v1955 = vpop.permute.xlu0 %1954
      %v1956 = vsel %vm808, %v1951, %v1953
      %v1957 = vsel %vm808, %v1953, %v1955
      %v1961 = vadd.f32 %v1937, %v1956
      %v1962 = vadd.f32 %v1938, %v1957
      %v1963 = vadd.f32 %v1939, %v1955
      %1964 = vset.pattern.permute.xlu0 20
      %1965 = vperm.xlu0 %1964, %v1498
      %v1966 = vpop.permute.xlu0 %1965
      %v1968 = vmul.f32 %v1966, %v1595
      %v1969 = vmul.f32 %v1966, %v1599
      %v1970 = vmul.f32 %v1966, %v1603
      %1974 = vrot.lane.b32.xlu0 %v1968, 126
      %v1975 = vpop.permute.xlu0 %1974
      %1976 = vrot.lane.b32.xlu0 %v1969, 126
      %v1977 = vpop.permute.xlu0 %1976
      %1978 = vrot.lane.b32.xlu0 %v1970, 126
      %v1979 = vpop.permute.xlu0 %1978
      %v1980 = vsel %vm808, %v1975, %v1977
      %v1981 = vsel %vm808, %v1977, %v1979
      %v1985 = vadd.f32 %v1961, %v1980
      %v1986 = vadd.f32 %v1962, %v1981
      %v1987 = vadd.f32 %v1963, %v1979
      %1988 = vset.pattern.permute.xlu0 21
      %1989 = vperm.xlu0 %1988, %v1498
      %v1990 = vpop.permute.xlu0 %1989
      %v1992 = vmul.f32 %v1990, %v1617
      %v1993 = vmul.f32 %v1990, %v1621
      %v1994 = vmul.f32 %v1990, %v1625
      %1998 = vrot.lane.b32.xlu0 %v1992, 126
      %v1999 = vpop.permute.xlu0 %1998
      %2000 = vrot.lane.b32.xlu0 %v1993, 126
      %v2001 = vpop.permute.xlu0 %2000
      %2002 = vrot.lane.b32.xlu0 %v1994, 126
      %v2003 = vpop.permute.xlu0 %2002
      %v2004 = vsel %vm808, %v1999, %v2001
      %v2005 = vsel %vm808, %v2001, %v2003
      %v2009 = vadd.f32 %v1985, %v2004
      %v2010 = vadd.f32 %v1986, %v2005
      %v2011 = vadd.f32 %v1987, %v2003
      %2012 = vset.pattern.permute.xlu0 22
      %2013 = vperm.xlu0 %2012, %v1498
      %v2014 = vpop.permute.xlu0 %2013
      %v2016 = vmul.f32 %v2014, %v1639
      %v2017 = vmul.f32 %v2014, %v1643
      %v2018 = vmul.f32 %v2014, %v1647
      %2022 = vrot.lane.b32.xlu0 %v2016, 126
      %v2023 = vpop.permute.xlu0 %2022
      %2024 = vrot.lane.b32.xlu0 %v2017, 126
      %v2025 = vpop.permute.xlu0 %2024
      %2026 = vrot.lane.b32.xlu0 %v2018, 126
      %v2027 = vpop.permute.xlu0 %2026
      %v2028 = vsel %vm808, %v2023, %v2025
      %v2029 = vsel %vm808, %v2025, %v2027
      %v2033 = vadd.f32 %v2009, %v2028
      %v2034 = vadd.f32 %v2010, %v2029
      %v2035 = vadd.f32 %v2011, %v2027
      %2036 = vset.pattern.permute.xlu0 23
      %2037 = vperm.xlu0 %2036, %v1498
      %v2038 = vpop.permute.xlu0 %2037
      %v2040 = vmul.f32 %v2038, %v1661
      %v2041 = vmul.f32 %v2038, %v1665
      %v2042 = vmul.f32 %v2038, %v1669
      %2046 = vrot.lane.b32.xlu0 %v2040, 126
      %v2047 = vpop.permute.xlu0 %2046
      %2048 = vrot.lane.b32.xlu0 %v2041, 126
      %v2049 = vpop.permute.xlu0 %2048
      %2050 = vrot.lane.b32.xlu0 %v2042, 126
      %v2051 = vpop.permute.xlu0 %2050
      %v2052 = vsel %vm808, %v2047, %v2049
      %v2053 = vsel %vm808, %v2049, %v2051
      %v2057 = vadd.f32 %v2033, %v2052
      %v2058 = vadd.f32 %v2034, %v2053
      %v2059 = vadd.f32 %v2035, %v2051
      %2060 = vset.pattern.permute.xlu0 24
      %2061 = vperm.xlu0 %2060, %v1498
      %v2062 = vpop.permute.xlu0 %2061
      %v2064 = vmul.f32 %v2062, %v1510
      %v2065 = vmul.f32 %v2062, %v1514
      %v2066 = vmul.f32 %v2062, %v1518
      %2070 = vrot.lane.b32.xlu0 %v2064, 118
      %v2071 = vpop.permute.xlu0 %2070
      %2072 = vrot.lane.b32.xlu0 %v2065, 118
      %v2073 = vpop.permute.xlu0 %2072
      %2074 = vrot.lane.b32.xlu0 %v2066, 118
      %v2075 = vpop.permute.xlu0 %2074
      %v2076 = vsel %vm897, %v2071, %v2073
      %v2077 = vsel %vm897, %v2073, %v2075
      %v2081 = vadd.f32 %v2057, %v2076
      %v2082 = vadd.f32 %v2058, %v2077
      %v2083 = vadd.f32 %v2059, %v2075
      %2084 = vset.pattern.permute.xlu0 25
      %2085 = vperm.xlu0 %2084, %v1498
      %v2086 = vpop.permute.xlu0 %2085
      %v2088 = vmul.f32 %v2086, %v1529
      %v2089 = vmul.f32 %v2086, %v1533
      %v2090 = vmul.f32 %v2086, %v1537
      %2094 = vrot.lane.b32.xlu0 %v2088, 118
      %v2095 = vpop.permute.xlu0 %2094
      %2096 = vrot.lane.b32.xlu0 %v2089, 118
      %v2097 = vpop.permute.xlu0 %2096
      %2098 = vrot.lane.b32.xlu0 %v2090, 118
      %v2099 = vpop.permute.xlu0 %2098
      %v2100 = vsel %vm897, %v2095, %v2097
      %v2101 = vsel %vm897, %v2097, %v2099
      %v2105 = vadd.f32 %v2081, %v2100
      %v2106 = vadd.f32 %v2082, %v2101
      %v2107 = vadd.f32 %v2083, %v2099
      %2108 = vset.pattern.permute.xlu0 26
      %2109 = vperm.xlu0 %2108, %v1498
      %v2110 = vpop.permute.xlu0 %2109
      %v2112 = vmul.f32 %v2110, %v1551
      %v2113 = vmul.f32 %v2110, %v1555
      %v2114 = vmul.f32 %v2110, %v1559
      %2118 = vrot.lane.b32.xlu0 %v2112, 118
      %v2119 = vpop.permute.xlu0 %2118
      %2120 = vrot.lane.b32.xlu0 %v2113, 118
      %v2121 = vpop.permute.xlu0 %2120
      %2122 = vrot.lane.b32.xlu0 %v2114, 118
      %v2123 = vpop.permute.xlu0 %2122
      %v2124 = vsel %vm897, %v2119, %v2121
      %v2125 = vsel %vm897, %v2121, %v2123
      %v2129 = vadd.f32 %v2105, %v2124
      %v2130 = vadd.f32 %v2106, %v2125
      %v2131 = vadd.f32 %v2107, %v2123
      %2132 = vset.pattern.permute.xlu0 27
      %2133 = vperm.xlu0 %2132, %v1498
      %v2134 = vpop.permute.xlu0 %2133
      %v2136 = vmul.f32 %v2134, %v1573
      %v2137 = vmul.f32 %v2134, %v1577
      %v2138 = vmul.f32 %v2134, %v1581
      %2142 = vrot.lane.b32.xlu0 %v2136, 118
      %v2143 = vpop.permute.xlu0 %2142
      %2144 = vrot.lane.b32.xlu0 %v2137, 118
      %v2145 = vpop.permute.xlu0 %2144
      %2146 = vrot.lane.b32.xlu0 %v2138, 118
      %v2147 = vpop.permute.xlu0 %2146
      %v2148 = vsel %vm897, %v2143, %v2145
      %v2149 = vsel %vm897, %v2145, %v2147
      %v2153 = vadd.f32 %v2129, %v2148
      %v2154 = vadd.f32 %v2130, %v2149
      %v2155 = vadd.f32 %v2131, %v2147
      %2156 = vset.pattern.permute.xlu0 28
      %2157 = vperm.xlu0 %2156, %v1498
      %v2158 = vpop.permute.xlu0 %2157
      %v2160 = vmul.f32 %v2158, %v1595
      %v2161 = vmul.f32 %v2158, %v1599
      %v2162 = vmul.f32 %v2158, %v1603
      %2166 = vrot.lane.b32.xlu0 %v2160, 118
      %v2167 = vpop.permute.xlu0 %2166
      %2168 = vrot.lane.b32.xlu0 %v2161, 118
      %v2169 = vpop.permute.xlu0 %2168
      %2170 = vrot.lane.b32.xlu0 %v2162, 118
      %v2171 = vpop.permute.xlu0 %2170
      %v2172 = vsel %vm897, %v2167, %v2169
      %v2173 = vsel %vm897, %v2169, %v2171
      %v2177 = vadd.f32 %v2153, %v2172
      %v2178 = vadd.f32 %v2154, %v2173
      %v2179 = vadd.f32 %v2155, %v2171
      %2180 = vset.pattern.permute.xlu0 29
      %2181 = vperm.xlu0 %2180, %v1498
      %v2182 = vpop.permute.xlu0 %2181
      %v2184 = vmul.f32 %v2182, %v1617
      %v2185 = vmul.f32 %v2182, %v1621
      %v2186 = vmul.f32 %v2182, %v1625
      %2190 = vrot.lane.b32.xlu0 %v2184, 118
      %v2191 = vpop.permute.xlu0 %2190
      %2192 = vrot.lane.b32.xlu0 %v2185, 118
      %v2193 = vpop.permute.xlu0 %2192
      %2194 = vrot.lane.b32.xlu0 %v2186, 118
      %v2195 = vpop.permute.xlu0 %2194
      %v2196 = vsel %vm897, %v2191, %v2193
      %v2197 = vsel %vm897, %v2193, %v2195
      %v2201 = vadd.f32 %v2177, %v2196
      %v2202 = vadd.f32 %v2178, %v2197
      %v2203 = vadd.f32 %v2179, %v2195
      %2204 = vset.pattern.permute.xlu0 30
      %2205 = vperm.xlu0 %2204, %v1498
      %v2206 = vpop.permute.xlu0 %2205
      %v2208 = vmul.f32 %v2206, %v1639
      %v2209 = vmul.f32 %v2206, %v1643
      %v2210 = vmul.f32 %v2206, %v1647
      %2214 = vrot.lane.b32.xlu0 %v2208, 118
      %v2215 = vpop.permute.xlu0 %2214
      %2216 = vrot.lane.b32.xlu0 %v2209, 118
      %v2217 = vpop.permute.xlu0 %2216
      %2218 = vrot.lane.b32.xlu0 %v2210, 118
      %v2219 = vpop.permute.xlu0 %2218
      %v2220 = vsel %vm897, %v2215, %v2217
      %v2221 = vsel %vm897, %v2217, %v2219
      %v2225 = vadd.f32 %v2201, %v2220
      %v2226 = vadd.f32 %v2202, %v2221
      %v2227 = vadd.f32 %v2203, %v2219
      %2228 = vset.pattern.permute.xlu0 31
      %2229 = vperm.xlu0 %2228, %v1498
      %v2230 = vpop.permute.xlu0 %2229
      %v2232 = vmul.f32 %v2230, %v1661
      %v2233 = vmul.f32 %v2230, %v1665
      %v2234 = vmul.f32 %v2230, %v1669
      %2238 = vrot.lane.b32.xlu0 %v2232, 118
      %v2239 = vpop.permute.xlu0 %2238
      %2240 = vrot.lane.b32.xlu0 %v2233, 118
      %v2241 = vpop.permute.xlu0 %2240
      %2242 = vrot.lane.b32.xlu0 %v2234, 118
      %v2243 = vpop.permute.xlu0 %2242
      %v2244 = vsel %vm897, %v2239, %v2241
      %v2245 = vsel %vm897, %v2241, %v2243
      %v2249 = vadd.f32 %v2225, %v2244
      %v2250 = vadd.f32 %v2226, %v2245
      %v2251 = vadd.f32 %v2227, %v2243
      %2252 = vset.pattern.permute.xlu0 32
      %2253 = vperm.xlu0 %2252, %v1498
      %v2254 = vpop.permute.xlu0 %2253
      %v2256 = vmul.f32 %v2254, %v1514
      %v2257 = vmul.f32 %v2254, %v1518
      %2260 = vrot.lane.b32.xlu0 %v2256, 117
      %v2261 = vpop.permute.xlu0 %2260
      %2262 = vrot.lane.b32.xlu0 %v2257, 117
      %v2263 = vpop.permute.xlu0 %2262
      %v2264 = vsel %vm986, %v2261, %v2263
      %v2268 = vadd.f32 %v2249, %v2261
      %v2269 = vadd.f32 %v2250, %v2264
      %v2270 = vadd.f32 %v2251, %v2263
      %2271 = vset.pattern.permute.xlu0 33
      %2272 = vperm.xlu0 %2271, %v1498
      %v2273 = vpop.permute.xlu0 %2272
      %v2275 = vmul.f32 %v2273, %v1533
      %v2276 = vmul.f32 %v2273, %v1537
      %2279 = vrot.lane.b32.xlu0 %v2275, 117
      %v2280 = vpop.permute.xlu0 %2279
      %2281 = vrot.lane.b32.xlu0 %v2276, 117
      %v2282 = vpop.permute.xlu0 %2281
      %v2283 = vsel %vm986, %v2280, %v2282
      %v2287 = vadd.f32 %v2268, %v2280
      %v2288 = vadd.f32 %v2269, %v2283
      %v2289 = vadd.f32 %v2270, %v2282
      %2290 = vset.pattern.permute.xlu0 34
      %2291 = vperm.xlu0 %2290, %v1498
      %v2292 = vpop.permute.xlu0 %2291
      %v2294 = vmul.f32 %v2292, %v1555
      %v2295 = vmul.f32 %v2292, %v1559
      %2298 = vrot.lane.b32.xlu0 %v2294, 117
      %v2299 = vpop.permute.xlu0 %2298
      %2300 = vrot.lane.b32.xlu0 %v2295, 117
      %v2301 = vpop.permute.xlu0 %2300
      %v2302 = vsel %vm986, %v2299, %v2301
      %v2306 = vadd.f32 %v2287, %v2299
      %v2307 = vadd.f32 %v2288, %v2302
      %v2308 = vadd.f32 %v2289, %v2301
      %2309 = vset.pattern.permute.xlu0 35
      %2310 = vperm.xlu0 %2309, %v1498
      %v2311 = vpop.permute.xlu0 %2310
      %v2313 = vmul.f32 %v2311, %v1577
      %v2314 = vmul.f32 %v2311, %v1581
      %2317 = vrot.lane.b32.xlu0 %v2313, 117
      %v2318 = vpop.permute.xlu0 %2317
      %2319 = vrot.lane.b32.xlu0 %v2314, 117
      %v2320 = vpop.permute.xlu0 %2319
      %v2321 = vsel %vm986, %v2318, %v2320
      %v2325 = vadd.f32 %v2306, %v2318
      %v2326 = vadd.f32 %v2307, %v2321
      %v2327 = vadd.f32 %v2308, %v2320
      %2328 = vset.pattern.permute.xlu0 36
      %2329 = vperm.xlu0 %2328, %v1498
      %v2330 = vpop.permute.xlu0 %2329
      %v2332 = vmul.f32 %v2330, %v1599
      %v2333 = vmul.f32 %v2330, %v1603
      %2336 = vrot.lane.b32.xlu0 %v2332, 117
      %v2337 = vpop.permute.xlu0 %2336
      %2338 = vrot.lane.b32.xlu0 %v2333, 117
      %v2339 = vpop.permute.xlu0 %2338
      %v2340 = vsel %vm986, %v2337, %v2339
      %v2344 = vadd.f32 %v2325, %v2337
      %v2345 = vadd.f32 %v2326, %v2340
      %v2346 = vadd.f32 %v2327, %v2339
      %2347 = vset.pattern.permute.xlu0 37
      %2348 = vperm.xlu0 %2347, %v1498
      %v2349 = vpop.permute.xlu0 %2348
      %v2351 = vmul.f32 %v2349, %v1621
      %v2352 = vmul.f32 %v2349, %v1625
      %2355 = vrot.lane.b32.xlu0 %v2351, 117
      %v2356 = vpop.permute.xlu0 %2355
      %2357 = vrot.lane.b32.xlu0 %v2352, 117
      %v2358 = vpop.permute.xlu0 %2357
      %v2359 = vsel %vm986, %v2356, %v2358
      %v2363 = vadd.f32 %v2344, %v2356
      %v2364 = vadd.f32 %v2345, %v2359
      %v2365 = vadd.f32 %v2346, %v2358
      %2366 = vset.pattern.permute.xlu0 38
      %2367 = vperm.xlu0 %2366, %v1498
      %v2368 = vpop.permute.xlu0 %2367
      %v2370 = vmul.f32 %v2368, %v1643
      %v2371 = vmul.f32 %v2368, %v1647
      %2374 = vrot.lane.b32.xlu0 %v2370, 117
      %v2375 = vpop.permute.xlu0 %2374
      %2376 = vrot.lane.b32.xlu0 %v2371, 117
      %v2377 = vpop.permute.xlu0 %2376
      %v2378 = vsel %vm986, %v2375, %v2377
      %v2382 = vadd.f32 %v2363, %v2375
      %v2383 = vadd.f32 %v2364, %v2378
      %v2384 = vadd.f32 %v2365, %v2377
      %2385 = vset.pattern.permute.xlu0 39
      %2386 = vperm.xlu0 %2385, %v1498
      %v2387 = vpop.permute.xlu0 %2386
      %v2389 = vmul.f32 %v2387, %v1665
      %v2390 = vmul.f32 %v2387, %v1669
      %2393 = vrot.lane.b32.xlu0 %v2389, 117
      %v2394 = vpop.permute.xlu0 %2393
      %2395 = vrot.lane.b32.xlu0 %v2390, 117
      %v2396 = vpop.permute.xlu0 %2395
      %v2397 = vsel %vm986, %v2394, %v2396
      %v2401 = vadd.f32 %v2382, %v2394
      %v2402 = vadd.f32 %v2383, %v2397
      %v2403 = vadd.f32 %v2384, %v2396
      %v2404 = vld [vmem:[#allocation2 + $0x8] sm:$0xff]
      %v2405 = vld [vmem:[#allocation2 + $0x10] sm:$0xff]
      %v2406 = vld [vmem:[#allocation2 + $0x18] sm:$0xff]
      %2407 = vset.pattern.permute.xlu0 40
      %2408 = vperm.xlu0 %2407, %v1498
      %v2409 = vpop.permute.xlu0 %2408
      %v2411 = vlaneseq
      %v2412 = vshrl.u32 %v2411, 7
      %v2413 = vsub.s32 0, %v2412
      %v2414 = vrot.slane %v2404, %v2413
      %v2415 = vlaneseq
      %v2416 = vshrl.u32 %v2415, 7
      %v2417 = vsub.s32 0, %v2416
      %v2418 = vrot.slane %v2405, %v2417
      %v2419 = vlaneseq
      %v2420 = vshrl.u32 %v2419, 7
      %v2421 = vsub.s32 0, %v2420
      %v2422 = vrot.slane %v2406, %v2421
      %v2423 = vmul.f32 %v2409, %v2414
      %v2424 = vmul.f32 %v2409, %v2418
      %v2425 = vmul.f32 %v2409, %v2422
      %2429 = vrot.lane.b32.xlu0 %v2423, 116
      %v2430 = vpop.permute.xlu0 %2429
      %2431 = vrot.lane.b32.xlu0 %v2424, 116
      %v2432 = vpop.permute.xlu0 %2431
      %2433 = vrot.lane.b32.xlu0 %v2425, 116
      %v2434 = vpop.permute.xlu0 %2433
      %v2435 = vsel %vm1075, %v2430, %v2432
      %v2436 = vsel %vm1075, %v2432, %v2434
      %v2440 = vadd.f32 %v2401, %v2430
      %v2441 = vadd.f32 %v2402, %v2435
      %v2442 = vadd.f32 %v2403, %v2436
      %2443 = vset.pattern.permute.xlu0 41
      %2444 = vperm.xlu0 %2443, %v1498
      %v2445 = vpop.permute.xlu0 %2444
      %v2447 = vlaneseq
      %v2448 = vshrl.u32 %v2447, 7
      %v2449 = vsub.s32 1, %v2448
      %v2450 = vrot.slane %v2404, %v2449
      %v2451 = vlaneseq
      %v2452 = vshrl.u32 %v2451, 7
      %v2453 = vsub.s32 1, %v2452
      %v2454 = vrot.slane %v2405, %v2453
      %v2455 = vlaneseq
      %v2456 = vshrl.u32 %v2455, 7
      %v2457 = vsub.s32 1, %v2456
      %v2458 = vrot.slane %v2406, %v2457
      %v2459 = vmul.f32 %v2445, %v2450
      %v2460 = vmul.f32 %v2445, %v2454
      %v2461 = vmul.f32 %v2445, %v2458
      %2465 = vrot.lane.b32.xlu0 %v2459, 116
      %v2466 = vpop.permute.xlu0 %2465
      %2467 = vrot.lane.b32.xlu0 %v2460, 116
      %v2468 = vpop.permute.xlu0 %2467
      %2469 = vrot.lane.b32.xlu0 %v2461, 116
      %v2470 = vpop.permute.xlu0 %2469
      %v2471 = vsel %vm1075, %v2466, %v2468
      %v2472 = vsel %vm1075, %v2468, %v2470
      %v2476 = vadd.f32 %v2440, %v2466
      %v2477 = vadd.f32 %v2441, %v2471
      %v2478 = vadd.f32 %v2442, %v2472
      %2479 = vset.pattern.permute.xlu0 42
      %2480 = vperm.xlu0 %2479, %v1498
      %v2481 = vpop.permute.xlu0 %2480
      %v2483 = vlaneseq
      %v2484 = vshrl.u32 %v2483, 7
      %v2485 = vsub.s32 2, %v2484
      %v2486 = vrot.slane %v2404, %v2485
      %v2487 = vlaneseq
      %v2488 = vshrl.u32 %v2487, 7
      %v2489 = vsub.s32 2, %v2488
      %v2490 = vrot.slane %v2405, %v2489
      %v2491 = vlaneseq
      %v2492 = vshrl.u32 %v2491, 7
      %v2493 = vsub.s32 2, %v2492
      %v2494 = vrot.slane %v2406, %v2493
      %v2495 = vmul.f32 %v2481, %v2486
      %v2496 = vmul.f32 %v2481, %v2490
      %v2497 = vmul.f32 %v2481, %v2494
      %2501 = vrot.lane.b32.xlu0 %v2495, 116
      %v2502 = vpop.permute.xlu0 %2501
      %2503 = vrot.lane.b32.xlu0 %v2496, 116
      %v2504 = vpop.permute.xlu0 %2503
      %2505 = vrot.lane.b32.xlu0 %v2497, 116
      %v2506 = vpop.permute.xlu0 %2505
      %v2507 = vsel %vm1075, %v2502, %v2504
      %v2508 = vsel %vm1075, %v2504, %v2506
      %v2512 = vadd.f32 %v2476, %v2502
      %v2513 = vadd.f32 %v2477, %v2507
      %v2514 = vadd.f32 %v2478, %v2508
      %2515 = vset.pattern.permute.xlu0 43
      %2516 = vperm.xlu0 %2515, %v1498
      %v2517 = vpop.permute.xlu0 %2516
      %v2519 = vlaneseq
      %v2520 = vshrl.u32 %v2519, 7
      %v2521 = vsub.s32 3, %v2520
      %v2522 = vrot.slane %v2404, %v2521
      %v2523 = vlaneseq
      %v2524 = vshrl.u32 %v2523, 7
      %v2525 = vsub.s32 3, %v2524
      %v2526 = vrot.slane %v2405, %v2525
      %v2527 = vlaneseq
      %v2528 = vshrl.u32 %v2527, 7
      %v2529 = vsub.s32 3, %v2528
      %v2530 = vrot.slane %v2406, %v2529
      %v2531 = vmul.f32 %v2517, %v2522
      %v2532 = vmul.f32 %v2517, %v2526
      %v2533 = vmul.f32 %v2517, %v2530
      %2537 = vrot.lane.b32.xlu0 %v2531, 116
      %v2538 = vpop.permute.xlu0 %2537
      %2539 = vrot.lane.b32.xlu0 %v2532, 116
      %v2540 = vpop.permute.xlu0 %2539
      %2541 = vrot.lane.b32.xlu0 %v2533, 116
      %v2542 = vpop.permute.xlu0 %2541
      %v2543 = vsel %vm1075, %v2538, %v2540
      %v2544 = vsel %vm1075, %v2540, %v2542
      %v2548 = vadd.f32 %v2512, %v2538
      %v2549 = vadd.f32 %v2513, %v2543
      %v2550 = vadd.f32 %v2514, %v2544
      %2551 = vset.pattern.permute.xlu0 44
      %2552 = vperm.xlu0 %2551, %v1498
      %v2553 = vpop.permute.xlu0 %2552
      %v2555 = vlaneseq
      %v2556 = vshrl.u32 %v2555, 7
      %v2557 = vsub.s32 4, %v2556
      %v2558 = vrot.slane %v2404, %v2557
      %v2559 = vlaneseq
      %v2560 = vshrl.u32 %v2559, 7
      %v2561 = vsub.s32 4, %v2560
      %v2562 = vrot.slane %v2405, %v2561
      %v2563 = vlaneseq
      %v2564 = vshrl.u32 %v2563, 7
      %v2565 = vsub.s32 4, %v2564
      %v2566 = vrot.slane %v2406, %v2565
      %v2567 = vmul.f32 %v2553, %v2558
      %v2568 = vmul.f32 %v2553, %v2562
      %v2569 = vmul.f32 %v2553, %v2566
      %2573 = vrot.lane.b32.xlu0 %v2567, 116
      %v2574 = vpop.permute.xlu0 %2573
      %2575 = vrot.lane.b32.xlu0 %v2568, 116
      %v2576 = vpop.permute.xlu0 %2575
      %2577 = vrot.lane.b32.xlu0 %v2569, 116
      %v2578 = vpop.permute.xlu0 %2577
      %v2579 = vsel %vm1075, %v2574, %v2576
      %v2580 = vsel %vm1075, %v2576, %v2578
      %v2584 = vadd.f32 %v2548, %v2574
      %v2585 = vadd.f32 %v2549, %v2579
      %v2586 = vadd.f32 %v2550, %v2580
      %2587 = vset.pattern.permute.xlu0 45
      %2588 = vperm.xlu0 %2587, %v1498
      %v2589 = vpop.permute.xlu0 %2588
      %v2591 = vlaneseq
      %v2592 = vshrl.u32 %v2591, 7
      %v2593 = vsub.s32 5, %v2592
      %v2594 = vrot.slane %v2404, %v2593
      %v2595 = vlaneseq
      %v2596 = vshrl.u32 %v2595, 7
      %v2597 = vsub.s32 5, %v2596
      %v2598 = vrot.slane %v2405, %v2597
      %v2599 = vlaneseq
      %v2600 = vshrl.u32 %v2599, 7
      %v2601 = vsub.s32 5, %v2600
      %v2602 = vrot.slane %v2406, %v2601
      %v2603 = vmul.f32 %v2589, %v2594
      %v2604 = vmul.f32 %v2589, %v2598
      %v2605 = vmul.f32 %v2589, %v2602
      %2609 = vrot.lane.b32.xlu0 %v2603, 116
      %v2610 = vpop.permute.xlu0 %2609
      %2611 = vrot.lane.b32.xlu0 %v2604, 116
      %v2612 = vpop.permute.xlu0 %2611
      %2613 = vrot.lane.b32.xlu0 %v2605, 116
      %v2614 = vpop.permute.xlu0 %2613
      %v2615 = vsel %vm1075, %v2610, %v2612
      %v2616 = vsel %vm1075, %v2612, %v2614
      %v2620 = vadd.f32 %v2584, %v2610
      %v2621 = vadd.f32 %v2585, %v2615
      %v2622 = vadd.f32 %v2586, %v2616
      %2623 = vset.pattern.permute.xlu0 46
      %2624 = vperm.xlu0 %2623, %v1498
      %v2625 = vpop.permute.xlu0 %2624
      %v2627 = vlaneseq
      %v2628 = vshrl.u32 %v2627, 7
      %v2629 = vsub.s32 6, %v2628
      %v2630 = vrot.slane %v2404, %v2629
      %v2631 = vlaneseq
      %v2632 = vshrl.u32 %v2631, 7
      %v2633 = vsub.s32 6, %v2632
      %v2634 = vrot.slane %v2405, %v2633
      %v2635 = vlaneseq
      %v2636 = vshrl.u32 %v2635, 7
      %v2637 = vsub.s32 6, %v2636
      %v2638 = vrot.slane %v2406, %v2637
      %v2639 = vmul.f32 %v2625, %v2630
      %v2640 = vmul.f32 %v2625, %v2634
      %v2641 = vmul.f32 %v2625, %v2638
      %2645 = vrot.lane.b32.xlu0 %v2639, 116
      %v2646 = vpop.permute.xlu0 %2645
      %2647 = vrot.lane.b32.xlu0 %v2640, 116
      %v2648 = vpop.permute.xlu0 %2647
      %2649 = vrot.lane.b32.xlu0 %v2641, 116
      %v2650 = vpop.permute.xlu0 %2649
      %v2651 = vsel %vm1075, %v2646, %v2648
      %v2652 = vsel %vm1075, %v2648, %v2650
      %v2656 = vadd.f32 %v2620, %v2646
      %v2657 = vadd.f32 %v2621, %v2651
      %v2658 = vadd.f32 %v2622, %v2652
      %2659 = vset.pattern.permute.xlu0 47
      %2660 = vperm.xlu0 %2659, %v1498
      %v2661 = vpop.permute.xlu0 %2660
      %v2663 = vlaneseq
      %v2664 = vshrl.u32 %v2663, 7
      %v2665 = vsub.s32 7, %v2664
      %v2666 = vrot.slane %v2404, %v2665
      %v2667 = vlaneseq
      %v2668 = vshrl.u32 %v2667, 7
      %v2669 = vsub.s32 7, %v2668
      %v2670 = vrot.slane %v2405, %v2669
      %v2671 = vlaneseq
      %v2672 = vshrl.u32 %v2671, 7
      %v2673 = vsub.s32 7, %v2672
      %v2674 = vrot.slane %v2406, %v2673
      %v2675 = vmul.f32 %v2661, %v2666
      %v2676 = vmul.f32 %v2661, %v2670
      %v2677 = vmul.f32 %v2661, %v2674
      %2681 = vrot.lane.b32.xlu0 %v2675, 116
      %v2682 = vpop.permute.xlu0 %2681
      %2683 = vrot.lane.b32.xlu0 %v2676, 116
      %v2684 = vpop.permute.xlu0 %2683
      %2685 = vrot.lane.b32.xlu0 %v2677, 116
      %v2686 = vpop.permute.xlu0 %2685
      %v2687 = vsel %vm1075, %v2682, %v2684
      %v2688 = vsel %vm1075, %v2684, %v2686
      %v2692 = vadd.f32 %v2656, %v2682
      %v2693 = vadd.f32 %v2657, %v2687
      %v2694 = vadd.f32 %v2658, %v2688
      %2695 = vset.pattern.permute.xlu0 48
      %2696 = vperm.xlu0 %2695, %v1498
      %v2697 = vpop.permute.xlu0 %2696
      %v2699 = vmul.f32 %v2697, %v2414
      %v2700 = vmul.f32 %v2697, %v2418
      %v2701 = vmul.f32 %v2697, %v2422
      %2705 = vrot.lane.b32.xlu0 %v2699, 108
      %v2706 = vpop.permute.xlu0 %2705
      %2707 = vrot.lane.b32.xlu0 %v2700, 108
      %v2708 = vpop.permute.xlu0 %2707
      %2709 = vrot.lane.b32.xlu0 %v2701, 108
      %v2710 = vpop.permute.xlu0 %2709
      %v2711 = vsel %vm1164, %v2706, %v2708
      %v2712 = vsel %vm1164, %v2708, %v2710
      %v2716 = vadd.f32 %v2692, %v2706
      %v2717 = vadd.f32 %v2693, %v2711
      %v2718 = vadd.f32 %v2694, %v2712
      %2719 = vset.pattern.permute.xlu0 49
      %2720 = vperm.xlu0 %2719, %v1498
      %v2721 = vpop.permute.xlu0 %2720
      %v2723 = vmul.f32 %v2721, %v2450
      %v2724 = vmul.f32 %v2721, %v2454
      %v2725 = vmul.f32 %v2721, %v2458
      %2729 = vrot.lane.b32.xlu0 %v2723, 108
      %v2730 = vpop.permute.xlu0 %2729
      %2731 = vrot.lane.b32.xlu0 %v2724, 108
      %v2732 = vpop.permute.xlu0 %2731
      %2733 = vrot.lane.b32.xlu0 %v2725, 108
      %v2734 = vpop.permute.xlu0 %2733
      %v2735 = vsel %vm1164, %v2730, %v2732
      %v2736 = vsel %vm1164, %v2732, %v2734
      %v2740 = vadd.f32 %v2716, %v2730
      %v2741 = vadd.f32 %v2717, %v2735
      %v2742 = vadd.f32 %v2718, %v2736
      %2743 = vset.pattern.permute.xlu0 50
      %2744 = vperm.xlu0 %2743, %v1498
      %v2745 = vpop.permute.xlu0 %2744
      %v2747 = vmul.f32 %v2745, %v2486
      %v2748 = vmul.f32 %v2745, %v2490
      %v2749 = vmul.f32 %v2745, %v2494
      %2753 = vrot.lane.b32.xlu0 %v2747, 108
      %v2754 = vpop.permute.xlu0 %2753
      %2755 = vrot.lane.b32.xlu0 %v2748, 108
      %v2756 = vpop.permute.xlu0 %2755
      %2757 = vrot.lane.b32.xlu0 %v2749, 108
      %v2758 = vpop.permute.xlu0 %2757
      %v2759 = vsel %vm1164, %v2754, %v2756
      %v2760 = vsel %vm1164, %v2756, %v2758
      %v2764 = vadd.f32 %v2740, %v2754
      %v2765 = vadd.f32 %v2741, %v2759
      %v2766 = vadd.f32 %v2742, %v2760
      %2767 = vset.pattern.permute.xlu0 51
      %2768 = vperm.xlu0 %2767, %v1498
      %v2769 = vpop.permute.xlu0 %2768
      %v2771 = vmul.f32 %v2769, %v2522
      %v2772 = vmul.f32 %v2769, %v2526
      %v2773 = vmul.f32 %v2769, %v2530
      %2777 = vrot.lane.b32.xlu0 %v2771, 108
      %v2778 = vpop.permute.xlu0 %2777
      %2779 = vrot.lane.b32.xlu0 %v2772, 108
      %v2780 = vpop.permute.xlu0 %2779
      %2781 = vrot.lane.b32.xlu0 %v2773, 108
      %v2782 = vpop.permute.xlu0 %2781
      %v2783 = vsel %vm1164, %v2778, %v2780
      %v2784 = vsel %vm1164, %v2780, %v2782
      %v2788 = vadd.f32 %v2764, %v2778
      %v2789 = vadd.f32 %v2765, %v2783
      %v2790 = vadd.f32 %v2766, %v2784
      %2791 = vset.pattern.permute.xlu0 52
      %2792 = vperm.xlu0 %2791, %v1498
      %v2793 = vpop.permute.xlu0 %2792
      %v2795 = vmul.f32 %v2793, %v2558
      %v2796 = vmul.f32 %v2793, %v2562
      %v2797 = vmul.f32 %v2793, %v2566
      %2801 = vrot.lane.b32.xlu0 %v2795, 108
      %v2802 = vpop.permute.xlu0 %2801
      %2803 = vrot.lane.b32.xlu0 %v2796, 108
      %v2804 = vpop.permute.xlu0 %2803
      %2805 = vrot.lane.b32.xlu0 %v2797, 108
      %v2806 = vpop.permute.xlu0 %2805
      %v2807 = vsel %vm1164, %v2802, %v2804
      %v2808 = vsel %vm1164, %v2804, %v2806
      %v2812 = vadd.f32 %v2788, %v2802
      %v2813 = vadd.f32 %v2789, %v2807
      %v2814 = vadd.f32 %v2790, %v2808
      %2815 = vset.pattern.permute.xlu0 53
      %2816 = vperm.xlu0 %2815, %v1498
      %v2817 = vpop.permute.xlu0 %2816
      %v2819 = vmul.f32 %v2817, %v2594
      %v2820 = vmul.f32 %v2817, %v2598
      %v2821 = vmul.f32 %v2817, %v2602
      %2825 = vrot.lane.b32.xlu0 %v2819, 108
      %v2826 = vpop.permute.xlu0 %2825
      %2827 = vrot.lane.b32.xlu0 %v2820, 108
      %v2828 = vpop.permute.xlu0 %2827
      %2829 = vrot.lane.b32.xlu0 %v2821, 108
      %v2830 = vpop.permute.xlu0 %2829
      %v2831 = vsel %vm1164, %v2826, %v2828
      %v2832 = vsel %vm1164, %v2828, %v2830
      %v2836 = vadd.f32 %v2812, %v2826
      %v2837 = vadd.f32 %v2813, %v2831
      %v2838 = vadd.f32 %v2814, %v2832
      %2839 = vset.pattern.permute.xlu0 54
      %2840 = vperm.xlu0 %2839, %v1498
      %v2841 = vpop.permute.xlu0 %2840
      %v2843 = vmul.f32 %v2841, %v2630
      %v2844 = vmul.f32 %v2841, %v2634
      %v2845 = vmul.f32 %v2841, %v2638
      %2849 = vrot.lane.b32.xlu0 %v2843, 108
      %v2850 = vpop.permute.xlu0 %2849
      %2851 = vrot.lane.b32.xlu0 %v2844, 108
      %v2852 = vpop.permute.xlu0 %2851
      %2853 = vrot.lane.b32.xlu0 %v2845, 108
      %v2854 = vpop.permute.xlu0 %2853
      %v2855 = vsel %vm1164, %v2850, %v2852
      %v2856 = vsel %vm1164, %v2852, %v2854
      %v2860 = vadd.f32 %v2836, %v2850
      %v2861 = vadd.f32 %v2837, %v2855
      %v2862 = vadd.f32 %v2838, %v2856
      %2863 = vset.pattern.permute.xlu0 55
      %2864 = vperm.xlu0 %2863, %v1498
      %v2865 = vpop.permute.xlu0 %2864
      %v2867 = vmul.f32 %v2865, %v2666
      %v2868 = vmul.f32 %v2865, %v2670
      %v2869 = vmul.f32 %v2865, %v2674
      %2873 = vrot.lane.b32.xlu0 %v2867, 108
      %v2874 = vpop.permute.xlu0 %2873
      %2875 = vrot.lane.b32.xlu0 %v2868, 108
      %v2876 = vpop.permute.xlu0 %2875
      %2877 = vrot.lane.b32.xlu0 %v2869, 108
      %v2878 = vpop.permute.xlu0 %2877
      %v2879 = vsel %vm1164, %v2874, %v2876
      %v2880 = vsel %vm1164, %v2876, %v2878
      %v2884 = vadd.f32 %v2860, %v2874
      %v2885 = vadd.f32 %v2861, %v2879
      %v2886 = vadd.f32 %v2862, %v2880
      %2887 = vset.pattern.permute.xlu0 56
      %2888 = vperm.xlu0 %2887, %v1498
      %v2889 = vpop.permute.xlu0 %2888
      %v2891 = vmul.f32 %v2889, %v2414
      %v2892 = vmul.f32 %v2889, %v2418
      %v2893 = vmul.f32 %v2889, %v2422
      %2897 = vrot.lane.b32.xlu0 %v2891, 107
      %v2898 = vpop.permute.xlu0 %2897
      %2899 = vrot.lane.b32.xlu0 %v2892, 107
      %v2900 = vpop.permute.xlu0 %2899
      %2901 = vrot.lane.b32.xlu0 %v2893, 107
      %v2902 = vpop.permute.xlu0 %2901
      %v2903 = vsel %vm1253, %v2898, %v2900
      %v2904 = vsel %vm1253, %v2900, %v2902
      %v2908 = vadd.f32 %v2884, %v2898
      %v2909 = vadd.f32 %v2885, %v2903
      %v2910 = vadd.f32 %v2886, %v2904
      %2911 = vset.pattern.permute.xlu0 57
      %2912 = vperm.xlu0 %2911, %v1498
      %v2913 = vpop.permute.xlu0 %2912
      %v2915 = vmul.f32 %v2913, %v2450
      %v2916 = vmul.f32 %v2913, %v2454
      %v2917 = vmul.f32 %v2913, %v2458
      %2921 = vrot.lane.b32.xlu0 %v2915, 107
      %v2922 = vpop.permute.xlu0 %2921
      %2923 = vrot.lane.b32.xlu0 %v2916, 107
      %v2924 = vpop.permute.xlu0 %2923
      %2925 = vrot.lane.b32.xlu0 %v2917, 107
      %v2926 = vpop.permute.xlu0 %2925
      %v2927 = vsel %vm1253, %v2922, %v2924
      %v2928 = vsel %vm1253, %v2924, %v2926
      %v2932 = vadd.f32 %v2908, %v2922
      %v2933 = vadd.f32 %v2909, %v2927
      %v2934 = vadd.f32 %v2910, %v2928
      %2935 = vset.pattern.permute.xlu0 58
      %2936 = vperm.xlu0 %2935, %v1498
      %v2937 = vpop.permute.xlu0 %2936
      %v2939 = vmul.f32 %v2937, %v2486
      %v2940 = vmul.f32 %v2937, %v2490
      %v2941 = vmul.f32 %v2937, %v2494
      %2945 = vrot.lane.b32.xlu0 %v2939, 107
      %v2946 = vpop.permute.xlu0 %2945
      %2947 = vrot.lane.b32.xlu0 %v2940, 107
      %v2948 = vpop.permute.xlu0 %2947
      %2949 = vrot.lane.b32.xlu0 %v2941, 107
      %v2950 = vpop.permute.xlu0 %2949
      %v2951 = vsel %vm1253, %v2946, %v2948
      %v2952 = vsel %vm1253, %v2948, %v2950
      %v2956 = vadd.f32 %v2932, %v2946
      %v2957 = vadd.f32 %v2933, %v2951
      %v2958 = vadd.f32 %v2934, %v2952
      %2959 = vset.pattern.permute.xlu0 59
      %2960 = vperm.xlu0 %2959, %v1498
      %v2961 = vpop.permute.xlu0 %2960
      %v2963 = vmul.f32 %v2961, %v2522
      %v2964 = vmul.f32 %v2961, %v2526
      %v2965 = vmul.f32 %v2961, %v2530
      %2969 = vrot.lane.b32.xlu0 %v2963, 107
      %v2970 = vpop.permute.xlu0 %2969
      %2971 = vrot.lane.b32.xlu0 %v2964, 107
      %v2972 = vpop.permute.xlu0 %2971
      %2973 = vrot.lane.b32.xlu0 %v2965, 107
      %v2974 = vpop.permute.xlu0 %2973
      %v2975 = vsel %vm1253, %v2970, %v2972
      %v2976 = vsel %vm1253, %v2972, %v2974
      %v2980 = vadd.f32 %v2956, %v2970
      %v2981 = vadd.f32 %v2957, %v2975
      %v2982 = vadd.f32 %v2958, %v2976
      %2983 = vset.pattern.permute.xlu0 60
      %2984 = vperm.xlu0 %2983, %v1498
      %v2985 = vpop.permute.xlu0 %2984
      %v2987 = vmul.f32 %v2985, %v2558
      %v2988 = vmul.f32 %v2985, %v2562
      %v2989 = vmul.f32 %v2985, %v2566
      %2993 = vrot.lane.b32.xlu0 %v2987, 107
      %v2994 = vpop.permute.xlu0 %2993
      %2995 = vrot.lane.b32.xlu0 %v2988, 107
      %v2996 = vpop.permute.xlu0 %2995
      %2997 = vrot.lane.b32.xlu0 %v2989, 107
      %v2998 = vpop.permute.xlu0 %2997
      %v2999 = vsel %vm1253, %v2994, %v2996
      %v3000 = vsel %vm1253, %v2996, %v2998
      %v3004 = vadd.f32 %v2980, %v2994
      %v3005 = vadd.f32 %v2981, %v2999
      %v3006 = vadd.f32 %v2982, %v3000
      %3007 = vset.pattern.permute.xlu0 61
      %3008 = vperm.xlu0 %3007, %v1498
      %v3009 = vpop.permute.xlu0 %3008
      %v3011 = vmul.f32 %v3009, %v2594
      %v3012 = vmul.f32 %v3009, %v2598
      %v3013 = vmul.f32 %v3009, %v2602
      %3017 = vrot.lane.b32.xlu0 %v3011, 107
      %v3018 = vpop.permute.xlu0 %3017
      %3019 = vrot.lane.b32.xlu0 %v3012, 107
      %v3020 = vpop.permute.xlu0 %3019
      %3021 = vrot.lane.b32.xlu0 %v3013, 107
      %v3022 = vpop.permute.xlu0 %3021
      %v3023 = vsel %vm1253, %v3018, %v3020
      %v3024 = vsel %vm1253, %v3020, %v3022
      %v3028 = vadd.f32 %v3004, %v3018
      %v3029 = vadd.f32 %v3005, %v3023
      %v3030 = vadd.f32 %v3006, %v3024
      %3031 = vset.pattern.permute.xlu0 62
      %3032 = vperm.xlu0 %3031, %v1498
      %v3033 = vpop.permute.xlu0 %3032
      %v3035 = vmul.f32 %v3033, %v2630
      %v3036 = vmul.f32 %v3033, %v2634
      %v3037 = vmul.f32 %v3033, %v2638
      %3041 = vrot.lane.b32.xlu0 %v3035, 107
      %v3042 = vpop.permute.xlu0 %3041
      %3043 = vrot.lane.b32.xlu0 %v3036, 107
      %v3044 = vpop.permute.xlu0 %3043
      %3045 = vrot.lane.b32.xlu0 %v3037, 107
      %v3046 = vpop.permute.xlu0 %3045
      %v3047 = vsel %vm1253, %v3042, %v3044
      %v3048 = vsel %vm1253, %v3044, %v3046
      %v3052 = vadd.f32 %v3028, %v3042
      %v3053 = vadd.f32 %v3029, %v3047
      %v3054 = vadd.f32 %v3030, %v3048
      %3055 = vset.pattern.permute.xlu0 63
      %3056 = vperm.xlu0 %3055, %v1498
      %v3057 = vpop.permute.xlu0 %3056
      %v3059 = vmul.f32 %v3057, %v2666
      %v3060 = vmul.f32 %v3057, %v2670
      %v3061 = vmul.f32 %v3057, %v2674
      %3065 = vrot.lane.b32.xlu0 %v3059, 107
      %v3066 = vpop.permute.xlu0 %3065
      %3067 = vrot.lane.b32.xlu0 %v3060, 107
      %v3068 = vpop.permute.xlu0 %3067
      %3069 = vrot.lane.b32.xlu0 %v3061, 107
      %v3070 = vpop.permute.xlu0 %3069
      %v3071 = vsel %vm1253, %v3066, %v3068
      %v3072 = vsel %vm1253, %v3068, %v3070
      %v3076 = vadd.f32 %v3052, %v3066
      %v3077 = vadd.f32 %v3053, %v3071
      %v3078 = vadd.f32 %v3054, %v3072
      %3079 = vset.pattern.permute.xlu0 64
      %3080 = vperm.xlu0 %3079, %v1498
      %v3081 = vpop.permute.xlu0 %3080
      %v3083 = vmul.f32 %v3081, %v2414
      %v3084 = vmul.f32 %v3081, %v2418
      %v3085 = vmul.f32 %v3081, %v2422
      %3089 = vrot.lane.b32.xlu0 %v3083, 106
      %v3090 = vpop.permute.xlu0 %3089
      %3091 = vrot.lane.b32.xlu0 %v3084, 106
      %v3092 = vpop.permute.xlu0 %3091
      %3093 = vrot.lane.b32.xlu0 %v3085, 106
      %v3094 = vpop.permute.xlu0 %3093
      %v3095 = vsel %vm1342, %v3090, %v3092
      %v3096 = vsel %vm1342, %v3092, %v3094
      %v3100 = vadd.f32 %v3076, %v3090
      %v3101 = vadd.f32 %v3077, %v3095
      %v3102 = vadd.f32 %v3078, %v3096
      %3103 = vset.pattern.permute.xlu0 65
      %3104 = vperm.xlu0 %3103, %v1498
      %v3105 = vpop.permute.xlu0 %3104
      %v3107 = vmul.f32 %v3105, %v2450
      %v3108 = vmul.f32 %v3105, %v2454
      %v3109 = vmul.f32 %v3105, %v2458
      %3113 = vrot.lane.b32.xlu0 %v3107, 106
      %v3114 = vpop.permute.xlu0 %3113
      %3115 = vrot.lane.b32.xlu0 %v3108, 106
      %v3116 = vpop.permute.xlu0 %3115
      %3117 = vrot.lane.b32.xlu0 %v3109, 106
      %v3118 = vpop.permute.xlu0 %3117
      %v3119 = vsel %vm1342, %v3114, %v3116
      %v3120 = vsel %vm1342, %v3116, %v3118
      %v3124 = vadd.f32 %v3100, %v3114
      %v3125 = vadd.f32 %v3101, %v3119
      %v3126 = vadd.f32 %v3102, %v3120
      %3127 = vset.pattern.permute.xlu0 66
      %3128 = vperm.xlu0 %3127, %v1498
      %v3129 = vpop.permute.xlu0 %3128
      %v3131 = vmul.f32 %v3129, %v2486
      %v3132 = vmul.f32 %v3129, %v2490
      %v3133 = vmul.f32 %v3129, %v2494
      %3137 = vrot.lane.b32.xlu0 %v3131, 106
      %v3138 = vpop.permute.xlu0 %3137
      %3139 = vrot.lane.b32.xlu0 %v3132, 106
      %v3140 = vpop.permute.xlu0 %3139
      %3141 = vrot.lane.b32.xlu0 %v3133, 106
      %v3142 = vpop.permute.xlu0 %3141
      %v3143 = vsel %vm1342, %v3138, %v3140
      %v3144 = vsel %vm1342, %v3140, %v3142
      %v3148 = vadd.f32 %v3124, %v3138
      %v3149 = vadd.f32 %v3125, %v3143
      %v3150 = vadd.f32 %v3126, %v3144
      %3151 = vset.pattern.permute.xlu0 67
      %3152 = vperm.xlu0 %3151, %v1498
      %v3153 = vpop.permute.xlu0 %3152
      %v3155 = vmul.f32 %v3153, %v2522
      %v3156 = vmul.f32 %v3153, %v2526
      %v3157 = vmul.f32 %v3153, %v2530
      %3161 = vrot.lane.b32.xlu0 %v3155, 106
      %v3162 = vpop.permute.xlu0 %3161
      %3163 = vrot.lane.b32.xlu0 %v3156, 106
      %v3164 = vpop.permute.xlu0 %3163
      %3165 = vrot.lane.b32.xlu0 %v3157, 106
      %v3166 = vpop.permute.xlu0 %3165
      %v3167 = vsel %vm1342, %v3162, %v3164
      %v3168 = vsel %vm1342, %v3164, %v3166
      %v3172 = vadd.f32 %v3148, %v3162
      %v3173 = vadd.f32 %v3149, %v3167
      %v3174 = vadd.f32 %v3150, %v3168
      %3175 = vset.pattern.permute.xlu0 68
      %3176 = vperm.xlu0 %3175, %v1498
      %v3177 = vpop.permute.xlu0 %3176
      %v3179 = vmul.f32 %v3177, %v2558
      %v3180 = vmul.f32 %v3177, %v2562
      %v3181 = vmul.f32 %v3177, %v2566
      %3185 = vrot.lane.b32.xlu0 %v3179, 106
      %v3186 = vpop.permute.xlu0 %3185
      %3187 = vrot.lane.b32.xlu0 %v3180, 106
      %v3188 = vpop.permute.xlu0 %3187
      %3189 = vrot.lane.b32.xlu0 %v3181, 106
      %v3190 = vpop.permute.xlu0 %3189
      %v3191 = vsel %vm1342, %v3186, %v3188
      %v3192 = vsel %vm1342, %v3188, %v3190
      %v3196 = vadd.f32 %v3172, %v3186
      %v3197 = vadd.f32 %v3173, %v3191
      %v3198 = vadd.f32 %v3174, %v3192
      %3199 = vset.pattern.permute.xlu0 69
      %3200 = vperm.xlu0 %3199, %v1498
      %v3201 = vpop.permute.xlu0 %3200
      %v3203 = vmul.f32 %v3201, %v2594
      %v3204 = vmul.f32 %v3201, %v2598
      %v3205 = vmul.f32 %v3201, %v2602
      %3209 = vrot.lane.b32.xlu0 %v3203, 106
      %v3210 = vpop.permute.xlu0 %3209
      %3211 = vrot.lane.b32.xlu0 %v3204, 106
      %v3212 = vpop.permute.xlu0 %3211
      %3213 = vrot.lane.b32.xlu0 %v3205, 106
      %v3214 = vpop.permute.xlu0 %3213
      %v3215 = vsel %vm1342, %v3210, %v3212
      %v3216 = vsel %vm1342, %v3212, %v3214
      %v3220 = vadd.f32 %v3196, %v3210
      %v3221 = vadd.f32 %v3197, %v3215
      %v3222 = vadd.f32 %v3198, %v3216
      %3223 = vset.pattern.permute.xlu0 70
      %3224 = vperm.xlu0 %3223, %v1498
      %v3225 = vpop.permute.xlu0 %3224
      %v3227 = vmul.f32 %v3225, %v2630
      %v3228 = vmul.f32 %v3225, %v2634
      %v3229 = vmul.f32 %v3225, %v2638
      %3233 = vrot.lane.b32.xlu0 %v3227, 106
      %v3234 = vpop.permute.xlu0 %3233
      %3235 = vrot.lane.b32.xlu0 %v3228, 106
      %v3236 = vpop.permute.xlu0 %3235
      %3237 = vrot.lane.b32.xlu0 %v3229, 106
      %v3238 = vpop.permute.xlu0 %3237
      %v3239 = vsel %vm1342, %v3234, %v3236
      %v3240 = vsel %vm1342, %v3236, %v3238
      %v3244 = vadd.f32 %v3220, %v3234
      %v3245 = vadd.f32 %v3221, %v3239
      %v3246 = vadd.f32 %v3222, %v3240
      %3247 = vset.pattern.permute.xlu0 71
      %3248 = vperm.xlu0 %3247, %v1498
      %v3249 = vpop.permute.xlu0 %3248
      %v3251 = vmul.f32 %v3249, %v2666
      %v3252 = vmul.f32 %v3249, %v2670
      %v3253 = vmul.f32 %v3249, %v2674
      %3257 = vrot.lane.b32.xlu0 %v3251, 106
      %v3258 = vpop.permute.xlu0 %3257
      %3259 = vrot.lane.b32.xlu0 %v3252, 106
      %v3260 = vpop.permute.xlu0 %3259
      %3261 = vrot.lane.b32.xlu0 %v3253, 106
      %v3262 = vpop.permute.xlu0 %3261
      %v3263 = vsel %vm1342, %v3258, %v3260
      %v3264 = vsel %vm1342, %v3260, %v3262
      %v3268 = vadd.f32 %v3244, %v3258
      %v3269 = vadd.f32 %v3245, %v3263
      %v3270 = vadd.f32 %v3246, %v3264
      %v3271 = vld [vmem:[%s7] sm:$0xff]
      %3273 = vset.pattern.permute.xlu0 0
      %3274 = vperm.xlu0 %3273, %v3271
      %v3275 = vpop.permute.xlu0 %3274
      %v3277 = vadd.f32 %v3268, %v3275
      %v3278 = vadd.f32 %v3269, %v3275
      %v3279 = vadd.f32 %v3270, %v3275
      %v3280 = vld [vmem:[%s8] sm:$0xff]
      %v3281 = vmul.f32 %v3277, %v3277
      %v3282 = vmul.f32 %v3278, %v3278
      %v3283 = vmul.f32 %v3279, %v3279
      %vm3284 = vcmask 1048488
      %v3285 = vsel %vm3284, %v3281, 0.0
      %v3286 = vrot.slane %v3285, 4
      %v3287 = vadd.f32 %v3285, %v3286
      %v3288 = vrot.slane %v3287, 2
      %v3289 = vadd.f32 %v3287, %v3288
      %v3290 = vrot.slane %v3289, 1
      %v3291 = vadd.f32 %v3289, %v3290
      %v3292 = vrot.slane %v3282, 4
      %v3293 = vadd.f32 %v3282, %v3292
      %v3294 = vrot.slane %v3293, 2
      %v3295 = vadd.f32 %v3293, %v3294
      %v3296 = vrot.slane %v3295, 1
      %v3297 = vadd.f32 %v3295, %v3296
      %v3298 = vsel %vm986, %v3283, 0.0
      %v3299 = vrot.slane %v3298, 4
      %v3300 = vadd.f32 %v3298, %v3299
      %v3301 = vrot.slane %v3300, 2
      %v3302 = vadd.f32 %v3300, %v3301
      %v3303 = vrot.slane %v3302, 1
      %v3304 = vadd.f32 %v3302, %v3303
      %v3305 = vmax.f32 %v3291, 1e-24
      %v3306 = vmax.f32 %v3297, 1e-24
      %v3307 = vmax.f32 %v3304, 1e-24
      %v3308 = vrsqrt.pop %v3305
      %v3309 = vrsqrt.pop %v3306
      %v3310 = vrsqrt.pop %v3307
      %v3311 = vmul.f32 %v3277, %v3308
      %v3312 = vmul.f32 %v3278, %v3309
      %v3313 = vmul.f32 %v3279, %v3310
      %3315 = vset.pattern.permute.xlu0 0
      %3316 = vperm.xlu0 %3315, %v3280
      %v3317 = vpop.permute.xlu0 %3316
      %v3319 = vmul.f32 %v3311, %v3317
      %v3320 = vmul.f32 %v3312, %v3317
      %v3321 = vmul.f32 %v3313, %v3317
      %v3322 = vxor.u32 %v3319, 2147483648
      %v3323 = vxor.u32 %v3320, 2147483648
      %v3324 = vxor.u32 %v3321, 2147483648
      %v3325 = vmul.f32 %v3322, 1.442695
      %v3326 = vpow.pop %v3325
      %v3327 = vmul.f32 %v3323, 1.442695
      %v3328 = vpow.pop %v3327
      %v3329 = vmul.f32 %v3324, 1.442695
      %v3330 = vpow.pop %v3329
      %v3331 = vadd.f32 %v3326, 1.0
      %v3332 = vadd.f32 %v3328, 1.0
      %v3333 = vadd.f32 %v3330, 1.0
      %v3334 = vrcp.pop %v3331
      %v3335 = vmul.f32 1.0, %v3334
      %v3336 = vrcp.pop %v3332
      %v3337 = vmul.f32 1.0, %v3336
      %v3338 = vrcp.pop %v3333
      %v3339 = vmul.f32 1.0, %v3338
      %v3340 = vmul.f32 %v3319, %v3335
      %v3341 = vmul.f32 %v3320, %v3337
      %v3342 = vmul.f32 %v3321, %v3339
      %v3343 = vld [vmem:[%s466] sm:$0xff]
      %v3344 = vld [vmem:[%s466 + $0x8] sm:$0xf]
      %v3345 = vld [vmem:[%s9] sm:$0xff]
      %v3346 = vld [vmem:[%s10] sm:$0xff]
      %3348 = vset.pattern.permute.xlu0 0
      %3349 = vperm.xlu0 %3348, %v3345
      %v3350 = vpop.permute.xlu0 %3349
      %v3354 = vlaneseq
      %v3355 = vshrl.u32 %v3354, 7
      %v3356 = vsub.s32 0, %v3355
      %v3357 = vrot.slane %v3343, %v3356
      %v3358 = vlaneseq
      %v3359 = vshrl.u32 %v3358, 7
      %v3360 = vsub.s32 4, %v3359
      %v3361 = vrot.slane %v3343, %v3360
      %v3362 = vlaneseq
      %v3363 = vshrl.u32 %v3362, 7
      %v3364 = vsub.s32 0, %v3363
      %v3365 = vrot.slane %v3344, %v3364
      %v3369 = vlaneseq
      %v3370 = vshrl.u32 %v3369, 7
      %v3371 = vsub.s32 0, %v3370
      %v3372 = vrot.slane %v3357, %v3371
      %v3373 = vlaneseq
      %v3374 = vshrl.u32 %v3373, 7
      %v3375 = vsub.s32 0, %v3374
      %v3376 = vrot.slane %v3361, %v3375
      %v3377 = vlaneseq
      %v3378 = vshrl.u32 %v3377, 7
      %v3379 = vsub.s32 0, %v3378
      %v3380 = vrot.slane %v3365, %v3379
      %v3381 = vmul.f32 %v3350, %v3372
      %v3382 = vmul.f32 %v3350, %v3376
      %v3383 = vmul.f32 %v3350, %v3380
      %3385 = vset.pattern.permute.xlu0 0
      %3386 = vperm.xlu0 %3385, %v3346
      %v3387 = vpop.permute.xlu0 %3386
      %v3389 = vadd.f32 %v3387, %v3381
      %v3390 = vadd.f32 %v3387, %v3382
      %v3391 = vadd.f32 %v3387, %v3383
      %3392 = vset.pattern.permute.xlu0 1
      %3393 = vperm.xlu0 %3392, %v3345
      %v3394 = vpop.permute.xlu0 %3393
      %v3396 = vlaneseq
      %v3397 = vshrl.u32 %v3396, 7
      %v3398 = vsub.s32 1, %v3397
      %v3399 = vrot.slane %v3343, %v3398
      %v3400 = vlaneseq
      %v3401 = vshrl.u32 %v3400, 7
      %v3402 = vsub.s32 5, %v3401
      %v3403 = vrot.slane %v3343, %v3402
      %v3404 = vlaneseq
      %v3405 = vshrl.u32 %v3404, 7
      %v3406 = vsub.s32 1, %v3405
      %v3407 = vrot.slane %v3344, %v3406
      %v3411 = vlaneseq
      %v3412 = vshrl.u32 %v3411, 7
      %v3413 = vsub.s32 1, %v3412
      %v3414 = vrot.slane %v3399, %v3413
      %v3415 = vlaneseq
      %v3416 = vshrl.u32 %v3415, 7
      %v3417 = vsub.s32 1, %v3416
      %v3418 = vrot.slane %v3403, %v3417
      %v3419 = vlaneseq
      %v3420 = vshrl.u32 %v3419, 7
      %v3421 = vsub.s32 1, %v3420
      %v3422 = vrot.slane %v3407, %v3421
      %v3423 = vmul.f32 %v3394, %v3414
      %v3424 = vmul.f32 %v3394, %v3418
      %v3425 = vmul.f32 %v3394, %v3422
      %v3426 = vadd.f32 %v3389, %v3423
      %v3427 = vadd.f32 %v3390, %v3424
      %v3428 = vadd.f32 %v3391, %v3425
      %3429 = vset.pattern.permute.xlu0 2
      %3430 = vperm.xlu0 %3429, %v3345
      %v3431 = vpop.permute.xlu0 %3430
      %v3433 = vlaneseq
      %v3434 = vshrl.u32 %v3433, 7
      %v3435 = vsub.s32 2, %v3434
      %v3436 = vrot.slane %v3343, %v3435
      %v3437 = vlaneseq
      %v3438 = vshrl.u32 %v3437, 7
      %v3439 = vsub.s32 6, %v3438
      %v3440 = vrot.slane %v3343, %v3439
      %v3441 = vlaneseq
      %v3442 = vshrl.u32 %v3441, 7
      %v3443 = vsub.s32 2, %v3442
      %v3444 = vrot.slane %v3344, %v3443
      %v3448 = vlaneseq
      %v3449 = vshrl.u32 %v3448, 7
      %v3450 = vsub.s32 2, %v3449
      %v3451 = vrot.slane %v3436, %v3450
      %v3452 = vlaneseq
      %v3453 = vshrl.u32 %v3452, 7
      %v3454 = vsub.s32 2, %v3453
      %v3455 = vrot.slane %v3440, %v3454
      %v3456 = vlaneseq
      %v3457 = vshrl.u32 %v3456, 7
      %v3458 = vsub.s32 2, %v3457
      %v3459 = vrot.slane %v3444, %v3458
      %v3460 = vmul.f32 %v3431, %v3451
      %v3461 = vmul.f32 %v3431, %v3455
      %v3462 = vmul.f32 %v3431, %v3459
      %v3463 = vadd.f32 %v3426, %v3460
      %v3464 = vadd.f32 %v3427, %v3461
      %v3465 = vadd.f32 %v3428, %v3462
      %3466 = vset.pattern.permute.xlu0 3
      %3467 = vperm.xlu0 %3466, %v3345
      %v3468 = vpop.permute.xlu0 %3467
      %v3470 = vlaneseq
      %v3471 = vshrl.u32 %v3470, 7
      %v3472 = vsub.s32 3, %v3471
      %v3473 = vrot.slane %v3343, %v3472
      %v3474 = vlaneseq
      %v3475 = vshrl.u32 %v3474, 7
      %v3476 = vsub.s32 7, %v3475
      %v3477 = vrot.slane %v3343, %v3476
      %v3478 = vlaneseq
      %v3479 = vshrl.u32 %v3478, 7
      %v3480 = vsub.s32 3, %v3479
      %v3481 = vrot.slane %v3344, %v3480
      %v3485 = vlaneseq
      %v3486 = vshrl.u32 %v3485, 7
      %v3487 = vsub.s32 3, %v3486
      %v3488 = vrot.slane %v3473, %v3487
      %v3489 = vlaneseq
      %v3490 = vshrl.u32 %v3489, 7
      %v3491 = vsub.s32 3, %v3490
      %v3492 = vrot.slane %v3477, %v3491
      %v3493 = vlaneseq
      %v3494 = vshrl.u32 %v3493, 7
      %v3495 = vsub.s32 3, %v3494
      %v3496 = vrot.slane %v3481, %v3495
      %v3497 = vmul.f32 %v3468, %v3488
      %v3498 = vmul.f32 %v3468, %v3492
      %v3499 = vmul.f32 %v3468, %v3496
      %v3500 = vadd.f32 %v3463, %v3497
      %v3501 = vadd.f32 %v3464, %v3498
      %v3502 = vadd.f32 %v3465, %v3499
      %3506 = vrot.lane.b32.xlu0 %v3500, 106
      %v3507 = vpop.permute.xlu0 %3506
      %3508 = vrot.lane.b32.xlu0 %v3501, 106
      %v3509 = vpop.permute.xlu0 %3508
      %3510 = vrot.lane.b32.xlu0 %v3502, 106
      %v3511 = vpop.permute.xlu0 %3510
      %v3512 = vsel %vm1342, %v3507, %v3509
      %v3513 = vsel %vm1342, %v3509, %v3511
      %v3517 = vadd.f32 %v3340, %v3507
      %v3518 = vadd.f32 %v3341, %v3512
      %v3519 = vadd.f32 %v3342, %v3513
      %3523 = vrot.lane.b32.xlu0 %v3517, 11
      %v3524 = vpop.permute.xlu0 %3523
      %3525 = vrot.lane.b32.xlu0 %v3518, 11
      %v3526 = vpop.permute.xlu0 %3525
      %3527 = vrot.lane.b32.xlu0 %v3519, 11
      %v3528 = vpop.permute.xlu0 %3527
      %vm3529 = vcmask 89088
      %v3530 = vsel %vm3529, %v3524, %v3526
      %v3531 = vsel %vm3529, %v3526, %v3528
      %3534 = vst [vmem:[%s483] sm:$0xff] %v3530
      %3535 = vst [vmem:[%s483 + $0x8] sm:$0xff] %v3531
      %p3536 = scmp.lt.s32.totalorder %s27, 1
      %s3537 = scalar_select %p3536, %s27, 1
      %p3538 = scmp.lt.s32.totalorder %s28, 1
      %s3539 = scalar_select %p3538, %s28, 1
      %s3540 = smul.addr %s3539, 2
      %s3541 = smul.addr %s3537, 4
      %s3542 = sadd.s32 %s3540, %s3541
      %s3543 = smul.addr %s3542, 8
      %s3544 = scalar_lea.vmem %s12, %s3543
      // Predicated region
      $region69: #{resnet_block_forward.1} parent=67 // pred_check
        %p3545 = pneg %p324
      $region70: #{resnet_block_forward.1} parent=67 // pred_check_branch
        %3547 = sbr.rel (%p3545) target = $region72
      $region71: #{resnet_block_forward.1} parent=67 // pred_region
        _
      $region72: #{resnet_block_forward.1} parent=67 // pred_fallthru
        _
    $region68: #{resnet_block_forward.1} parent=5 // pred_fallthru
      _
    %p3548 = scmp.le.s32.totalorder 2, %s18
    // Predicated region
    $region73: #{resnet_block_forward.1} parent=5 // pred_check
      %p3549 = pneg %p3548
    $region74: #{resnet_block_forward.1} parent=5 // pred_check_branch
      %3551 = sbr.rel (%p3549) target = $region76
    $region75: #{resnet_block_forward.1} parent=5 // pred_region
      %s3552 = ssub.s32 %s18, 2
      // Predicated region
      $region77: #{resnet_block_forward.1} parent=75 // pred_check
        %p3553 = pneg %p330
      $region78: #{resnet_block_forward.1} parent=75 // pred_check_branch
        %3555 = sbr.rel (%p3553) target = $region80
      $region79: #{resnet_block_forward.1} parent=75 // pred_region
        %p3556 = scmp.lt.s32.totalorder %s29, 1
        %s3557 = scalar_select %p3556, %s29, 1
        %p3558 = scmp.lt.s32.totalorder %s30, 1
        %s3559 = scalar_select %p3558, %s30, 1
        %s3560 = smul.addr %s3559, 2
        %s3561 = smul.addr %s3557, 4
        %s3562 = sadd.s32 %s3560, %s3561
        %s3563 = smul.addr %s3562, 8
        %s3564 = scalar_lea.vmem %s12, %s3563
      $region80: #{resnet_block_forward.1} parent=75 // pred_fallthru
        _
    $region76: #{resnet_block_forward.1} parent=5 // pred_fallthru
      _
  $region6: #{resnet_block_forward.1} parent=0 // loop_footer
    %s22 = sadd.s32 1, %s18
  $region7: #{resnet_block_forward.1} parent=0 // loop_footer_branch
    %17 = sbr.rel target = $region3
  $region8: #{resnet_block_forward.1} parent=0 // loop_exit
    _

</llo_original>
